<compile_context>
chip_gen: v7x
topology: tpu7x:2x2x1
jax: 0.10.0
libtpu: 0.0.40
codegen_flags: <defaults>
</compile_context>

<pallas_src>
import functools

import jax
import jax.numpy as jnp
from jax.experimental import pallas as pl
from jax.experimental.pallas import tpu as pltpu


# ---------------------------------------------------------------------------
# Kernel 1: conv (3x3 SAME, built in-kernel) + ReLU + masked mean-pool
# ---------------------------------------------------------------------------
def _conv_pool_kernel(H, inv_hw, needs_mask,
                      x_ref, wconv_ref, bconv_ref, pooled_ref, acc_ref):
    h = pl.program_id(1)
    n_h = pl.num_programs(1)
    TB, THp2, Wp2, Cin = x_ref.shape
    TH, W = THp2 - 2, Wp2 - 2
    M = TB * TH * W

    @pl.when(h == 0)
    def _init():
        acc_ref[...] = jnp.zeros_like(acc_ref)

    # 3x3 SAME conv as nine shifted-window matmuls (bf16 operands, f32 acc).
    # Each window is an offset VMEM read of the halo'd row chunk; no im2col
    # array ever touches HBM.
    feat = None
    for dy in range(3):
        for dx in range(3):
            lhs = x_ref[:, dy:dy + TH, dx:dx + W, :].reshape(M, Cin)   # bf16
            part = jnp.dot(lhs, wconv_ref[dy, dx],
                           preferred_element_type=jnp.float32)         # (M, D)
            feat = part if feat is None else feat + part
    feat = jnp.maximum(feat + bconv_ref[...], 0.0)                      # (M, D)
    feat = feat.reshape(TB, TH * W, D := feat.shape[-1])

    if needs_mask:
        # Rows padded beyond the true H must not bias the pooled mean.
        valid = jnp.minimum(jnp.maximum(H - h * TH, 0), TH) * W
        pos = jax.lax.broadcasted_iota(jnp.int32, (1, TH * W, 1), 1)
        feat = jnp.where(pos < valid, feat, 0.0)

    # Mean-pool accumulation: XLU sublane reduce (overlaps with the MXU work),
    # no block-diagonal pool matmul.
    acc_ref[...] += jnp.sum(feat, axis=1)                               # (TB, D)

    @pl.when(h == n_h - 1)
    def _finalize():
        pooled_ref[0] = acc_ref[...] * inv_hw


# ---------------------------------------------------------------------------
# Kernel 2: heads (whiten -> mean Linear -> L2Norm ; var Linear -> Softplus)
# ---------------------------------------------------------------------------
def _heads_kernel(pooled_ref, ww_ref, bw_ref, wm_ref, bm_ref, wv_ref, bv_ref,
                  z_ref):
    Dp = wm_ref.shape[1]
    pooled = pooled_ref[...]                                            # (B, D) f32
    pooled_bf = pooled.astype(jnp.bfloat16)

    # mean head: whiten -> Linear(D, D-1) (zero-padded to Dp lanes) -> L2Norm
    wh = jnp.dot(pooled_bf, ww_ref[...],
                 preferred_element_type=jnp.float32) + bw_ref[...]      # (B, D)
    mu = jnp.dot(wh.astype(jnp.bfloat16), wm_ref[...],
                 preferred_element_type=jnp.float32) + bm_ref[...]      # (B, Dp)
    norm = jnp.sqrt(jnp.sum(mu * mu, axis=-1, keepdims=True))
    mu = mu * pl.reciprocal(norm + 1e-6, approx=True)

    # var head: Linear(D, 1) padded to one 128-lane tile -> Softplus(th=20)
    s = jnp.dot(pooled_bf, wv_ref[...],
                preferred_element_type=jnp.float32) + bv_ref[...]       # (B, 128)
    s0 = s[:, 0:1]                                                      # (B, 1)
    sp = jnp.where(s0 > 20.0, s0, jnp.log1p(jnp.exp(jnp.minimum(s0, 20.0))))

    # z = cat([mu, sigma2.expand_as(mu)], dim=1): lane-aligned halves of a
    # padded, lane-dense slab (sigma2 is a free VPU lane broadcast).
    z_ref[:, 0:Dp] = mu
    z_ref[:, Dp:2 * Dp] = jnp.broadcast_to(sp, mu.shape)


# ---------------------------------------------------------------------------
# Wrapper
# ---------------------------------------------------------------------------
def _vmem_limit_bytes():
    """Physical VMEM minus 25% headroom; None if it cannot be queried."""
    try:
        cap = pltpu.get_tpu_info().vmem_capacity_bytes
        return int(cap) * 3 // 4
    except Exception:
        return None


def image_retrieval_forward(x, params, *, batch_tile=8, row_tile=128):
    """Pallas forward pass. Returns {'z_mu': (B, 2*(outputdim-1))}."""
    B, Cin, H, W = x.shape
    D = params['ww'].shape[0]
    Dm = D - 1
    Dp = -(-Dm // 128) * 128                     # lane-dense padded head width
    HW = H * W

    # --- tile selection (sweep knobs; raise for bigger inputs) ---------------
    # Ensure >= 2 batch grid steps when B >= 2 so v7x's two TCs both get work.
    TB = max(1, min(batch_tile, B // 2))
    Bp = -(-B // TB) * TB
    n_b = Bp // TB
    TH = min(row_tile, H)
    Hp = -(-H // TH) * TH
    n_h = Hp // TH
    needs_mask = (Hp != H)

    vl = _vmem_limit_bytes()
    cp_extra = {} if vl is None else {"vmem_limit_bytes": vl}

    # --- raw activation, bf16, NHWC, halo'd overlapping row chunks -----------
    # Chunk h holds padded rows [h*TH, h*TH + TH + 2) -> only a 2-row overlap
    # per chunk is duplicated in HBM (vs the old 9x im2col expansion).
    x_nhwc = jnp.transpose(x, (0, 2, 3, 1)).astype(jnp.bfloat16)        # (B,H,W,Cin)
    x_pad = jnp.pad(x_nhwc, ((0, Bp - B), (1, 1 + Hp - H), (1, 1), (0, 0)))
    chunks = [x_pad[:, h * TH: h * TH + TH + 2] for h in range(n_h)]
    x_chunks = jnp.stack(chunks, axis=0).reshape(n_h * Bp, TH + 2, W + 2, Cin)

    wconv_k = params['wconv'].astype(jnp.bfloat16)                      # (3,3,Cin,D)
    bconv_k = params['bconv'].astype(jnp.float32)                       # (1, D)

    # --- pallas_call 1: conv + ReLU + mean-pool -------------------------------
    pooled3 = pl.pallas_call(
        functools.partial(_conv_pool_kernel, H, 1.0 / float(HW), needs_mask),
        out_shape=jax.ShapeDtypeStruct((n_b, TB, D), jnp.float32),
        grid_spec=pltpu.PrefetchScalarGridSpec(
            num_scalar_prefetch=0,
            grid=(n_b, n_h),
            in_specs=[
                pl.BlockSpec((TB, TH + 2, W + 2, Cin),
                             lambda b, h: (h * n_b + b, 0, 0, 0)),      # x chunk
                pl.BlockSpec((3, 3, Cin, D), lambda b, h: (0, 0, 0, 0)),  # conv W
                pl.BlockSpec((1, D), lambda b, h: (0, 0)),              # conv b
            ],
            out_specs=pl.BlockSpec((1, TB, D), lambda b, h: (b, 0, 0)),
            scratch_shapes=[pltpu.VMEM((TB, D), jnp.float32)],          # pooled sum
        ),
        compiler_params=pltpu.CompilerParams(
            dimension_semantics=("parallel", "arbitrary"), **cp_extra),
    )(x_chunks, wconv_k, bconv_k)
    pooled = pooled3.reshape(Bp, D)

    # --- head parameters: bf16 matmul operands, f32 biases --------------------
    ww = params['ww'].astype(jnp.bfloat16)
    bw = params['bw'].astype(jnp.float32)
    wm = jnp.pad(params['wm'], ((0, 0), (0, Dp - Dm))).astype(jnp.bfloat16)
    bm = jnp.pad(params['bm'], ((0, 0), (0, Dp - Dm))).astype(jnp.float32)
    wv = jnp.pad(params['wv'], ((0, 0), (0, 127))).astype(jnp.bfloat16)  # (D,128)
    bv = jnp.pad(params['bv'], ((0, 0), (0, 127))).astype(jnp.float32)   # (1,128)

    # --- pallas_call 2: heads --------------------------------------------------
    const2 = lambda i: (0, 0)
    z_pad = pl.pallas_call(
        _heads_kernel,
        out_shape=jax.ShapeDtypeStruct((Bp, 2 * Dp), jnp.float32),
        grid_spec=pltpu.PrefetchScalarGridSpec(
            num_scalar_prefetch=0,
            grid=(1,),
            in_specs=[
                pl.BlockSpec((Bp, D), const2),                          # pooled
                pl.BlockSpec((D, D), const2),                           # whiten W
                pl.BlockSpec((1, D), const2),                           # whiten b
                pl.BlockSpec((D, Dp), const2),                          # mean W (pad)
                pl.BlockSpec((1, Dp), const2),                          # mean b (pad)
                pl.BlockSpec((D, 128), const2),                         # var W (pad)
                pl.BlockSpec((1, 128), const2),                         # var b (pad)
            ],
            out_specs=pl.BlockSpec((Bp, 2 * Dp), const2),
        ),
        compiler_params=pltpu.CompilerParams(
            dimension_semantics=("arbitrary",), **cp_extra),
    )(pooled, ww, bw, wm, bm, wv, bv)

    # un-pad: z = cat([mu, sigma2], dim=1) with the true (D-1) widths
    z = jnp.concatenate([z_pad[:B, :Dm], z_pad[:B, Dp:Dp + Dm]], axis=1)
    return {'z_mu': z}


# ---------------------------------------------------------------------------
# Pure-JAX f32 reference (identical semantics) + params
# ---------------------------------------------------------------------------
def reference_forward(x, params):
    x_nhwc = jnp.transpose(x, (0, 2, 3, 1))
    feat = jax.lax.conv_general_dilated(
        x_nhwc, params['wconv'], window_strides=(1, 1), padding='SAME',
        dimension_numbers=('NHWC', 'HWIO', 'NHWC'))
    feat = jnp.maximum(feat + params['bconv'].reshape(1, 1, 1, -1), 0.0)
    pooled = feat.mean(axis=(1, 2))                                     # (B, D)
    wh = pooled @ params['ww'] + params['bw']
    mu = wh @ params['wm'] + params['bm']
    mu = mu / (jnp.linalg.norm(mu, axis=-1, keepdims=True) + 1e-6)
    s = pooled @ params['wv'] + params['bv']
    sp = jnp.where(s > 20.0, s, jnp.log1p(jnp.exp(jnp.minimum(s, 20.0))))
    sigma2 = jnp.broadcast_to(sp, mu.shape)
    return jnp.concatenate([mu, sigma2], axis=1)


def init_params(key, cin, outputdim):
    D = outputdim
    ks = jax.random.split(key, 8)
    n = lambda k, shape, s: jax.random.normal(k, shape, jnp.float32) * s
    return {
        'wconv': n(ks[0], (3, 3, cin, D), 0.1),   # HWIO conv weight
        'bconv': n(ks[1], (1, D), 0.01),
        'ww':    n(ks[2], (D, D), 0.1),           # whiten: Linear(D, D)
        'bw':    n(ks[3], (1, D), 0.01),
        'wm':    n(ks[4], (D, D - 1), 0.1),       # Linear(outputdim, outputdim-1)
        'bm':    n(ks[5], (1, D - 1), 0.01),
        'wv':    n(ks[6], (D, 1), 0.1),           # Linear(outputdim, 1)
        'bv':    n(ks[7], (1, 1), 0.01),
    }


if __name__ == "__main__":
    key = jax.random.PRNGKey(0)
    k_x, k_p = jax.random.split(key)

    B, Cin, H, W = 2, 4, 16, 16
    outputdim = 32

    x = jax.random.normal(k_x, (B, Cin, H, W), jnp.float32)
    params = init_params(k_p, Cin, outputdim)

    out = image_retrieval_forward(x, params)
    z = jax.block_until_ready(out['z_mu'])

    z_ref = jax.block_until_ready(reference_forward(x, params))
    assert z.shape == (B, 2 * (outputdim - 1)), z.shape
    # bf16 MXU operands (f32 accumulation) -> looser tolerance than pure f32.
    assert jnp.allclose(z, z_ref, rtol=2e-2, atol=2e-2), \
        f"max abs diff {jnp.max(jnp.abs(z - z_ref))}"

    print("KERNEL_OK")
</pallas_src>

<mosaic_0001>
module attributes {stable_mosaic.version = 11 : i64} {
  func.func @_conv_pool_kernel(%arg0: i32, %arg1: i32, %arg2: memref<1x18x18x4xbf16, #tpu.memory_space<vmem>>, %arg3: memref<3x3x4x32xbf16, #tpu.memory_space<vmem>>, %arg4: memref<1x32xf32, #tpu.memory_space<vmem>>, %arg5: memref<1x1x32xf32, #tpu.memory_space<vmem>>, %arg6: memref<1x32xf32, #tpu.memory_space<vmem>>) attributes {dimension_semantics = [#tpu.dimension_semantics<parallel>, #tpu.dimension_semantics<arbitrary>], iteration_bounds = array<i64: 2, 1>, scalar_prefetch = 0 : i64, scratch_operands = 1 : i64, tpu.core_type = #tpu.core_type<tc>, window_params = [{transform_indices = @transform_0, window_bounds = array<i64: 1, 18, 18, 4>}, {pipeline_mode = #tpu.pipeline_mode<synchronous>, transform_indices = @transform_1, window_bounds = array<i64: 3, 3, 4, 32>}, {pipeline_mode = #tpu.pipeline_mode<synchronous>, transform_indices = @transform_2, window_bounds = array<i64: 1, 32>}, {transform_indices = @transform_3, window_bounds = array<i64: 1, 1, 32>}]} {
    %c0_i32 = arith.constant 0 : i32
    %0 = arith.cmpi eq, %arg1, %c0_i32 : i32
    %1 = arith.extui %0 : i1 to i32
    %c0_i32_0 = arith.constant 0 : i32
    %2 = arith.cmpi ne, %1, %c0_i32_0 : i32
    scf.if %2 {
      %cst_88 = arith.constant 0.000000e+00 : f32
      %69 = vector.broadcast %cst_88 : f32 to vector<1x32xf32>
      %c0_89 = arith.constant 0 : index
      %c0_90 = arith.constant 0 : index
      %70 = vector.load %arg6[%c0_89, %c0_90] : memref<1x32xf32, #tpu.memory_space<vmem>>, vector<1x32xf32>
      tpu.vector_store %arg6[%c0_89, %c0_90], %69 {strides = array<i32>} : memref<1x32xf32, #tpu.memory_space<vmem>>, vector<1x32xf32>,
    } else {
    }
    %c0 = arith.constant 0 : index
    %c0_1 = arith.constant 0 : index
    %c0_2 = arith.constant 0 : index
    %c0_3 = arith.constant 0 : index
    %3 = vector.load %arg2[%c0, %c0_1, %c0_2, %c0_3] : memref<1x18x18x4xbf16, #tpu.memory_space<vmem>>, vector<1x16x16x4xbf16>
    %4 = vector.shape_cast %3 : vector<1x16x16x4xbf16> to vector<256x4xbf16>
    %c0_4 = arith.constant 0 : index
    %c0_5 = arith.constant 0 : index
    %c0_6 = arith.constant 0 : index
    %c0_7 = arith.constant 0 : index
    %5 = vector.load %arg3[%c0_4, %c0_5, %c0_6, %c0_7] : memref<3x3x4x32xbf16, #tpu.memory_space<vmem>>, vector<1x1x4x32xbf16>
    %6 = vector.shape_cast %5 : vector<1x1x4x32xbf16> to vector<4x32xbf16>
    %cst = arith.constant dense<0.000000e+00> : vector<256x32xf32>
    %7 = tpu.matmul %4, %6, %cst {dimension_numbers = #tpu.dot_dimension_numbers<[1], [0], [0], [1], [0, 0, 1, 1], [], []>} : vector<256x4xbf16>, vector<4x32xbf16>, vector<256x32xf32> -> vector<256x32xf32>
    %c0_8 = arith.constant 0 : index
    %c0_9 = arith.constant 0 : index
    %c1 = arith.constant 1 : index
    %c0_10 = arith.constant 0 : index
    %8 = vector.load %arg2[%c0_8, %c0_9, %c1, %c0_10] : memref<1x18x18x4xbf16, #tpu.memory_space<vmem>>, vector<1x16x16x4xbf16>
    %9 = vector.shape_cast %8 : vector<1x16x16x4xbf16> to vector<256x4xbf16>
    %c0_11 = arith.constant 0 : index
    %c1_12 = arith.constant 1 : index
    %c0_13 = arith.constant 0 : index
    %c0_14 = arith.constant 0 : index
    %10 = vector.load %arg3[%c0_11, %c1_12, %c0_13, %c0_14] : memref<3x3x4x32xbf16, #tpu.memory_space<vmem>>, vector<1x1x4x32xbf16>
    %11 = vector.shape_cast %10 : vector<1x1x4x32xbf16> to vector<4x32xbf16>
    %cst_15 = arith.constant dense<0.000000e+00> : vector<256x32xf32>
    %12 = tpu.matmul %9, %11, %cst_15 {dimension_numbers = #tpu.dot_dimension_numbers<[1], [0], [0], [1], [0, 0, 1, 1], [], []>} : vector<256x4xbf16>, vector<4x32xbf16>, vector<256x32xf32> -> vector<256x32xf32>
    %13 = arith.addf %7, %12 : vector<256x32xf32>
    %c0_16 = arith.constant 0 : index
    %c0_17 = arith.constant 0 : index
    %c2 = arith.constant 2 : index
    %c0_18 = arith.constant 0 : index
    %14 = vector.load %arg2[%c0_16, %c0_17, %c2, %c0_18] : memref<1x18x18x4xbf16, #tpu.memory_space<vmem>>, vector<1x16x16x4xbf16>
    %15 = vector.shape_cast %14 : vector<1x16x16x4xbf16> to vector<256x4xbf16>
    %c0_19 = arith.constant 0 : index
    %c2_20 = arith.constant 2 : index
    %c0_21 = arith.constant 0 : index
    %c0_22 = arith.constant 0 : index
    %16 = vector.load %arg3[%c0_19, %c2_20, %c0_21, %c0_22] : memref<3x3x4x32xbf16, #tpu.memory_space<vmem>>, vector<1x1x4x32xbf16>
    %17 = vector.shape_cast %16 : vector<1x1x4x32xbf16> to vector<4x32xbf16>
    %cst_23 = arith.constant dense<0.000000e+00> : vector<256x32xf32>
    %18 = tpu.matmul %15, %17, %cst_23 {dimension_numbers = #tpu.dot_dimension_numbers<[1], [0], [0], [1], [0, 0, 1, 1], [], []>} : vector<256x4xbf16>, vector<4x32xbf16>, vector<256x32xf32> -> vector<256x32xf32>
    %19 = arith.addf %13, %18 : vector<256x32xf32>
    %c0_24 = arith.constant 0 : index
    %c1_25 = arith.constant 1 : index
    %c0_26 = arith.constant 0 : index
    %c0_27 = arith.constant 0 : index
    %20 = vector.load %arg2[%c0_24, %c1_25, %c0_26, %c0_27] : memref<1x18x18x4xbf16, #tpu.memory_space<vmem>>, vector<1x16x16x4xbf16>
    %21 = vector.shape_cast %20 : vector<1x16x16x4xbf16> to vector<256x4xbf16>
    %c1_28 = arith.constant 1 : index
    %c0_29 = arith.constant 0 : index
    %c0_30 = arith.constant 0 : index
    %c0_31 = arith.constant 0 : index
    %22 = vector.load %arg3[%c1_28, %c0_29, %c0_30, %c0_31] : memref<3x3x4x32xbf16, #tpu.memory_space<vmem>>, vector<1x1x4x32xbf16>
    %23 = vector.shape_cast %22 : vector<1x1x4x32xbf16> to vector<4x32xbf16>
    %cst_32 = arith.constant dense<0.000000e+00> : vector<256x32xf32>
    %24 = tpu.matmul %21, %23, %cst_32 {dimension_numbers = #tpu.dot_dimension_numbers<[1], [0], [0], [1], [0, 0, 1, 1], [], []>} : vector<256x4xbf16>, vector<4x32xbf16>, vector<256x32xf32> -> vector<256x32xf32>
    %25 = arith.addf %19, %24 : vector<256x32xf32>
    %c0_33 = arith.constant 0 : index
    %c1_34 = arith.constant 1 : index
    %c1_35 = arith.constant 1 : index
    %c0_36 = arith.constant 0 : index
    %26 = vector.load %arg2[%c0_33, %c1_34, %c1_35, %c0_36] : memref<1x18x18x4xbf16, #tpu.memory_space<vmem>>, vector<1x16x16x4xbf16>
    %27 = vector.shape_cast %26 : vector<1x16x16x4xbf16> to vector<256x4xbf16>
    %c1_37 = arith.constant 1 : index
    %c1_38 = arith.constant 1 : index
    %c0_39 = arith.constant 0 : index
    %c0_40 = arith.constant 0 : index
    %28 = vector.load %arg3[%c1_37, %c1_38, %c0_39, %c0_40] : memref<3x3x4x32xbf16, #tpu.memory_space<vmem>>, vector<1x1x4x32xbf16>
    %29 = vector.shape_cast %28 : vector<1x1x4x32xbf16> to vector<4x32xbf16>
    %cst_41 = arith.constant dense<0.000000e+00> : vector<256x32xf32>
    %30 = tpu.matmul %27, %29, %cst_41 {dimension_numbers = #tpu.dot_dimension_numbers<[1], [0], [0], [1], [0, 0, 1, 1], [], []>} : vector<256x4xbf16>, vector<4x32xbf16>, vector<256x32xf32> -> vector<256x32xf32>
    %31 = arith.addf %25, %30 : vector<256x32xf32>
    %c0_42 = arith.constant 0 : index
    %c1_43 = arith.constant 1 : index
    %c2_44 = arith.constant 2 : index
    %c0_45 = arith.constant 0 : index
    %32 = vector.load %arg2[%c0_42, %c1_43, %c2_44, %c0_45] : memref<1x18x18x4xbf16, #tpu.memory_space<vmem>>, vector<1x16x16x4xbf16>
    %33 = vector.shape_cast %32 : vector<1x16x16x4xbf16> to vector<256x4xbf16>
    %c1_46 = arith.constant 1 : index
    %c2_47 = arith.constant 2 : index
    %c0_48 = arith.constant 0 : index
    %c0_49 = arith.constant 0 : index
    %34 = vector.load %arg3[%c1_46, %c2_47, %c0_48, %c0_49] : memref<3x3x4x32xbf16, #tpu.memory_space<vmem>>, vector<1x1x4x32xbf16>
    %35 = vector.shape_cast %34 : vector<1x1x4x32xbf16> to vector<4x32xbf16>
    %cst_50 = arith.constant dense<0.000000e+00> : vector<256x32xf32>
    %36 = tpu.matmul %33, %35, %cst_50 {dimension_numbers = #tpu.dot_dimension_numbers<[1], [0], [0], [1], [0, 0, 1, 1], [], []>} : vector<256x4xbf16>, vector<4x32xbf16>, vector<256x32xf32> -> vector<256x32xf32>
    %37 = arith.addf %31, %36 : vector<256x32xf32>
    %c0_51 = arith.constant 0 : index
    %c2_52 = arith.constant 2 : index
    %c0_53 = arith.constant 0 : index
    %c0_54 = arith.constant 0 : index
    %38 = vector.load %arg2[%c0_51, %c2_52, %c0_53, %c0_54] : memref<1x18x18x4xbf16, #tpu.memory_space<vmem>>, vector<1x16x16x4xbf16>
    %39 = vector.shape_cast %38 : vector<1x16x16x4xbf16> to vector<256x4xbf16>
    %c2_55 = arith.constant 2 : index
    %c0_56 = arith.constant 0 : index
    %c0_57 = arith.constant 0 : index
    %c0_58 = arith.constant 0 : index
    %40 = vector.load %arg3[%c2_55, %c0_56, %c0_57, %c0_58] : memref<3x3x4x32xbf16, #tpu.memory_space<vmem>>, vector<1x1x4x32xbf16>
    %41 = vector.shape_cast %40 : vector<1x1x4x32xbf16> to vector<4x32xbf16>
    %cst_59 = arith.constant dense<0.000000e+00> : vector<256x32xf32>
    %42 = tpu.matmul %39, %41, %cst_59 {dimension_numbers = #tpu.dot_dimension_numbers<[1], [0], [0], [1], [0, 0, 1, 1], [], []>} : vector<256x4xbf16>, vector<4x32xbf16>, vector<256x32xf32> -> vector<256x32xf32>
    %43 = arith.addf %37, %42 : vector<256x32xf32>
    %c0_60 = arith.constant 0 : index
    %c2_61 = arith.constant 2 : index
    %c1_62 = arith.constant 1 : index
    %c0_63 = arith.constant 0 : index
    %44 = vector.load %arg2[%c0_60, %c2_61, %c1_62, %c0_63] : memref<1x18x18x4xbf16, #tpu.memory_space<vmem>>, vector<1x16x16x4xbf16>
    %45 = vector.shape_cast %44 : vector<1x16x16x4xbf16> to vector<256x4xbf16>
    %c2_64 = arith.constant 2 : index
    %c1_65 = arith.constant 1 : index
    %c0_66 = arith.constant 0 : index
    %c0_67 = arith.constant 0 : index
    %46 = vector.load %arg3[%c2_64, %c1_65, %c0_66, %c0_67] : memref<3x3x4x32xbf16, #tpu.memory_space<vmem>>, vector<1x1x4x32xbf16>
    %47 = vector.shape_cast %46 : vector<1x1x4x32xbf16> to vector<4x32xbf16>
    %cst_68 = arith.constant dense<0.000000e+00> : vector<256x32xf32>
    %48 = tpu.matmul %45, %47, %cst_68 {dimension_numbers = #tpu.dot_dimension_numbers<[1], [0], [0], [1], [0, 0, 1, 1], [], []>} : vector<256x4xbf16>, vector<4x32xbf16>, vector<256x32xf32> -> vector<256x32xf32>
    %49 = arith.addf %43, %48 : vector<256x32xf32>
    %c0_69 = arith.constant 0 : index
    %c2_70 = arith.constant 2 : index
    %c2_71 = arith.constant 2 : index
    %c0_72 = arith.constant 0 : index
    %50 = vector.load %arg2[%c0_69, %c2_70, %c2_71, %c0_72] : memref<1x18x18x4xbf16, #tpu.memory_space<vmem>>, vector<1x16x16x4xbf16>
    %51 = vector.shape_cast %50 : vector<1x16x16x4xbf16> to vector<256x4xbf16>
    %c2_73 = arith.constant 2 : index
    %c2_74 = arith.constant 2 : index
    %c0_75 = arith.constant 0 : index
    %c0_76 = arith.constant 0 : index
    %52 = vector.load %arg3[%c2_73, %c2_74, %c0_75, %c0_76] : memref<3x3x4x32xbf16, #tpu.memory_space<vmem>>, vector<1x1x4x32xbf16>
    %53 = vector.shape_cast %52 : vector<1x1x4x32xbf16> to vector<4x32xbf16>
    %cst_77 = arith.constant dense<0.000000e+00> : vector<256x32xf32>
    %54 = tpu.matmul %51, %53, %cst_77 {dimension_numbers = #tpu.dot_dimension_numbers<[1], [0], [0], [1], [0, 0, 1, 1], [], []>} : vector<256x4xbf16>, vector<4x32xbf16>, vector<256x32xf32> -> vector<256x32xf32>
    %55 = arith.addf %49, %54 : vector<256x32xf32>
    %c0_78 = arith.constant 0 : index
    %c0_79 = arith.constant 0 : index
    %56 = vector.load %arg4[%c0_78, %c0_79] : memref<1x32xf32, #tpu.memory_space<vmem>>, vector<1x32xf32>
    %57 = vector.broadcast %56 : vector<1x32xf32> to vector<256x32xf32>
    %58 = arith.addf %55, %57 : vector<256x32xf32>
    %cst_80 = arith.constant 0.000000e+00 : f32
    %59 = vector.broadcast %cst_80 : f32 to vector<256x32xf32>
    %60 = arith.maximumf %58, %59 : vector<256x32xf32>
    %61 = vector.shape_cast %60 : vector<256x32xf32> to vector<1x256x32xf32>
    %c0_81 = arith.constant 0 : index
    %c0_82 = arith.constant 0 : index
    %62 = vector.load %arg6[%c0_81, %c0_82] : memref<1x32xf32, #tpu.memory_space<vmem>>, vector<1x32xf32>
    %cst_83 = arith.constant dense<0.000000e+00> : vector<1x32xf32>
    %63 = vector.multi_reduction <add>, %61, %cst_83 [1] : vector<1x256x32xf32> to vector<1x32xf32>
    %64 = arith.addf %62, %63 : vector<1x32xf32>
    %c0_84 = arith.constant 0 : index
    %c0_85 = arith.constant 0 : index
    %65 = vector.load %arg6[%c0_84, %c0_85] : memref<1x32xf32, #tpu.memory_space<vmem>>, vector<1x32xf32>
    tpu.vector_store %arg6[%c0_84, %c0_85], %64 {strides = array<i32>} : memref<1x32xf32, #tpu.memory_space<vmem>>, vector<1x32xf32>,
    %c0_i32_86 = arith.constant 0 : i32
    %66 = arith.cmpi eq, %arg1, %c0_i32_86 : i32
    %67 = arith.extui %66 : i1 to i32
    %c0_i32_87 = arith.constant 0 : i32
    %68 = arith.cmpi ne, %67, %c0_i32_87 : i32
    scf.if %68 {
      %c0_88 = arith.constant 0 : index
      %c0_89 = arith.constant 0 : index
      %69 = vector.load %arg6[%c0_88, %c0_89] : memref<1x32xf32, #tpu.memory_space<vmem>>, vector<1x32xf32>
      %cst_90 = arith.constant 3.906250e-03 : f32
      %70 = vector.broadcast %cst_90 : f32 to vector<1x32xf32>
      %71 = arith.mulf %69, %70 : vector<1x32xf32>
      %c0_91 = arith.constant 0 : index
      %c0_92 = arith.constant 0 : index
      %c0_93 = arith.constant 0 : index
      %72 = vector.load %arg5[%c0_91, %c0_92, %c0_93] : memref<1x1x32xf32, #tpu.memory_space<vmem>>, vector<1x1x32xf32>
      %73 = vector.shape_cast %72 : vector<1x1x32xf32> to vector<1x32xf32>
      %74 = vector.shape_cast %71 : vector<1x32xf32> to vector<1x1x32xf32>
      tpu.vector_store %arg5[%c0_91, %c0_92, %c0_93], %74 {strides = array<i32>} : memref<1x1x32xf32, #tpu.memory_space<vmem>>, vector<1x1x32xf32>,
    } else {
    }
    return
  }
  func.func @transform_0(%arg0: i32, %arg1: i32) -> (i32, i32, i32, i32) {
    %c2_i32 = arith.constant 2 : i32
    %0 = arith.muli %arg1, %c2_i32 : i32
    %1 = arith.addi %0, %arg0 : i32
    %c0_i32 = arith.constant 0 : i32
    %c0_i32_0 = arith.constant 0 : i32
    %c0_i32_1 = arith.constant 0 : i32
    %c0_i32_2 = arith.constant 0 : i32
    return %1, %c0_i32, %c0_i32_0, %c0_i32_1 : i32, i32, i32, i32
  }
  func.func @transform_1(%arg0: i32, %arg1: i32) -> (i32, i32, i32, i32) {
    %c0_i32 = arith.constant 0 : i32
    %c0_i32_0 = arith.constant 0 : i32
    %c0_i32_1 = arith.constant 0 : i32
    %c0_i32_2 = arith.constant 0 : i32
    %c0_i32_3 = arith.constant 0 : i32
    return %c0_i32, %c0_i32_0, %c0_i32_1, %c0_i32_2 : i32, i32, i32, i32
  }
  func.func @transform_2(%arg0: i32, %arg1: i32) -> (i32, i32) {
    %c0_i32 = arith.constant 0 : i32
    %c0_i32_0 = arith.constant 0 : i32
    %c0_i32_1 = arith.constant 0 : i32
    return %c0_i32, %c0_i32_0 : i32, i32
  }
  func.func @transform_3(%arg0: i32, %arg1: i32) -> (i32, i32, i32) {
    %c0_i32 = arith.constant 0 : i32
    %c0_i32_0 = arith.constant 0 : i32
    %c0_i32_1 = arith.constant 0 : i32
    return %arg0, %c0_i32, %c0_i32_0 : i32, i32, i32
  }
}

</mosaic_0001>

<llo_original>
// kernel: tpu_custom_call.1
$region0: #{tpu_custom_call.1}
  #allocation0 [shape = 'u32[]', space=smem, size = 0x4, offset = 0x4, fixed_abs, tag = 'smem constant byte address 0x4 - core index']
  #allocation1 [shape = 'u32[144,128]{1,0:T(1,128)}', space=vmem, size = 0x12000, scoped, tag = 'internal scratch']
  #allocation2 [shape = 'f32[1,32]{1,0:T(1,128)}', space=vmem, size = 0x200, scoped, tag = 'scratch operand']
  %s0 = inlined_call_operand.vmem [shape: bf16[2,18,18,4], index: 0, kind: input, shape index: {}]
  %s1 = inlined_call_operand.vmem [shape: bf16[3,3,4,32], index: 1, kind: input, shape index: {}]
  %s2 = inlined_call_operand.vmem [shape: f32[1,32], index: 2, kind: input, shape index: {}]
  %s3 = inlined_call_operand.hbm [shape: f32[2,1,32], index: 3, kind: output, shape index: {}]
  %s4 = sld [smem:[#allocation0]]
  $region53: #{tpu_custom_call.1} parent=0
    _
  %s6 = ssub.s32 1, %s4
  %s7 = scalar_select 0, %s6, %s4
  $region1: #{tpu_custom_call.1} parent=0
    #allocation3 [shape = 'u8[1024]{0}', space=vmem, size = 0x400, scoped, tag = 'output window, operand 0']
    #allocation4 [shape = 's32[2]{0}', space=sflag, size = 0x8, scoped, tag = 'scoped memory for tpu_custom_call.1']
    %8 = vsyncpa [#allocation4], 0
    %s9 = scalar_lea.sflag [#allocation4], 1
    %10 = vsyncpa %s9, 0
    loop: start=0, step=1, limit=4
    $region2: #{tpu_custom_call.1} parent=1 // loop_pre_header
      _
    $region3: #{tpu_custom_call.1} parent=1 // loop_header
      %s12 = sphi 0, %s16
      %p13 = scmp.ge.s32.totalorder %s12, 4
      %s19 = sphi 0, %s31
      %s20 = sphi 0, %s27
      %s21 = sphi 0, %s19
      %s22 = sphi 0, %s20
      %s23 = sphi 0, %s21
      %s24 = sphi 0, %s22
      %s38 = sphi 0, %s40
      %s41 = sphi 0, %s38
      %s42 = sphi 0, %s41
      %s58 = sphi 0, %s42
      %s62 = sphi 0, %s62
      %s64 = sphi 0, %s62
      %s65 = sphi 0, %s64
      %s79 = sphi 0, %s65
      %s83 = sphi 0, %s83
      %s85 = sphi 0, %s83
      %s86 = sphi 0, %s85
      %s100 = sphi 0, %s86
      %s106 = sphi 0, %s108
      %s109 = sphi 0, %s106
      %s110 = sphi 0, %s109
      %s126 = sphi 0, %s110
    $region4: #{tpu_custom_call.1} parent=1 // loop_header_branch
      %15 = sbr.rel (%p13) target = $region8
    $region5: #{tpu_custom_call.1} parent=1 // loop_body
      %s17 = ssub.s32 %s12, 1
      %s18 = ssub.s32 %s12, 2
      %s25 = sadd.s32 1, %s20
      %p26 = scmp.ge.s32.totalorder %s25, 1
      %s27 = scalar_select %p26, 0, %s25
      %s28 = sadd.s32 1, %s19
      %s29 = scalar_select %p26, %s28, %s19
      %p30 = scmp.ge.s32.totalorder %s29, 2
      %s31 = scalar_select %p30, 0, %s29
      %s32 = smul.u32 %s20, 2
      %s33 = sadd.s32 %s32, %s19
      %s34 = smul.u32 %s27, 2
      %s35 = sadd.s32 %s34, %s31
      %s36 = ssub.s32 %s33, %s35
      %p37 = scmp.eq.s32.totalorder %s36, 0
      %s39 = sadd.s32 %s38, 1
      %s40 = scalar_select %p37, %s38, %s39
      %p43 = pneg %p37
      %p44 = scmp.eq.s32.totalorder %s12, 1
      %p45 = por %p43, %p44
      %p46 = scmp.ne.s32.totalorder %s38, %s41
      %p47 = scmp.eq.s32.totalorder %s12, 0
      %p48 = por %p46, %p47
      %p49 = scmp.ne.s32.totalorder %s38, %s41
      %p50 = scmp.eq.s32.totalorder %s17, 1
      %p51 = por %p49, %p50
      %p52 = scmp.ne.s32.totalorder %s41, %s42
      %p53 = scmp.eq.s32.totalorder %s17, 0
      %p54 = por %p52, %p53
      %p55 = scmp.ne.s32.totalorder %s41, %s42
      %p56 = scmp.eq.s32.totalorder %s18, 1
      %p57 = por %p55, %p56
      %p59 = scmp.ne.s32.totalorder %s42, %s58
      %p60 = scmp.eq.s32.totalorder %s18, 0
      %p61 = por %p59, %p60
      %s63 = sadd.s32 %s62, 1
      %p66 = scmp.eq.s32.totalorder %s12, 1
      %p67 = scmp.ne.s32.totalorder %s62, %s64
      %p68 = scmp.eq.s32.totalorder %s12, 0
      %p69 = por %p67, %p68
      %p70 = scmp.ne.s32.totalorder %s62, %s64
      %p71 = scmp.eq.s32.totalorder %s17, 1
      %p72 = por %p70, %p71
      %p73 = scmp.ne.s32.totalorder %s64, %s65
      %p74 = scmp.eq.s32.totalorder %s17, 0
      %p75 = por %p73, %p74
      %p76 = scmp.ne.s32.totalorder %s64, %s65
      %p77 = scmp.eq.s32.totalorder %s18, 1
      %p78 = por %p76, %p77
      %p80 = scmp.ne.s32.totalorder %s65, %s79
      %p81 = scmp.eq.s32.totalorder %s18, 0
      %p82 = por %p80, %p81
      %s84 = sadd.s32 %s83, 1
      %p87 = scmp.eq.s32.totalorder %s12, 1
      %p88 = scmp.ne.s32.totalorder %s83, %s85
      %p89 = scmp.eq.s32.totalorder %s12, 0
      %p90 = por %p88, %p89
      %p91 = scmp.ne.s32.totalorder %s83, %s85
      %p92 = scmp.eq.s32.totalorder %s17, 1
      %p93 = por %p91, %p92
      %p94 = scmp.ne.s32.totalorder %s85, %s86
      %p95 = scmp.eq.s32.totalorder %s17, 0
      %p96 = por %p94, %p95
      %p97 = scmp.ne.s32.totalorder %s85, %s86
      %p98 = scmp.eq.s32.totalorder %s18, 1
      %p99 = por %p97, %p98
      %p101 = scmp.ne.s32.totalorder %s86, %s100
      %p102 = scmp.eq.s32.totalorder %s18, 0
      %p103 = por %p101, %p102
      %s104 = ssub.s32 %s19, %s31
      %p105 = scmp.eq.s32.totalorder %s104, 0
      %s107 = sadd.s32 %s106, 1
      %s108 = scalar_select %p105, %s106, %s107
      %p111 = pneg %p105
      %p112 = scmp.eq.s32.totalorder %s12, 1
      %p113 = por %p111, %p112
      %p114 = scmp.ne.s32.totalorder %s106, %s109
      %p115 = scmp.eq.s32.totalorder %s12, 0
      %p116 = por %p114, %p115
      %p117 = scmp.ne.s32.totalorder %s106, %s109
      %p118 = scmp.eq.s32.totalorder %s17, 1
      %p119 = por %p117, %p118
      %p120 = scmp.ne.s32.totalorder %s109, %s110
      %p121 = scmp.eq.s32.totalorder %s17, 0
      %p122 = por %p120, %p121
      %p123 = scmp.ne.s32.totalorder %s109, %s110
      %p124 = scmp.eq.s32.totalorder %s18, 1
      %p125 = por %p123, %p124
      %p127 = scmp.ne.s32.totalorder %s110, %s126
      %p128 = scmp.eq.s32.totalorder %s18, 0
      %p129 = por %p127, %p128
      %p130 = scmp.le.s32.totalorder 1, %s12
      %p131 = scmp.lt.s32.totalorder %s12, 3
      %p132 = pnand %p130, %p131
      %p133 = pneg %p132
      // Predicated region
      $region9: #{tpu_custom_call.1} parent=5 // pred_check
        _
      $region10: #{tpu_custom_call.1} parent=5 // pred_check_branch
        %135 = sbr.rel (%p132) target = $region12
      $region11: #{tpu_custom_call.1} parent=5 // pred_region
        %s136 = ssub.s32 %s12, 1
        // Predicated region
        $region13: #{tpu_custom_call.1} parent=11 // pred_check
          %p137 = pneg %p75
        $region14: #{tpu_custom_call.1} parent=11 // pred_check_branch
          %139 = sbr.rel (%p137) target = $region16
        $region15: #{tpu_custom_call.1} parent=11 // pred_region
          _
        $region16: #{tpu_custom_call.1} parent=11 // pred_fallthru
          _
        // Predicated region
        $region17: #{tpu_custom_call.1} parent=11 // pred_check
          %p140 = pneg %p96
        $region18: #{tpu_custom_call.1} parent=11 // pred_check_branch
          %142 = sbr.rel (%p140) target = $region20
        $region19: #{tpu_custom_call.1} parent=11 // pred_region
          _
        $region20: #{tpu_custom_call.1} parent=11 // pred_fallthru
          _
      $region12: #{tpu_custom_call.1} parent=5 // pred_fallthru
        _
      %p143 = scmp.lt.s32.totalorder %s12, 2
      // Predicated region
      $region21: #{tpu_custom_call.1} parent=5 // pred_check
        %p144 = pneg %p143
      $region22: #{tpu_custom_call.1} parent=5 // pred_check_branch
        %146 = sbr.rel (%p144) target = $region24
      $region23: #{tpu_custom_call.1} parent=5 // pred_region
        // Predicated region
        $region25: #{tpu_custom_call.1} parent=23 // pred_check
          %p147 = pneg %p48
        $region26: #{tpu_custom_call.1} parent=23 // pred_check_branch
          %149 = sbr.rel (%p147) target = $region28
        $region27: #{tpu_custom_call.1} parent=23 // pred_region
          %s150 = smul.u32 %s20, 2
          %s151 = sadd.s32 %s150, %s19
          %p152 = scmp.lt.s32.totalorder %s151, 1
          %s153 = scalar_select %p152, %s151, 1
          %s154 = smul.addr %s153, 54
          %s155 = smul.addr %s154, 4
          %s156 = scalar_lea.vmem %s0, %s155
          %s157 = smul.u32 %s20, 2
          %s158 = sadd.s32 %s157, %s19
        $region28: #{tpu_custom_call.1} parent=23 // pred_fallthru
          _
      $region24: #{tpu_custom_call.1} parent=5 // pred_fallthru
        _
      %p159 = scmp.le.s32.totalorder 1, %s12
      %p160 = scmp.lt.s32.totalorder %s12, 3
      %p161 = pnand %p159, %p160
      %p162 = pneg %p161
      // Predicated region
      $region29: #{tpu_custom_call.1} parent=5 // pred_check
        _
      $region30: #{tpu_custom_call.1} parent=5 // pred_check_branch
        %164 = sbr.rel (%p161) target = $region32
      $region31: #{tpu_custom_call.1} parent=5 // pred_region
        %s165 = ssub.s32 %s12, 1
        %s166 = smul.u32 %s22, 2
        %s167 = sadd.s32 %s166, %s21
        %p168 = scmp.lt.s32.totalorder %s167, 1
        %s169 = scalar_select %p168, %s167, 1
        %s170 = smul.addr %s169, 54
        %s171 = smul.addr %s170, 4
        %s172 = scalar_lea.vmem %s0, %s171
        %p173 = pneg %p54
        %p174 = pneg %p51
        %p175 = pneg %p75
        %p176 = pneg %p72
        %p177 = pneg %p96
        %p178 = pneg %p93
        %p179 = pneg %p122
        %p180 = pneg %p119
        %s181 = sand.u32 %s109, 1
        %s182 = scalar_lea.sflag [#allocation4], %s181
        %s183 = sand.u32 %s109, 1
        %s184 = scalar_lea.vmem [#allocation3], %s183
        %s185 = smul.u32 %s22, 2
        %s186 = sadd.s32 %s185, %s21
        %p187 = scmp.lt.s32.totalorder %s186, 1
        %s188 = scalar_select %p187, %s186, 1
        %s189 = smul.addr %s188, 54
        %s190 = smul.addr %s189, 4
        %s191 = scalar_lea.vmem %s0, %s190
        %s192 = smul.u32 %s22, 2
        %s193 = sadd.s32 %s192, %s21
        %p195 = scmp.eq.s32.totalorder %s22, 0
        // Predicated region
        $region33: #{tpu_custom_call.1} parent=31 // pred_check
          %p196 = pneg %p195
        $region34: #{tpu_custom_call.1} parent=31 // pred_check_branch
          %198 = sbr.rel (%p196) target = $region36
        $region35: #{tpu_custom_call.1} parent=31 // pred_region
          %vm199 = vcmask 253952
          %200 = vst.msk [vmem:[#allocation2] sm:$0x1] %vm199, 0.0
        $region36: #{tpu_custom_call.1} parent=31 // pred_fallthru
          _
        %v201 = vld [vmem:[%s191] sm:$0xf]
        %v202 = vld [vmem:[%s191 + $0x4] sm:$0xf]
        %v203 = vld [vmem:[%s191 + $0xc] sm:$0xf]
        %v204 = vld [vmem:[%s191 + $0x10] sm:$0xf]
        %v205 = vld [vmem:[%s191 + $0x18] sm:$0xf]
        %v206 = vld [vmem:[%s191 + $0x1c] sm:$0xf]
        %v207 = vld [vmem:[%s191 + $0x24] sm:$0xf]
        %v208 = vld [vmem:[%s191 + $0x28] sm:$0xf]
        %v209 = vld [vmem:[%s191 + $0x30] sm:$0xf]
        %v210 = vld [vmem:[%s191 + $0x34] sm:$0xf]
        %v211 = vld [vmem:[%s191 + $0x3c] sm:$0xf]
        %v212 = vld [vmem:[%s191 + $0x40] sm:$0xf]
        %v213 = vld [vmem:[%s191 + $0x48] sm:$0xf]
        %v214 = vld [vmem:[%s191 + $0x4c] sm:$0xf]
        %v215 = vld [vmem:[%s191 + $0x54] sm:$0xf]
        %v216 = vld [vmem:[%s191 + $0x58] sm:$0xf]
        %v217 = vld [vmem:[%s191 + $0x60] sm:$0xf]
        %v218 = vld [vmem:[%s191 + $0x64] sm:$0xf]
        %v219 = vld [vmem:[%s191 + $0x6c] sm:$0xf]
        %v220 = vld [vmem:[%s191 + $0x70] sm:$0xf]
        %v221 = vld [vmem:[%s191 + $0x78] sm:$0xf]
        %v222 = vld [vmem:[%s191 + $0x7c] sm:$0xf]
        %v223 = vld [vmem:[%s191 + $0x84] sm:$0xf]
        %v224 = vld [vmem:[%s191 + $0x88] sm:$0xf]
        %v225 = vld [vmem:[%s191 + $0x90] sm:$0xf]
        %v226 = vld [vmem:[%s191 + $0x94] sm:$0xf]
        %v227 = vld [vmem:[%s191 + $0x9c] sm:$0xf]
        %v228 = vld [vmem:[%s191 + $0xa0] sm:$0xf]
        %v229 = vld [vmem:[%s191 + $0xa8] sm:$0xf]
        %v230 = vld [vmem:[%s191 + $0xac] sm:$0xf]
        %v231 = vld [vmem:[%s191 + $0xb4] sm:$0xf]
        %v232 = vld [vmem:[%s191 + $0xb8] sm:$0xf]
        %v233 = vld [vmem:[%s1] sm:$0x3]
        %v234 = vld [vmem:[%s191 + $0x8] sm:$0x1]
        %v235 = vld [vmem:[%s191 + $0x14] sm:$0x1]
        %v236 = vld [vmem:[%s191 + $0x20] sm:$0x1]
        %v237 = vld [vmem:[%s191 + $0x2c] sm:$0x1]
        %v238 = vld [vmem:[%s191 + $0x38] sm:$0x1]
        %v239 = vld [vmem:[%s191 + $0x44] sm:$0x1]
        %v240 = vld [vmem:[%s191 + $0x50] sm:$0x1]
        %v241 = vld [vmem:[%s191 + $0x5c] sm:$0x1]
        %v242 = vld [vmem:[%s191 + $0x68] sm:$0x1]
        %v243 = vld [vmem:[%s191 + $0x74] sm:$0x1]
        %v244 = vld [vmem:[%s191 + $0x80] sm:$0x1]
        %v245 = vld [vmem:[%s191 + $0x8c] sm:$0x1]
        %v246 = vld [vmem:[%s191 + $0x98] sm:$0x1]
        %v247 = vld [vmem:[%s191 + $0xa4] sm:$0x1]
        %v248 = vld [vmem:[%s191 + $0xb0] sm:$0x1]
        %v249 = vld [vmem:[%s191 + $0xbc] sm:$0x1]
        %vm250 = vsmask.f32 3328
        %vm251 = vsmask.f32 7440
        %vm252 = vmor %vm250, %vm251
        %v254 = vshrl.u32 %v201, 16
        %v256 = vrot.slane %v254, 4
        %v257 = vshll.u32 %v201, 16
        %v259 = vrot.slane %v257, 5
        %v260 = vor.u32 %v256, %v259
        %v261 = vrot.slane %v260, 4
        %v263 = vshll.u32 %v202, 16
        %v265 = vrot.slane %v263, 5
        %v266 = vsel %vm252, %v261, %v265
        %v267 = vshrl.u32 %v202, 16
        %v269 = vrot.slane %v267, 4
        %v270 = vor.u32 %v269, %v265
        %v271 = vrot.slane %v270, 4
        %v273 = vshll.u32 %v234, 16
        %v275 = vrot.slane %v273, 5
        %v276 = vsel %vm252, %v271, %v275
        %v278 = vshrl.u32 %v203, 16
        %v280 = vrot.slane %v278, 4
        %v281 = vshll.u32 %v203, 16
        %v283 = vrot.slane %v281, 5
        %v284 = vor.u32 %v280, %v283
        %v285 = vrot.slane %v284, 4
        %v287 = vshll.u32 %v204, 16
        %v289 = vrot.slane %v287, 5
        %v290 = vsel %vm252, %v285, %v289
        %v291 = vshrl.u32 %v204, 16
        %v293 = vrot.slane %v291, 4
        %v294 = vor.u32 %v293, %v289
        %v295 = vrot.slane %v294, 4
        %v297 = vshll.u32 %v235, 16
        %v299 = vrot.slane %v297, 5
        %v300 = vsel %vm252, %v295, %v299
        %v302 = vshrl.u32 %v205, 16
        %v304 = vrot.slane %v302, 4
        %v305 = vshll.u32 %v205, 16
        %v307 = vrot.slane %v305, 5
        %v308 = vor.u32 %v304, %v307
        %v309 = vrot.slane %v308, 4
        %v311 = vshll.u32 %v206, 16
        %v313 = vrot.slane %v311, 5
        %v314 = vsel %vm252, %v309, %v313
        %v315 = vshrl.u32 %v206, 16
        %v317 = vrot.slane %v315, 4
        %v318 = vor.u32 %v317, %v313
        %v319 = vrot.slane %v318, 4
        %v321 = vshll.u32 %v236, 16
        %v323 = vrot.slane %v321, 5
        %v324 = vsel %vm252, %v319, %v323
        %v326 = vshrl.u32 %v207, 16
        %v328 = vrot.slane %v326, 4
        %v329 = vshll.u32 %v207, 16
        %v331 = vrot.slane %v329, 5
        %v332 = vor.u32 %v328, %v331
        %v333 = vrot.slane %v332, 4
        %v335 = vshll.u32 %v208, 16
        %v337 = vrot.slane %v335, 5
        %v338 = vsel %vm252, %v333, %v337
        %v339 = vshrl.u32 %v208, 16
        %v341 = vrot.slane %v339, 4
        %v342 = vor.u32 %v341, %v337
        %v343 = vrot.slane %v342, 4
        %v345 = vshll.u32 %v237, 16
        %v347 = vrot.slane %v345, 5
        %v348 = vsel %vm252, %v343, %v347
        %v350 = vshrl.u32 %v209, 16
        %v352 = vrot.slane %v350, 4
        %v353 = vshll.u32 %v209, 16
        %v355 = vrot.slane %v353, 5
        %v356 = vor.u32 %v352, %v355
        %v357 = vrot.slane %v356, 4
        %v359 = vshll.u32 %v210, 16
        %v361 = vrot.slane %v359, 5
        %v362 = vsel %vm252, %v357, %v361
        %v363 = vshrl.u32 %v210, 16
        %v365 = vrot.slane %v363, 4
        %v366 = vor.u32 %v365, %v361
        %v367 = vrot.slane %v366, 4
        %v369 = vshll.u32 %v238, 16
        %v371 = vrot.slane %v369, 5
        %v372 = vsel %vm252, %v367, %v371
        %v374 = vshrl.u32 %v211, 16
        %v376 = vrot.slane %v374, 4
        %v377 = vshll.u32 %v211, 16
        %v379 = vrot.slane %v377, 5
        %v380 = vor.u32 %v376, %v379
        %v381 = vrot.slane %v380, 4
        %v383 = vshll.u32 %v212, 16
        %v385 = vrot.slane %v383, 5
        %v386 = vsel %vm252, %v381, %v385
        %v387 = vshrl.u32 %v212, 16
        %v389 = vrot.slane %v387, 4
        %v390 = vor.u32 %v389, %v385
        %v391 = vrot.slane %v390, 4
        %v393 = vshll.u32 %v239, 16
        %v395 = vrot.slane %v393, 5
        %v396 = vsel %vm252, %v391, %v395
        %v398 = vshrl.u32 %v213, 16
        %v400 = vrot.slane %v398, 4
        %v401 = vshll.u32 %v213, 16
        %v403 = vrot.slane %v401, 5
        %v404 = vor.u32 %v400, %v403
        %v405 = vrot.slane %v404, 4
        %v407 = vshll.u32 %v214, 16
        %v409 = vrot.slane %v407, 5
        %v410 = vsel %vm252, %v405, %v409
        %v411 = vshrl.u32 %v214, 16
        %v413 = vrot.slane %v411, 4
        %v414 = vor.u32 %v413, %v409
        %v415 = vrot.slane %v414, 4
        %v417 = vshll.u32 %v240, 16
        %v419 = vrot.slane %v417, 5
        %v420 = vsel %vm252, %v415, %v419
        %v422 = vshrl.u32 %v215, 16
        %v424 = vrot.slane %v422, 4
        %v425 = vshll.u32 %v215, 16
        %v427 = vrot.slane %v425, 5
        %v428 = vor.u32 %v424, %v427
        %v429 = vrot.slane %v428, 4
        %v431 = vshll.u32 %v216, 16
        %v433 = vrot.slane %v431, 5
        %v434 = vsel %vm252, %v429, %v433
        %v435 = vshrl.u32 %v216, 16
        %v437 = vrot.slane %v435, 4
        %v438 = vor.u32 %v437, %v433
        %v439 = vrot.slane %v438, 4
        %v441 = vshll.u32 %v241, 16
        %v443 = vrot.slane %v441, 5
        %v444 = vsel %vm252, %v439, %v443
        %v446 = vshrl.u32 %v217, 16
        %v448 = vrot.slane %v446, 4
        %v449 = vshll.u32 %v217, 16
        %v451 = vrot.slane %v449, 5
        %v452 = vor.u32 %v448, %v451
        %v453 = vrot.slane %v452, 4
        %v455 = vshll.u32 %v218, 16
        %v457 = vrot.slane %v455, 5
        %v458 = vsel %vm252, %v453, %v457
        %v459 = vshrl.u32 %v218, 16
        %v461 = vrot.slane %v459, 4
        %v462 = vor.u32 %v461, %v457
        %v463 = vrot.slane %v462, 4
        %v465 = vshll.u32 %v242, 16
        %v467 = vrot.slane %v465, 5
        %v468 = vsel %vm252, %v463, %v467
        %v470 = vshrl.u32 %v219, 16
        %v472 = vrot.slane %v470, 4
        %v473 = vshll.u32 %v219, 16
        %v475 = vrot.slane %v473, 5
        %v476 = vor.u32 %v472, %v475
        %v477 = vrot.slane %v476, 4
        %v479 = vshll.u32 %v220, 16
        %v481 = vrot.slane %v479, 5
        %v482 = vsel %vm252, %v477, %v481
        %v483 = vshrl.u32 %v220, 16
        %v485 = vrot.slane %v483, 4
        %v486 = vor.u32 %v485, %v481
        %v487 = vrot.slane %v486, 4
        %v489 = vshll.u32 %v243, 16
        %v491 = vrot.slane %v489, 5
        %v492 = vsel %vm252, %v487, %v491
        %v494 = vshrl.u32 %v221, 16
        %v496 = vrot.slane %v494, 4
        %v497 = vshll.u32 %v221, 16
        %v499 = vrot.slane %v497, 5
        %v500 = vor.u32 %v496, %v499
        %v501 = vrot.slane %v500, 4
        %v503 = vshll.u32 %v222, 16
        %v505 = vrot.slane %v503, 5
        %v506 = vsel %vm252, %v501, %v505
        %v507 = vshrl.u32 %v222, 16
        %v509 = vrot.slane %v507, 4
        %v510 = vor.u32 %v509, %v505
        %v511 = vrot.slane %v510, 4
        %v513 = vshll.u32 %v244, 16
        %v515 = vrot.slane %v513, 5
        %v516 = vsel %vm252, %v511, %v515
        %v518 = vshrl.u32 %v223, 16
        %v520 = vrot.slane %v518, 4
        %v521 = vshll.u32 %v223, 16
        %v523 = vrot.slane %v521, 5
        %v524 = vor.u32 %v520, %v523
        %v525 = vrot.slane %v524, 4
        %v527 = vshll.u32 %v224, 16
        %v529 = vrot.slane %v527, 5
        %v530 = vsel %vm252, %v525, %v529
        %v531 = vshrl.u32 %v224, 16
        %v533 = vrot.slane %v531, 4
        %v534 = vor.u32 %v533, %v529
        %v535 = vrot.slane %v534, 4
        %v537 = vshll.u32 %v245, 16
        %v539 = vrot.slane %v537, 5
        %v540 = vsel %vm252, %v535, %v539
        %v542 = vshrl.u32 %v225, 16
        %v544 = vrot.slane %v542, 4
        %v545 = vshll.u32 %v225, 16
        %v547 = vrot.slane %v545, 5
        %v548 = vor.u32 %v544, %v547
        %v549 = vrot.slane %v548, 4
        %v551 = vshll.u32 %v226, 16
        %v553 = vrot.slane %v551, 5
        %v554 = vsel %vm252, %v549, %v553
        %v555 = vshrl.u32 %v226, 16
        %v557 = vrot.slane %v555, 4
        %v558 = vor.u32 %v557, %v553
        %v559 = vrot.slane %v558, 4
        %v561 = vshll.u32 %v246, 16
        %v563 = vrot.slane %v561, 5
        %v564 = vsel %vm252, %v559, %v563
        %v566 = vshrl.u32 %v227, 16
        %v568 = vrot.slane %v566, 4
        %v569 = vshll.u32 %v227, 16
        %v571 = vrot.slane %v569, 5
        %v572 = vor.u32 %v568, %v571
        %v573 = vrot.slane %v572, 4
        %v575 = vshll.u32 %v228, 16
        %v577 = vrot.slane %v575, 5
        %v578 = vsel %vm252, %v573, %v577
        %v579 = vshrl.u32 %v228, 16
        %v581 = vrot.slane %v579, 4
        %v582 = vor.u32 %v581, %v577
        %v583 = vrot.slane %v582, 4
        %v585 = vshll.u32 %v247, 16
        %v587 = vrot.slane %v585, 5
        %v588 = vsel %vm252, %v583, %v587
        %v590 = vshrl.u32 %v229, 16
        %v592 = vrot.slane %v590, 4
        %v593 = vshll.u32 %v229, 16
        %v595 = vrot.slane %v593, 5
        %v596 = vor.u32 %v592, %v595
        %v597 = vrot.slane %v596, 4
        %v599 = vshll.u32 %v230, 16
        %v601 = vrot.slane %v599, 5
        %v602 = vsel %vm252, %v597, %v601
        %v603 = vshrl.u32 %v230, 16
        %v605 = vrot.slane %v603, 4
        %v606 = vor.u32 %v605, %v601
        %v607 = vrot.slane %v606, 4
        %v609 = vshll.u32 %v248, 16
        %v611 = vrot.slane %v609, 5
        %v612 = vsel %vm252, %v607, %v611
        %v614 = vshrl.u32 %v231, 16
        %v616 = vrot.slane %v614, 4
        %v617 = vshll.u32 %v231, 16
        %v619 = vrot.slane %v617, 5
        %v620 = vor.u32 %v616, %v619
        %v621 = vrot.slane %v620, 4
        %v623 = vshll.u32 %v232, 16
        %v625 = vrot.slane %v623, 5
        %v626 = vsel %vm252, %v621, %v625
        %v627 = vshrl.u32 %v232, 16
        %v629 = vrot.slane %v627, 4
        %v630 = vor.u32 %v629, %v625
        %v631 = vrot.slane %v630, 4
        %v633 = vshll.u32 %v249, 16
        %v635 = vrot.slane %v633, 5
        %v636 = vsel %vm252, %v631, %v635
        %s637 = scalar_lea.vmem %s1, 2
        %v638 = vld [vmem:[%s637] sm:$0x3]
        %v639 = vunpack.c.l.b16 %v266
        %v640 = vunpack.c.l.b16 %v276
        %v641 = vunpack.c.l.b16 %v290
        %v642 = vunpack.c.l.b16 %v300
        %v643 = vunpack.c.l.b16 %v314
        %v644 = vunpack.c.l.b16 %v324
        %v645 = vunpack.c.l.b16 %v338
        %v646 = vunpack.c.l.b16 %v348
        %v647 = vunpack.c.l.b16 %v362
        %v648 = vunpack.c.l.b16 %v372
        %v649 = vunpack.c.l.b16 %v386
        %v650 = vunpack.c.l.b16 %v396
        %v651 = vunpack.c.l.b16 %v410
        %v652 = vunpack.c.l.b16 %v420
        %v653 = vunpack.c.l.b16 %v434
        %v654 = vunpack.c.l.b16 %v444
        %v655 = vunpack.c.l.b16 %v458
        %v656 = vunpack.c.l.b16 %v468
        %v657 = vunpack.c.l.b16 %v482
        %v658 = vunpack.c.l.b16 %v492
        %v659 = vunpack.c.l.b16 %v506
        %v660 = vunpack.c.l.b16 %v516
        %v661 = vunpack.c.l.b16 %v530
        %v662 = vunpack.c.l.b16 %v540
        %v663 = vunpack.c.l.b16 %v554
        %v664 = vunpack.c.l.b16 %v564
        %v665 = vunpack.c.l.b16 %v578
        %v666 = vunpack.c.l.b16 %v588
        %v667 = vunpack.c.l.b16 %v602
        %v668 = vunpack.c.l.b16 %v612
        %v669 = vunpack.c.l.b16 %v626
        %v670 = vunpack.c.l.b16 %v636
        %v671 = vpack.c.b16 %v640, %v639
        %v672 = vpack.c.b16 %v642, %v641
        %v673 = vpack.c.b16 %v644, %v643
        %v674 = vpack.c.b16 %v646, %v645
        %v675 = vpack.c.b16 %v648, %v647
        %v676 = vpack.c.b16 %v650, %v649
        %v677 = vpack.c.b16 %v652, %v651
        %v678 = vpack.c.b16 %v654, %v653
        %v679 = vpack.c.b16 %v656, %v655
        %v680 = vpack.c.b16 %v658, %v657
        %v681 = vpack.c.b16 %v660, %v659
        %v682 = vpack.c.b16 %v662, %v661
        %v683 = vpack.c.b16 %v664, %v663
        %v684 = vpack.c.b16 %v666, %v665
        %v685 = vpack.c.b16 %v668, %v667
        %v686 = vpack.c.b16 %v670, %v669
        %vm687 = vcmask 31744
        %v689 = vsel %vm687, %v671, 0
        %v692 = vsel %vm687, %v672, 0
        %v695 = vsel %vm687, %v673, 0
        %v698 = vsel %vm687, %v674, 0
        %v701 = vsel %vm687, %v675, 0
        %v704 = vsel %vm687, %v676, 0
        %v707 = vsel %vm687, %v677, 0
        %v710 = vsel %vm687, %v678, 0
        %v713 = vsel %vm687, %v679, 0
        %v716 = vsel %vm687, %v680, 0
        %v719 = vsel %vm687, %v681, 0
        %v722 = vsel %vm687, %v682, 0
        %v725 = vsel %vm687, %v683, 0
        %v728 = vsel %vm687, %v684, 0
        %v731 = vsel %vm687, %v685, 0
        %v734 = vsel %vm687, %v686, 0
        %vm736 = vcmask 1041408
        %v738 = vsel %vm736, %v638, 0
        %740 = vmatprep.subr.bf16.mxu0 0
        %741 = vmatpush1.bf16.msra.mxu0 %v738
        %742 = vmatprep.subr.bf16.mxu0 0
        %743 = vmatpush1.bf16.msra.mxu0 0
        %744 = vmatprep.subr.bf16.mxu0 0
        %745 = vmatpush1.bf16.msra.mxu0 0
        %746 = vmatprep.subr.bf16.mxu0 0
        %747 = vmatpush1.bf16.msra.mxu0 0
        %748 = vmatprep.subr.bf16.mxu0 0
        %749 = vmatpush1.bf16.msra.mxu0 0
        %750 = vmatprep.subr.bf16.mxu0 0
        %751 = vmatpush1.bf16.msra.mxu0 0
        %752 = vmatprep.subr.bf16.mxu0 0
        %753 = vmatpush1.bf16.msra.mxu0 0
        %754 = vmatprep.subr.bf16.mxu0 0
        %755 = vmatpush1.bf16.msra.mxu0 0
        %756 = vmatprep.subr.bf16.mxu0 0
        %757 = vmatpush1.bf16.msra.mxu0 0
        %758 = vmatprep.subr.bf16.mxu0 0
        %759 = vmatpush1.bf16.msra.mxu0 0
        %760 = vmatprep.subr.bf16.mxu0 0
        %761 = vmatpush1.bf16.msra.mxu0 0
        %762 = vmatprep.subr.bf16.mxu0 0
        %763 = vmatpush1.bf16.msra.mxu0 0
        %764 = vmatprep.subr.bf16.mxu0 0
        %765 = vmatpush1.bf16.msra.mxu0 0
        %766 = vmatprep.subr.bf16.mxu0 0
        %767 = vmatpush1.bf16.msra.mxu0 0
        %768 = vmatprep.subr.bf16.mxu0 0
        %769 = vmatpush1.bf16.msra.mxu0 0
        %770 = vmatprep.subr.bf16.mxu0 0
        %771 = vmatpush1.bf16.msra.mxu0 0
        %772 = vmatprep.mubr.bf16.mxu0 0
        %773 = vmatmul.mubr.bf16.gmra.mrb[0].mxu0 %v689
        %v774 = vpop.f32.mrb[0].mxu0
        %v775 = vadd.f32 0.0, %v774
        %v776 = vpop.f32.mrb[0].mxu0
        %v777 = vpop.f32.mrb[0].mxu0
        %v778 = vadd.f32 0.0, %v777
        %v779 = vpop.f32.mrb[0].mxu0
        %780 = vmatprep.mubr.bf16.mxu0 0
        %781 = vmatmul.mubr.bf16.gmra.mrb[0].mxu0 %v692
        %v782 = vpop.f32.mrb[0].mxu0
        %v783 = vadd.f32 0.0, %v782
        %v784 = vpop.f32.mrb[0].mxu0
        %v785 = vpop.f32.mrb[0].mxu0
        %v786 = vadd.f32 0.0, %v785
        %v787 = vpop.f32.mrb[0].mxu0
        %788 = vmatprep.mubr.bf16.mxu0 0
        %789 = vmatmul.mubr.bf16.gmra.mrb[0].mxu0 %v695
        %v790 = vpop.f32.mrb[0].mxu0
        %v791 = vadd.f32 0.0, %v790
        %v792 = vpop.f32.mrb[0].mxu0
        %v793 = vpop.f32.mrb[0].mxu0
        %v794 = vadd.f32 0.0, %v793
        %v795 = vpop.f32.mrb[0].mxu0
        %796 = vmatprep.mubr.bf16.mxu0 0
        %797 = vmatmul.mubr.bf16.gmra.mrb[0].mxu0 %v698
        %v798 = vpop.f32.mrb[0].mxu0
        %v799 = vadd.f32 0.0, %v798
        %v800 = vpop.f32.mrb[0].mxu0
        %v801 = vpop.f32.mrb[0].mxu0
        %v802 = vadd.f32 0.0, %v801
        %v803 = vpop.f32.mrb[0].mxu0
        %804 = vmatprep.mubr.bf16.mxu0 0
        %805 = vmatmul.mubr.bf16.gmra.mrb[0].mxu0 %v701
        %v806 = vpop.f32.mrb[0].mxu0
        %v807 = vadd.f32 0.0, %v806
        %v808 = vpop.f32.mrb[0].mxu0
        %v809 = vpop.f32.mrb[0].mxu0
        %v810 = vadd.f32 0.0, %v809
        %v811 = vpop.f32.mrb[0].mxu0
        %812 = vmatprep.mubr.bf16.mxu0 0
        %813 = vmatmul.mubr.bf16.gmra.mrb[0].mxu0 %v704
        %v814 = vpop.f32.mrb[0].mxu0
        %v815 = vadd.f32 0.0, %v814
        %v816 = vpop.f32.mrb[0].mxu0
        %v817 = vpop.f32.mrb[0].mxu0
        %v818 = vadd.f32 0.0, %v817
        %v819 = vpop.f32.mrb[0].mxu0
        %820 = vmatprep.mubr.bf16.mxu0 0
        %821 = vmatmul.mubr.bf16.gmra.mrb[0].mxu0 %v707
        %v822 = vpop.f32.mrb[0].mxu0
        %v823 = vadd.f32 0.0, %v822
        %v824 = vpop.f32.mrb[0].mxu0
        %v825 = vpop.f32.mrb[0].mxu0
        %v826 = vadd.f32 0.0, %v825
        %v827 = vpop.f32.mrb[0].mxu0
        %828 = vmatprep.mubr.bf16.mxu0 0
        %829 = vmatmul.mubr.bf16.gmra.mrb[0].mxu0 %v710
        %v830 = vpop.f32.mrb[0].mxu0
        %v831 = vadd.f32 0.0, %v830
        %v832 = vpop.f32.mrb[0].mxu0
        %v833 = vpop.f32.mrb[0].mxu0
        %v834 = vadd.f32 0.0, %v833
        %v835 = vpop.f32.mrb[0].mxu0
        %836 = vmatprep.mubr.bf16.mxu0 0
        %837 = vmatmul.mubr.bf16.gmra.mrb[0].mxu0 %v713
        %v838 = vpop.f32.mrb[0].mxu0
        %v839 = vadd.f32 0.0, %v838
        %v840 = vpop.f32.mrb[0].mxu0
        %v841 = vpop.f32.mrb[0].mxu0
        %v842 = vadd.f32 0.0, %v841
        %v843 = vpop.f32.mrb[0].mxu0
        %844 = vmatprep.mubr.bf16.mxu0 0
        %845 = vmatmul.mubr.bf16.gmra.mrb[0].mxu0 %v716
        %v846 = vpop.f32.mrb[0].mxu0
        %v847 = vadd.f32 0.0, %v846
        %v848 = vpop.f32.mrb[0].mxu0
        %v849 = vpop.f32.mrb[0].mxu0
        %v850 = vadd.f32 0.0, %v849
        %v851 = vpop.f32.mrb[0].mxu0
        %852 = vmatprep.mubr.bf16.mxu0 0
        %853 = vmatmul.mubr.bf16.gmra.mrb[0].mxu0 %v719
        %v854 = vpop.f32.mrb[0].mxu0
        %v855 = vadd.f32 0.0, %v854
        %v856 = vpop.f32.mrb[0].mxu0
        %v857 = vpop.f32.mrb[0].mxu0
        %v858 = vadd.f32 0.0, %v857
        %v859 = vpop.f32.mrb[0].mxu0
        %860 = vmatprep.mubr.bf16.mxu0 0
        %861 = vmatmul.mubr.bf16.gmra.mrb[0].mxu0 %v722
        %v862 = vpop.f32.mrb[0].mxu0
        %v863 = vadd.f32 0.0, %v862
        %v864 = vpop.f32.mrb[0].mxu0
        %v865 = vpop.f32.mrb[0].mxu0
        %v866 = vadd.f32 0.0, %v865
        %v867 = vpop.f32.mrb[0].mxu0
        %868 = vmatprep.mubr.bf16.mxu0 0
        %869 = vmatmul.mubr.bf16.gmra.mrb[0].mxu0 %v725
        %v870 = vpop.f32.mrb[0].mxu0
        %v871 = vadd.f32 0.0, %v870
        %v872 = vpop.f32.mrb[0].mxu0
        %v873 = vpop.f32.mrb[0].mxu0
        %v874 = vadd.f32 0.0, %v873
        %v875 = vpop.f32.mrb[0].mxu0
        %876 = vmatprep.mubr.bf16.mxu0 0
        %877 = vmatmul.mubr.bf16.gmra.mrb[0].mxu0 %v728
        %v878 = vpop.f32.mrb[0].mxu0
        %v879 = vadd.f32 0.0, %v878
        %v880 = vpop.f32.mrb[0].mxu0
        %v881 = vpop.f32.mrb[0].mxu0
        %v882 = vadd.f32 0.0, %v881
        %v883 = vpop.f32.mrb[0].mxu0
        %884 = vmatprep.mubr.bf16.mxu0 0
        %885 = vmatmul.mubr.bf16.gmra.mrb[0].mxu0 %v731
        %v886 = vpop.f32.mrb[0].mxu0
        %v887 = vadd.f32 0.0, %v886
        %v888 = vpop.f32.mrb[0].mxu0
        %v889 = vpop.f32.mrb[0].mxu0
        %v890 = vadd.f32 0.0, %v889
        %v891 = vpop.f32.mrb[0].mxu0
        %892 = vmatprep.mubr.bf16.mxu0 0
        %893 = vmatmul.mubr.bf16.gmra.mrb[0].mxu0 %v734
        %v894 = vpop.f32.mrb[0].mxu0
        %v895 = vadd.f32 0.0, %v894
        %v896 = vpop.f32.mrb[0].mxu0
        %v897 = vpop.f32.mrb[0].mxu0
        %v898 = vadd.f32 0.0, %v897
        %v899 = vpop.f32.mrb[0].mxu0
        %900 = vdwg.mxu0
        %v933 = vunpack.c.l.b16 %v201
        %v934 = vunpack.c.l.b16 %v202
        %v935 = vunpack.c.l.b16 %v203
        %v936 = vunpack.c.l.b16 %v204
        %v937 = vunpack.c.l.b16 %v205
        %v938 = vunpack.c.l.b16 %v206
        %v939 = vunpack.c.l.b16 %v207
        %v940 = vunpack.c.l.b16 %v208
        %v941 = vunpack.c.l.b16 %v209
        %v942 = vunpack.c.l.b16 %v210
        %v943 = vunpack.c.l.b16 %v211
        %v944 = vunpack.c.l.b16 %v212
        %v945 = vunpack.c.l.b16 %v213
        %v946 = vunpack.c.l.b16 %v214
        %v947 = vunpack.c.l.b16 %v215
        %v948 = vunpack.c.l.b16 %v216
        %v949 = vunpack.c.l.b16 %v217
        %v950 = vunpack.c.l.b16 %v218
        %v951 = vunpack.c.l.b16 %v219
        %v952 = vunpack.c.l.b16 %v220
        %v953 = vunpack.c.l.b16 %v221
        %v954 = vunpack.c.l.b16 %v222
        %v955 = vunpack.c.l.b16 %v223
        %v956 = vunpack.c.l.b16 %v224
        %v957 = vunpack.c.l.b16 %v225
        %v958 = vunpack.c.l.b16 %v226
        %v959 = vunpack.c.l.b16 %v227
        %v960 = vunpack.c.l.b16 %v228
        %v961 = vunpack.c.l.b16 %v229
        %v962 = vunpack.c.l.b16 %v230
        %v963 = vunpack.c.l.b16 %v231
        %v964 = vunpack.c.l.b16 %v232
        %v965 = vpack.c.b16 %v934, %v933
        %v966 = vpack.c.b16 %v936, %v935
        %v967 = vpack.c.b16 %v938, %v937
        %v968 = vpack.c.b16 %v940, %v939
        %v969 = vpack.c.b16 %v942, %v941
        %v970 = vpack.c.b16 %v944, %v943
        %v971 = vpack.c.b16 %v946, %v945
        %v972 = vpack.c.b16 %v948, %v947
        %v973 = vpack.c.b16 %v950, %v949
        %v974 = vpack.c.b16 %v952, %v951
        %v975 = vpack.c.b16 %v954, %v953
        %v976 = vpack.c.b16 %v956, %v955
        %v977 = vpack.c.b16 %v958, %v957
        %v978 = vpack.c.b16 %v960, %v959
        %v979 = vpack.c.b16 %v962, %v961
        %v980 = vpack.c.b16 %v964, %v963
        %v982 = vsel %vm687, %v965, 0
        %v985 = vsel %vm687, %v966, 0
        %v988 = vsel %vm687, %v967, 0
        %v991 = vsel %vm687, %v968, 0
        %v994 = vsel %vm687, %v969, 0
        %v997 = vsel %vm687, %v970, 0
        %v1000 = vsel %vm687, %v971, 0
        %v1003 = vsel %vm687, %v972, 0
        %v1006 = vsel %vm687, %v973, 0
        %v1009 = vsel %vm687, %v974, 0
        %v1012 = vsel %vm687, %v975, 0
        %v1015 = vsel %vm687, %v976, 0
        %v1018 = vsel %vm687, %v977, 0
        %v1021 = vsel %vm687, %v978, 0
        %v1024 = vsel %vm687, %v979, 0
        %v1027 = vsel %vm687, %v980, 0
        %v1030 = vsel %vm736, %v233, 0
        %1032 = vmatprep.subr.bf16.mxu0 0
        %1033 = vmatpush1.bf16.msra.mxu0 %v1030
        %1034 = vmatprep.subr.bf16.mxu0 0
        %1035 = vmatpush1.bf16.msra.mxu0 0
        %1036 = vmatprep.subr.bf16.mxu0 0
        %1037 = vmatpush1.bf16.msra.mxu0 0
        %1038 = vmatprep.subr.bf16.mxu0 0
        %1039 = vmatpush1.bf16.msra.mxu0 0
        %1040 = vmatprep.subr.bf16.mxu0 0
        %1041 = vmatpush1.bf16.msra.mxu0 0
        %1042 = vmatprep.subr.bf16.mxu0 0
        %1043 = vmatpush1.bf16.msra.mxu0 0
        %1044 = vmatprep.subr.bf16.mxu0 0
        %1045 = vmatpush1.bf16.msra.mxu0 0
        %1046 = vmatprep.subr.bf16.mxu0 0
        %1047 = vmatpush1.bf16.msra.mxu0 0
        %1048 = vmatprep.subr.bf16.mxu0 0
        %1049 = vmatpush1.bf16.msra.mxu0 0
        %1050 = vmatprep.subr.bf16.mxu0 0
        %1051 = vmatpush1.bf16.msra.mxu0 0
        %1052 = vmatprep.subr.bf16.mxu0 0
        %1053 = vmatpush1.bf16.msra.mxu0 0
        %1054 = vmatprep.subr.bf16.mxu0 0
        %1055 = vmatpush1.bf16.msra.mxu0 0
        %1056 = vmatprep.subr.bf16.mxu0 0
        %1057 = vmatpush1.bf16.msra.mxu0 0
        %1058 = vmatprep.subr.bf16.mxu0 0
        %1059 = vmatpush1.bf16.msra.mxu0 0
        %1060 = vmatprep.subr.bf16.mxu0 0
        %1061 = vmatpush1.bf16.msra.mxu0 0
        %1062 = vmatprep.subr.bf16.mxu0 0
        %1063 = vmatpush1.bf16.msra.mxu0 0
        %1064 = vmatprep.mubr.bf16.mxu0 0
        %1065 = vmatmul.mubr.bf16.gmra.mrb[0].mxu0 %v982
        %v1066 = vpop.f32.mrb[0].mxu0
        %v1067 = vadd.f32 %v775, %v1066
        %v1068 = vpop.f32.mrb[0].mxu0
        %v1069 = vpop.f32.mrb[0].mxu0
        %v1070 = vadd.f32 %v778, %v1069
        %v1071 = vpop.f32.mrb[0].mxu0
        %1072 = vmatprep.mubr.bf16.mxu0 0
        %1073 = vmatmul.mubr.bf16.gmra.mrb[0].mxu0 %v985
        %v1074 = vpop.f32.mrb[0].mxu0
        %v1075 = vadd.f32 %v783, %v1074
        %v1076 = vpop.f32.mrb[0].mxu0
        %v1077 = vpop.f32.mrb[0].mxu0
        %v1078 = vadd.f32 %v786, %v1077
        %v1079 = vpop.f32.mrb[0].mxu0
        %1080 = vmatprep.mubr.bf16.mxu0 0
        %1081 = vmatmul.mubr.bf16.gmra.mrb[0].mxu0 %v988
        %v1082 = vpop.f32.mrb[0].mxu0
        %v1083 = vadd.f32 %v791, %v1082
        %v1084 = vpop.f32.mrb[0].mxu0
        %v1085 = vpop.f32.mrb[0].mxu0
        %v1086 = vadd.f32 %v794, %v1085
        %v1087 = vpop.f32.mrb[0].mxu0
        %1088 = vmatprep.mubr.bf16.mxu0 0
        %1089 = vmatmul.mubr.bf16.gmra.mrb[0].mxu0 %v991
        %v1090 = vpop.f32.mrb[0].mxu0
        %v1091 = vadd.f32 %v799, %v1090
        %v1092 = vpop.f32.mrb[0].mxu0
        %v1093 = vpop.f32.mrb[0].mxu0
        %v1094 = vadd.f32 %v802, %v1093
        %v1095 = vpop.f32.mrb[0].mxu0
        %1096 = vmatprep.mubr.bf16.mxu0 0
        %1097 = vmatmul.mubr.bf16.gmra.mrb[0].mxu0 %v994
        %v1098 = vpop.f32.mrb[0].mxu0
        %v1099 = vadd.f32 %v807, %v1098
        %v1100 = vpop.f32.mrb[0].mxu0
        %v1101 = vpop.f32.mrb[0].mxu0
        %v1102 = vadd.f32 %v810, %v1101
        %v1103 = vpop.f32.mrb[0].mxu0
        %1104 = vmatprep.mubr.bf16.mxu0 0
        %1105 = vmatmul.mubr.bf16.gmra.mrb[0].mxu0 %v997
        %v1106 = vpop.f32.mrb[0].mxu0
        %v1107 = vadd.f32 %v815, %v1106
        %v1108 = vpop.f32.mrb[0].mxu0
        %v1109 = vpop.f32.mrb[0].mxu0
        %v1110 = vadd.f32 %v818, %v1109
        %v1111 = vpop.f32.mrb[0].mxu0
        %1112 = vmatprep.mubr.bf16.mxu0 0
        %1113 = vmatmul.mubr.bf16.gmra.mrb[0].mxu0 %v1000
        %v1114 = vpop.f32.mrb[0].mxu0
        %v1115 = vadd.f32 %v823, %v1114
        %v1116 = vpop.f32.mrb[0].mxu0
        %v1117 = vpop.f32.mrb[0].mxu0
        %v1118 = vadd.f32 %v826, %v1117
        %v1119 = vpop.f32.mrb[0].mxu0
        %1120 = vmatprep.mubr.bf16.mxu0 0
        %1121 = vmatmul.mubr.bf16.gmra.mrb[0].mxu0 %v1003
        %v1122 = vpop.f32.mrb[0].mxu0
        %v1123 = vadd.f32 %v831, %v1122
        %v1124 = vpop.f32.mrb[0].mxu0
        %v1125 = vpop.f32.mrb[0].mxu0
        %v1126 = vadd.f32 %v834, %v1125
        %v1127 = vpop.f32.mrb[0].mxu0
        %1128 = vmatprep.mubr.bf16.mxu0 0
        %1129 = vmatmul.mubr.bf16.gmra.mrb[0].mxu0 %v1006
        %v1130 = vpop.f32.mrb[0].mxu0
        %v1131 = vadd.f32 %v839, %v1130
        %v1132 = vpop.f32.mrb[0].mxu0
        %v1133 = vpop.f32.mrb[0].mxu0
        %v1134 = vadd.f32 %v842, %v1133
        %v1135 = vpop.f32.mrb[0].mxu0
        %1136 = vmatprep.mubr.bf16.mxu0 0
        %1137 = vmatmul.mubr.bf16.gmra.mrb[0].mxu0 %v1009
        %v1138 = vpop.f32.mrb[0].mxu0
        %v1139 = vadd.f32 %v847, %v1138
        %v1140 = vpop.f32.mrb[0].mxu0
        %v1141 = vpop.f32.mrb[0].mxu0
        %v1142 = vadd.f32 %v850, %v1141
        %v1143 = vpop.f32.mrb[0].mxu0
        %1144 = vmatprep.mubr.bf16.mxu0 0
        %1145 = vmatmul.mubr.bf16.gmra.mrb[0].mxu0 %v1012
        %v1146 = vpop.f32.mrb[0].mxu0
        %v1147 = vadd.f32 %v855, %v1146
        %v1148 = vpop.f32.mrb[0].mxu0
        %v1149 = vpop.f32.mrb[0].mxu0
        %v1150 = vadd.f32 %v858, %v1149
        %v1151 = vpop.f32.mrb[0].mxu0
        %1152 = vmatprep.mubr.bf16.mxu0 0
        %1153 = vmatmul.mubr.bf16.gmra.mrb[0].mxu0 %v1015
        %v1154 = vpop.f32.mrb[0].mxu0
        %v1155 = vadd.f32 %v863, %v1154
        %v1156 = vpop.f32.mrb[0].mxu0
        %v1157 = vpop.f32.mrb[0].mxu0
        %v1158 = vadd.f32 %v866, %v1157
        %v1159 = vpop.f32.mrb[0].mxu0
        %1160 = vmatprep.mubr.bf16.mxu0 0
        %1161 = vmatmul.mubr.bf16.gmra.mrb[0].mxu0 %v1018
        %v1162 = vpop.f32.mrb[0].mxu0
        %v1163 = vadd.f32 %v871, %v1162
        %v1164 = vpop.f32.mrb[0].mxu0
        %v1165 = vpop.f32.mrb[0].mxu0
        %v1166 = vadd.f32 %v874, %v1165
        %v1167 = vpop.f32.mrb[0].mxu0
        %1168 = vmatprep.mubr.bf16.mxu0 0
        %1169 = vmatmul.mubr.bf16.gmra.mrb[0].mxu0 %v1021
        %v1170 = vpop.f32.mrb[0].mxu0
        %v1171 = vadd.f32 %v879, %v1170
        %v1172 = vpop.f32.mrb[0].mxu0
        %v1173 = vpop.f32.mrb[0].mxu0
        %v1174 = vadd.f32 %v882, %v1173
        %v1175 = vpop.f32.mrb[0].mxu0
        %1176 = vmatprep.mubr.bf16.mxu0 0
        %1177 = vmatmul.mubr.bf16.gmra.mrb[0].mxu0 %v1024
        %v1178 = vpop.f32.mrb[0].mxu0
        %v1179 = vadd.f32 %v887, %v1178
        %v1180 = vpop.f32.mrb[0].mxu0
        %v1181 = vpop.f32.mrb[0].mxu0
        %v1182 = vadd.f32 %v890, %v1181
        %v1183 = vpop.f32.mrb[0].mxu0
        %1184 = vmatprep.mubr.bf16.mxu0 0
        %1185 = vmatmul.mubr.bf16.gmra.mrb[0].mxu0 %v1027
        %v1186 = vpop.f32.mrb[0].mxu0
        %v1187 = vadd.f32 %v895, %v1186
        %v1188 = vpop.f32.mrb[0].mxu0
        %v1189 = vpop.f32.mrb[0].mxu0
        %v1190 = vadd.f32 %v898, %v1189
        %v1191 = vpop.f32.mrb[0].mxu0
        %1192 = vdwg.mxu0
        %v1193 = vld [vmem:[%s191] sm:$0xe]
        %v1194 = vld [vmem:[%s191 + $0xc] sm:$0xe]
        %v1195 = vld [vmem:[%s191 + $0x18] sm:$0xe]
        %v1196 = vld [vmem:[%s191 + $0x24] sm:$0xe]
        %v1197 = vld [vmem:[%s191 + $0x30] sm:$0xe]
        %v1198 = vld [vmem:[%s191 + $0x3c] sm:$0xe]
        %v1199 = vld [vmem:[%s191 + $0x48] sm:$0xe]
        %v1200 = vld [vmem:[%s191 + $0x54] sm:$0xe]
        %v1201 = vld [vmem:[%s191 + $0x60] sm:$0xe]
        %v1202 = vld [vmem:[%s191 + $0x6c] sm:$0xe]
        %v1203 = vld [vmem:[%s191 + $0x78] sm:$0xe]
        %v1204 = vld [vmem:[%s191 + $0x84] sm:$0xe]
        %v1205 = vld [vmem:[%s191 + $0x90] sm:$0xe]
        %v1206 = vld [vmem:[%s191 + $0x9c] sm:$0xe]
        %v1207 = vld [vmem:[%s191 + $0xa8] sm:$0xe]
        %v1208 = vld [vmem:[%s191 + $0xb4] sm:$0xe]
        %vm1241 = vcmask 1042432
        %vm1242 = vcmask 1046532
        %vm1243 = vmor %vm1241, %vm1242
        %v1244 = vrot.slane %v1193, 5
        %v1245 = vrot.slane %v1244, 4
        %v1246 = vrot.slane %v202, 5
        %v1247 = vsel %vm1243, %v1245, %v1246
        %v1248 = vrot.slane %v1246, 4
        %v1249 = vrot.slane %v234, 5
        %v1250 = vsel %vm1243, %v1248, %v1249
        %v1251 = vrot.slane %v1194, 5
        %v1252 = vrot.slane %v1251, 4
        %v1253 = vrot.slane %v204, 5
        %v1254 = vsel %vm1243, %v1252, %v1253
        %v1255 = vrot.slane %v1253, 4
        %v1256 = vrot.slane %v235, 5
        %v1257 = vsel %vm1243, %v1255, %v1256
        %v1258 = vrot.slane %v1195, 5
        %v1259 = vrot.slane %v1258, 4
        %v1260 = vrot.slane %v206, 5
        %v1261 = vsel %vm1243, %v1259, %v1260
        %v1262 = vrot.slane %v1260, 4
        %v1263 = vrot.slane %v236, 5
        %v1264 = vsel %vm1243, %v1262, %v1263
        %v1265 = vrot.slane %v1196, 5
        %v1266 = vrot.slane %v1265, 4
        %v1267 = vrot.slane %v208, 5
        %v1268 = vsel %vm1243, %v1266, %v1267
        %v1269 = vrot.slane %v1267, 4
        %v1270 = vrot.slane %v237, 5
        %v1271 = vsel %vm1243, %v1269, %v1270
        %v1272 = vrot.slane %v1197, 5
        %v1273 = vrot.slane %v1272, 4
        %v1274 = vrot.slane %v210, 5
        %v1275 = vsel %vm1243, %v1273, %v1274
        %v1276 = vrot.slane %v1274, 4
        %v1277 = vrot.slane %v238, 5
        %v1278 = vsel %vm1243, %v1276, %v1277
        %v1279 = vrot.slane %v1198, 5
        %v1280 = vrot.slane %v1279, 4
        %v1281 = vrot.slane %v212, 5
        %v1282 = vsel %vm1243, %v1280, %v1281
        %v1283 = vrot.slane %v1281, 4
        %v1284 = vrot.slane %v239, 5
        %v1285 = vsel %vm1243, %v1283, %v1284
        %v1286 = vrot.slane %v1199, 5
        %v1287 = vrot.slane %v1286, 4
        %v1288 = vrot.slane %v214, 5
        %v1289 = vsel %vm1243, %v1287, %v1288
        %v1290 = vrot.slane %v1288, 4
        %v1291 = vrot.slane %v240, 5
        %v1292 = vsel %vm1243, %v1290, %v1291
        %v1293 = vrot.slane %v1200, 5
        %v1294 = vrot.slane %v1293, 4
        %v1295 = vrot.slane %v216, 5
        %v1296 = vsel %vm1243, %v1294, %v1295
        %v1297 = vrot.slane %v1295, 4
        %v1298 = vrot.slane %v241, 5
        %v1299 = vsel %vm1243, %v1297, %v1298
        %v1300 = vrot.slane %v1201, 5
        %v1301 = vrot.slane %v1300, 4
        %v1302 = vrot.slane %v218, 5
        %v1303 = vsel %vm1243, %v1301, %v1302
        %v1304 = vrot.slane %v1302, 4
        %v1305 = vrot.slane %v242, 5
        %v1306 = vsel %vm1243, %v1304, %v1305
        %v1307 = vrot.slane %v1202, 5
        %v1308 = vrot.slane %v1307, 4
        %v1309 = vrot.slane %v220, 5
        %v1310 = vsel %vm1243, %v1308, %v1309
        %v1311 = vrot.slane %v1309, 4
        %v1312 = vrot.slane %v243, 5
        %v1313 = vsel %vm1243, %v1311, %v1312
        %v1314 = vrot.slane %v1203, 5
        %v1315 = vrot.slane %v1314, 4
        %v1316 = vrot.slane %v222, 5
        %v1317 = vsel %vm1243, %v1315, %v1316
        %v1318 = vrot.slane %v1316, 4
        %v1319 = vrot.slane %v244, 5
        %v1320 = vsel %vm1243, %v1318, %v1319
        %v1321 = vrot.slane %v1204, 5
        %v1322 = vrot.slane %v1321, 4
        %v1323 = vrot.slane %v224, 5
        %v1324 = vsel %vm1243, %v1322, %v1323
        %v1325 = vrot.slane %v1323, 4
        %v1326 = vrot.slane %v245, 5
        %v1327 = vsel %vm1243, %v1325, %v1326
        %v1328 = vrot.slane %v1205, 5
        %v1329 = vrot.slane %v1328, 4
        %v1330 = vrot.slane %v226, 5
        %v1331 = vsel %vm1243, %v1329, %v1330
        %v1332 = vrot.slane %v1330, 4
        %v1333 = vrot.slane %v246, 5
        %v1334 = vsel %vm1243, %v1332, %v1333
        %v1335 = vrot.slane %v1206, 5
        %v1336 = vrot.slane %v1335, 4
        %v1337 = vrot.slane %v228, 5
        %v1338 = vsel %vm1243, %v1336, %v1337
        %v1339 = vrot.slane %v1337, 4
        %v1340 = vrot.slane %v247, 5
        %v1341 = vsel %vm1243, %v1339, %v1340
        %v1342 = vrot.slane %v1207, 5
        %v1343 = vrot.slane %v1342, 4
        %v1344 = vrot.slane %v230, 5
        %v1345 = vsel %vm1243, %v1343, %v1344
        %v1346 = vrot.slane %v1344, 4
        %v1347 = vrot.slane %v248, 5
        %v1348 = vsel %vm1243, %v1346, %v1347
        %v1349 = vrot.slane %v1208, 5
        %v1350 = vrot.slane %v1349, 4
        %v1351 = vrot.slane %v232, 5
        %v1352 = vsel %vm1243, %v1350, %v1351
        %v1353 = vrot.slane %v1351, 4
        %v1354 = vrot.slane %v249, 5
        %v1355 = vsel %vm1243, %v1353, %v1354
        %s1356 = scalar_lea.vmem %s1, 4
        %v1357 = vld [vmem:[%s1356] sm:$0x3]
        %v1358 = vunpack.c.l.b16 %v1247
        %v1359 = vunpack.c.l.b16 %v1250
        %v1360 = vunpack.c.l.b16 %v1254
        %v1361 = vunpack.c.l.b16 %v1257
        %v1362 = vunpack.c.l.b16 %v1261
        %v1363 = vunpack.c.l.b16 %v1264
        %v1364 = vunpack.c.l.b16 %v1268
        %v1365 = vunpack.c.l.b16 %v1271
        %v1366 = vunpack.c.l.b16 %v1275
        %v1367 = vunpack.c.l.b16 %v1278
        %v1368 = vunpack.c.l.b16 %v1282
        %v1369 = vunpack.c.l.b16 %v1285
        %v1370 = vunpack.c.l.b16 %v1289
        %v1371 = vunpack.c.l.b16 %v1292
        %v1372 = vunpack.c.l.b16 %v1296
        %v1373 = vunpack.c.l.b16 %v1299
        %v1374 = vunpack.c.l.b16 %v1303
        %v1375 = vunpack.c.l.b16 %v1306
        %v1376 = vunpack.c.l.b16 %v1310
        %v1377 = vunpack.c.l.b16 %v1313
        %v1378 = vunpack.c.l.b16 %v1317
        %v1379 = vunpack.c.l.b16 %v1320
        %v1380 = vunpack.c.l.b16 %v1324
        %v1381 = vunpack.c.l.b16 %v1327
        %v1382 = vunpack.c.l.b16 %v1331
        %v1383 = vunpack.c.l.b16 %v1334
        %v1384 = vunpack.c.l.b16 %v1338
        %v1385 = vunpack.c.l.b16 %v1341
        %v1386 = vunpack.c.l.b16 %v1345
        %v1387 = vunpack.c.l.b16 %v1348
        %v1388 = vunpack.c.l.b16 %v1352
        %v1389 = vunpack.c.l.b16 %v1355
        %v1390 = vpack.c.b16 %v1359, %v1358
        %v1391 = vpack.c.b16 %v1361, %v1360
        %v1392 = vpack.c.b16 %v1363, %v1362
        %v1393 = vpack.c.b16 %v1365, %v1364
        %v1394 = vpack.c.b16 %v1367, %v1366
        %v1395 = vpack.c.b16 %v1369, %v1368
        %v1396 = vpack.c.b16 %v1371, %v1370
        %v1397 = vpack.c.b16 %v1373, %v1372
        %v1398 = vpack.c.b16 %v1375, %v1374
        %v1399 = vpack.c.b16 %v1377, %v1376
        %v1400 = vpack.c.b16 %v1379, %v1378
        %v1401 = vpack.c.b16 %v1381, %v1380
        %v1402 = vpack.c.b16 %v1383, %v1382
        %v1403 = vpack.c.b16 %v1385, %v1384
        %v1404 = vpack.c.b16 %v1387, %v1386
        %v1405 = vpack.c.b16 %v1389, %v1388
        %v1407 = vsel %vm687, %v1390, 0
        %v1410 = vsel %vm687, %v1391, 0
        %v1413 = vsel %vm687, %v1392, 0
        %v1416 = vsel %vm687, %v1393, 0
        %v1419 = vsel %vm687, %v1394, 0
        %v1422 = vsel %vm687, %v1395, 0
        %v1425 = vsel %vm687, %v1396, 0
        %v1428 = vsel %vm687, %v1397, 0
        %v1431 = vsel %vm687, %v1398, 0
        %v1434 = vsel %vm687, %v1399, 0
        %v1437 = vsel %vm687, %v1400, 0
        %v1440 = vsel %vm687, %v1401, 0
        %v1443 = vsel %vm687, %v1402, 0
        %v1446 = vsel %vm687, %v1403, 0
        %v1449 = vsel %vm687, %v1404, 0
        %v1452 = vsel %vm687, %v1405, 0
        %v1455 = vsel %vm736, %v1357, 0
        %1457 = vmatprep.subr.bf16.mxu0 0
        %1458 = vmatpush1.bf16.msra.mxu0 %v1455
        %1459 = vmatprep.subr.bf16.mxu0 0
        %1460 = vmatpush1.bf16.msra.mxu0 0
        %1461 = vmatprep.subr.bf16.mxu0 0
        %1462 = vmatpush1.bf16.msra.mxu0 0
        %1463 = vmatprep.subr.bf16.mxu0 0
        %1464 = vmatpush1.bf16.msra.mxu0 0
        %1465 = vmatprep.subr.bf16.mxu0 0
        %1466 = vmatpush1.bf16.msra.mxu0 0
        %1467 = vmatprep.subr.bf16.mxu0 0
        %1468 = vmatpush1.bf16.msra.mxu0 0
        %1469 = vmatprep.subr.bf16.mxu0 0
        %1470 = vmatpush1.bf16.msra.mxu0 0
        %1471 = vmatprep.subr.bf16.mxu0 0
        %1472 = vmatpush1.bf16.msra.mxu0 0
        %1473 = vmatprep.subr.bf16.mxu0 0
        %1474 = vmatpush1.bf16.msra.mxu0 0
        %1475 = vmatprep.subr.bf16.mxu0 0
        %1476 = vmatpush1.bf16.msra.mxu0 0
        %1477 = vmatprep.subr.bf16.mxu0 0
        %1478 = vmatpush1.bf16.msra.mxu0 0
        %1479 = vmatprep.subr.bf16.mxu0 0
        %1480 = vmatpush1.bf16.msra.mxu0 0
        %1481 = vmatprep.subr.bf16.mxu0 0
        %1482 = vmatpush1.bf16.msra.mxu0 0
        %1483 = vmatprep.subr.bf16.mxu0 0
        %1484 = vmatpush1.bf16.msra.mxu0 0
        %1485 = vmatprep.subr.bf16.mxu0 0
        %1486 = vmatpush1.bf16.msra.mxu0 0
        %1487 = vmatprep.subr.bf16.mxu0 0
        %1488 = vmatpush1.bf16.msra.mxu0 0
        %1489 = vmatprep.mubr.bf16.mxu0 0
        %1490 = vmatmul.mubr.bf16.gmra.mrb[0].mxu0 %v1407
        %v1491 = vpop.f32.mrb[0].mxu0
        %v1492 = vadd.f32 0.0, %v1491
        %v1493 = vpop.f32.mrb[0].mxu0
        %v1494 = vpop.f32.mrb[0].mxu0
        %v1495 = vadd.f32 0.0, %v1494
        %v1496 = vpop.f32.mrb[0].mxu0
        %1497 = vmatprep.mubr.bf16.mxu0 0
        %1498 = vmatmul.mubr.bf16.gmra.mrb[0].mxu0 %v1410
        %v1499 = vpop.f32.mrb[0].mxu0
        %v1500 = vadd.f32 0.0, %v1499
        %v1501 = vpop.f32.mrb[0].mxu0
        %v1502 = vpop.f32.mrb[0].mxu0
        %v1503 = vadd.f32 0.0, %v1502
        %v1504 = vpop.f32.mrb[0].mxu0
        %1505 = vmatprep.mubr.bf16.mxu0 0
        %1506 = vmatmul.mubr.bf16.gmra.mrb[0].mxu0 %v1413
        %v1507 = vpop.f32.mrb[0].mxu0
        %v1508 = vadd.f32 0.0, %v1507
        %v1509 = vpop.f32.mrb[0].mxu0
        %v1510 = vpop.f32.mrb[0].mxu0
        %v1511 = vadd.f32 0.0, %v1510
        %v1512 = vpop.f32.mrb[0].mxu0
        %1513 = vmatprep.mubr.bf16.mxu0 0
        %1514 = vmatmul.mubr.bf16.gmra.mrb[0].mxu0 %v1416
        %v1515 = vpop.f32.mrb[0].mxu0
        %v1516 = vadd.f32 0.0, %v1515
        %v1517 = vpop.f32.mrb[0].mxu0
        %v1518 = vpop.f32.mrb[0].mxu0
        %v1519 = vadd.f32 0.0, %v1518
        %v1520 = vpop.f32.mrb[0].mxu0
        %1521 = vmatprep.mubr.bf16.mxu0 0
        %1522 = vmatmul.mubr.bf16.gmra.mrb[0].mxu0 %v1419
        %v1523 = vpop.f32.mrb[0].mxu0
        %v1524 = vadd.f32 0.0, %v1523
        %v1525 = vpop.f32.mrb[0].mxu0
        %v1526 = vpop.f32.mrb[0].mxu0
        %v1527 = vadd.f32 0.0, %v1526
        %v1528 = vpop.f32.mrb[0].mxu0
        %1529 = vmatprep.mubr.bf16.mxu0 0
        %1530 = vmatmul.mubr.bf16.gmra.mrb[0].mxu0 %v1422
        %v1531 = vpop.f32.mrb[0].mxu0
        %v1532 = vadd.f32 0.0, %v1531
        %v1533 = vpop.f32.mrb[0].mxu0
        %v1534 = vpop.f32.mrb[0].mxu0
        %v1535 = vadd.f32 0.0, %v1534
        %v1536 = vpop.f32.mrb[0].mxu0
        %1537 = vmatprep.mubr.bf16.mxu0 0
        %1538 = vmatmul.mubr.bf16.gmra.mrb[0].mxu0 %v1425
        %v1539 = vpop.f32.mrb[0].mxu0
        %v1540 = vadd.f32 0.0, %v1539
        %v1541 = vpop.f32.mrb[0].mxu0
        %v1542 = vpop.f32.mrb[0].mxu0
        %v1543 = vadd.f32 0.0, %v1542
        %v1544 = vpop.f32.mrb[0].mxu0
        %1545 = vmatprep.mubr.bf16.mxu0 0
        %1546 = vmatmul.mubr.bf16.gmra.mrb[0].mxu0 %v1428
        %v1547 = vpop.f32.mrb[0].mxu0
        %v1548 = vadd.f32 0.0, %v1547
        %v1549 = vpop.f32.mrb[0].mxu0
        %v1550 = vpop.f32.mrb[0].mxu0
        %v1551 = vadd.f32 0.0, %v1550
        %v1552 = vpop.f32.mrb[0].mxu0
        %1553 = vmatprep.mubr.bf16.mxu0 0
        %1554 = vmatmul.mubr.bf16.gmra.mrb[0].mxu0 %v1431
        %v1555 = vpop.f32.mrb[0].mxu0
        %v1556 = vadd.f32 0.0, %v1555
        %v1557 = vpop.f32.mrb[0].mxu0
        %v1558 = vpop.f32.mrb[0].mxu0
        %v1559 = vadd.f32 0.0, %v1558
        %v1560 = vpop.f32.mrb[0].mxu0
        %1561 = vmatprep.mubr.bf16.mxu0 0
        %1562 = vmatmul.mubr.bf16.gmra.mrb[0].mxu0 %v1434
        %v1563 = vpop.f32.mrb[0].mxu0
        %v1564 = vadd.f32 0.0, %v1563
        %v1565 = vpop.f32.mrb[0].mxu0
        %v1566 = vpop.f32.mrb[0].mxu0
        %v1567 = vadd.f32 0.0, %v1566
        %v1568 = vpop.f32.mrb[0].mxu0
        %1569 = vmatprep.mubr.bf16.mxu0 0
        %1570 = vmatmul.mubr.bf16.gmra.mrb[0].mxu0 %v1437
        %v1571 = vpop.f32.mrb[0].mxu0
        %v1572 = vadd.f32 0.0, %v1571
        %v1573 = vpop.f32.mrb[0].mxu0
        %v1574 = vpop.f32.mrb[0].mxu0
        %v1575 = vadd.f32 0.0, %v1574
        %v1576 = vpop.f32.mrb[0].mxu0
        %1577 = vmatprep.mubr.bf16.mxu0 0
        %1578 = vmatmul.mubr.bf16.gmra.mrb[0].mxu0 %v1440
        %v1579 = vpop.f32.mrb[0].mxu0
        %v1580 = vadd.f32 0.0, %v1579
        %v1581 = vpop.f32.mrb[0].mxu0
        %v1582 = vpop.f32.mrb[0].mxu0
        %v1583 = vadd.f32 0.0, %v1582
        %v1584 = vpop.f32.mrb[0].mxu0
        %1585 = vmatprep.mubr.bf16.mxu0 0
        %1586 = vmatmul.mubr.bf16.gmra.mrb[0].mxu0 %v1443
        %v1587 = vpop.f32.mrb[0].mxu0
        %v1588 = vadd.f32 0.0, %v1587
        %v1589 = vpop.f32.mrb[0].mxu0
        %v1590 = vpop.f32.mrb[0].mxu0
        %v1591 = vadd.f32 0.0, %v1590
        %v1592 = vpop.f32.mrb[0].mxu0
        %1593 = vmatprep.mubr.bf16.mxu0 0
        %1594 = vmatmul.mubr.bf16.gmra.mrb[0].mxu0 %v1446
        %v1595 = vpop.f32.mrb[0].mxu0
        %v1596 = vadd.f32 0.0, %v1595
        %v1597 = vpop.f32.mrb[0].mxu0
        %v1598 = vpop.f32.mrb[0].mxu0
        %v1599 = vadd.f32 0.0, %v1598
        %v1600 = vpop.f32.mrb[0].mxu0
        %1601 = vmatprep.mubr.bf16.mxu0 0
        %1602 = vmatmul.mubr.bf16.gmra.mrb[0].mxu0 %v1449
        %v1603 = vpop.f32.mrb[0].mxu0
        %v1604 = vadd.f32 0.0, %v1603
        %v1605 = vpop.f32.mrb[0].mxu0
        %v1606 = vpop.f32.mrb[0].mxu0
        %v1607 = vadd.f32 0.0, %v1606
        %v1608 = vpop.f32.mrb[0].mxu0
        %1609 = vmatprep.mubr.bf16.mxu0 0
        %1610 = vmatmul.mubr.bf16.gmra.mrb[0].mxu0 %v1452
        %v1611 = vpop.f32.mrb[0].mxu0
        %v1612 = vadd.f32 0.0, %v1611
        %v1613 = vpop.f32.mrb[0].mxu0
        %v1614 = vpop.f32.mrb[0].mxu0
        %v1615 = vadd.f32 0.0, %v1614
        %v1616 = vpop.f32.mrb[0].mxu0
        %1617 = vdwg.mxu0
        %v1618 = vadd.f32 %v1067, %v1492
        %v1619 = vadd.f32 %v1070, %v1495
        %v1620 = vadd.f32 %v1075, %v1500
        %v1621 = vadd.f32 %v1078, %v1503
        %v1622 = vadd.f32 %v1083, %v1508
        %v1623 = vadd.f32 %v1086, %v1511
        %v1624 = vadd.f32 %v1091, %v1516
        %v1625 = vadd.f32 %v1094, %v1519
        %v1626 = vadd.f32 %v1099, %v1524
        %v1627 = vadd.f32 %v1102, %v1527
        %v1628 = vadd.f32 %v1107, %v1532
        %v1629 = vadd.f32 %v1110, %v1535
        %v1630 = vadd.f32 %v1115, %v1540
        %v1631 = vadd.f32 %v1118, %v1543
        %v1632 = vadd.f32 %v1123, %v1548
        %v1633 = vadd.f32 %v1126, %v1551
        %v1634 = vadd.f32 %v1131, %v1556
        %v1635 = vadd.f32 %v1134, %v1559
        %v1636 = vadd.f32 %v1139, %v1564
        %v1637 = vadd.f32 %v1142, %v1567
        %v1638 = vadd.f32 %v1147, %v1572
        %v1639 = vadd.f32 %v1150, %v1575
        %v1640 = vadd.f32 %v1155, %v1580
        %v1641 = vadd.f32 %v1158, %v1583
        %v1642 = vadd.f32 %v1163, %v1588
        %v1643 = vadd.f32 %v1166, %v1591
        %v1644 = vadd.f32 %v1171, %v1596
        %v1645 = vadd.f32 %v1174, %v1599
        %v1646 = vadd.f32 %v1179, %v1604
        %v1647 = vadd.f32 %v1182, %v1607
        %v1648 = vadd.f32 %v1187, %v1612
        %v1649 = vadd.f32 %v1190, %v1615
        %s1650 = scalar_lea.vmem %s191, 12
        %v1651 = vld [vmem:[%s1650] sm:$0xf]
        %v1652 = vld [vmem:[%s1650 + $0x4] sm:$0xf]
        %v1653 = vld [vmem:[%s1650 + $0xc] sm:$0xf]
        %v1654 = vld [vmem:[%s1650 + $0x10] sm:$0xf]
        %v1655 = vld [vmem:[%s1650 + $0x18] sm:$0xf]
        %v1656 = vld [vmem:[%s1650 + $0x1c] sm:$0xf]
        %v1657 = vld [vmem:[%s1650 + $0x24] sm:$0xf]
        %v1658 = vld [vmem:[%s1650 + $0x28] sm:$0xf]
        %v1659 = vld [vmem:[%s1650 + $0x30] sm:$0xf]
        %v1660 = vld [vmem:[%s1650 + $0x34] sm:$0xf]
        %v1661 = vld [vmem:[%s1650 + $0x3c] sm:$0xf]
        %v1662 = vld [vmem:[%s1650 + $0x40] sm:$0xf]
        %v1663 = vld [vmem:[%s1650 + $0x48] sm:$0xf]
        %v1664 = vld [vmem:[%s1650 + $0x4c] sm:$0xf]
        %v1665 = vld [vmem:[%s1650 + $0x54] sm:$0xf]
        %v1666 = vld [vmem:[%s1650 + $0x58] sm:$0xf]
        %v1667 = vld [vmem:[%s1650 + $0x60] sm:$0xf]
        %v1668 = vld [vmem:[%s1650 + $0x64] sm:$0xf]
        %v1669 = vld [vmem:[%s1650 + $0x6c] sm:$0xf]
        %v1670 = vld [vmem:[%s1650 + $0x70] sm:$0xf]
        %v1671 = vld [vmem:[%s1650 + $0x78] sm:$0xf]
        %v1672 = vld [vmem:[%s1650 + $0x7c] sm:$0xf]
        %v1673 = vld [vmem:[%s1650 + $0x84] sm:$0xf]
        %v1674 = vld [vmem:[%s1650 + $0x88] sm:$0xf]
        %v1675 = vld [vmem:[%s1650 + $0x90] sm:$0xf]
        %v1676 = vld [vmem:[%s1650 + $0x94] sm:$0xf]
        %v1677 = vld [vmem:[%s1650 + $0x9c] sm:$0xf]
        %v1678 = vld [vmem:[%s1650 + $0xa0] sm:$0xf]
        %v1679 = vld [vmem:[%s1650 + $0xa8] sm:$0xf]
        %v1680 = vld [vmem:[%s1650 + $0xac] sm:$0xf]
        %v1681 = vld [vmem:[%s1650 + $0xb4] sm:$0xf]
        %v1682 = vld [vmem:[%s1650 + $0xb8] sm:$0xf]
        %s1683 = scalar_lea.vmem %s1, 6
        %v1684 = vld [vmem:[%s1683] sm:$0x3]
        %v1717 = vunpack.c.l.b16 %v1651
        %v1718 = vunpack.c.l.b16 %v1652
        %v1719 = vunpack.c.l.b16 %v1653
        %v1720 = vunpack.c.l.b16 %v1654
        %v1721 = vunpack.c.l.b16 %v1655
        %v1722 = vunpack.c.l.b16 %v1656
        %v1723 = vunpack.c.l.b16 %v1657
        %v1724 = vunpack.c.l.b16 %v1658
        %v1725 = vunpack.c.l.b16 %v1659
        %v1726 = vunpack.c.l.b16 %v1660
        %v1727 = vunpack.c.l.b16 %v1661
        %v1728 = vunpack.c.l.b16 %v1662
        %v1729 = vunpack.c.l.b16 %v1663
        %v1730 = vunpack.c.l.b16 %v1664
        %v1731 = vunpack.c.l.b16 %v1665
        %v1732 = vunpack.c.l.b16 %v1666
        %v1733 = vunpack.c.l.b16 %v1667
        %v1734 = vunpack.c.l.b16 %v1668
        %v1735 = vunpack.c.l.b16 %v1669
        %v1736 = vunpack.c.l.b16 %v1670
        %v1737 = vunpack.c.l.b16 %v1671
        %v1738 = vunpack.c.l.b16 %v1672
        %v1739 = vunpack.c.l.b16 %v1673
        %v1740 = vunpack.c.l.b16 %v1674
        %v1741 = vunpack.c.l.b16 %v1675
        %v1742 = vunpack.c.l.b16 %v1676
        %v1743 = vunpack.c.l.b16 %v1677
        %v1744 = vunpack.c.l.b16 %v1678
        %v1745 = vunpack.c.l.b16 %v1679
        %v1746 = vunpack.c.l.b16 %v1680
        %v1747 = vunpack.c.l.b16 %v1681
        %v1748 = vunpack.c.l.b16 %v1682
        %v1749 = vpack.c.b16 %v1718, %v1717
        %v1750 = vpack.c.b16 %v1720, %v1719
        %v1751 = vpack.c.b16 %v1722, %v1721
        %v1752 = vpack.c.b16 %v1724, %v1723
        %v1753 = vpack.c.b16 %v1726, %v1725
        %v1754 = vpack.c.b16 %v1728, %v1727
        %v1755 = vpack.c.b16 %v1730, %v1729
        %v1756 = vpack.c.b16 %v1732, %v1731
        %v1757 = vpack.c.b16 %v1734, %v1733
        %v1758 = vpack.c.b16 %v1736, %v1735
        %v1759 = vpack.c.b16 %v1738, %v1737
        %v1760 = vpack.c.b16 %v1740, %v1739
        %v1761 = vpack.c.b16 %v1742, %v1741
        %v1762 = vpack.c.b16 %v1744, %v1743
        %v1763 = vpack.c.b16 %v1746, %v1745
        %v1764 = vpack.c.b16 %v1748, %v1747
        %v1766 = vsel %vm687, %v1749, 0
        %v1769 = vsel %vm687, %v1750, 0
        %v1772 = vsel %vm687, %v1751, 0
        %v1775 = vsel %vm687, %v1752, 0
        %v1778 = vsel %vm687, %v1753, 0
        %v1781 = vsel %vm687, %v1754, 0
        %v1784 = vsel %vm687, %v1755, 0
        %v1787 = vsel %vm687, %v1756, 0
        %v1790 = vsel %vm687, %v1757, 0
        %v1793 = vsel %vm687, %v1758, 0
        %v1796 = vsel %vm687, %v1759, 0
        %v1799 = vsel %vm687, %v1760, 0
        %v1802 = vsel %vm687, %v1761, 0
        %v1805 = vsel %vm687, %v1762, 0
        %v1808 = vsel %vm687, %v1763, 0
        %v1811 = vsel %vm687, %v1764, 0
        %v1814 = vsel %vm736, %v1684, 0
        %1816 = vmatprep.subr.bf16.mxu0 0
        %1817 = vmatpush1.bf16.msra.mxu0 %v1814
        %1818 = vmatprep.subr.bf16.mxu0 0
        %1819 = vmatpush1.bf16.msra.mxu0 0
        %1820 = vmatprep.subr.bf16.mxu0 0
        %1821 = vmatpush1.bf16.msra.mxu0 0
        %1822 = vmatprep.subr.bf16.mxu0 0
        %1823 = vmatpush1.bf16.msra.mxu0 0
        %1824 = vmatprep.subr.bf16.mxu0 0
        %1825 = vmatpush1.bf16.msra.mxu0 0
        %1826 = vmatprep.subr.bf16.mxu0 0
        %1827 = vmatpush1.bf16.msra.mxu0 0
        %1828 = vmatprep.subr.bf16.mxu0 0
        %1829 = vmatpush1.bf16.msra.mxu0 0
        %1830 = vmatprep.subr.bf16.mxu0 0
        %1831 = vmatpush1.bf16.msra.mxu0 0
        %1832 = vmatprep.subr.bf16.mxu0 0
        %1833 = vmatpush1.bf16.msra.mxu0 0
        %1834 = vmatprep.subr.bf16.mxu0 0
        %1835 = vmatpush1.bf16.msra.mxu0 0
        %1836 = vmatprep.subr.bf16.mxu0 0
        %1837 = vmatpush1.bf16.msra.mxu0 0
        %1838 = vmatprep.subr.bf16.mxu0 0
        %1839 = vmatpush1.bf16.msra.mxu0 0
        %1840 = vmatprep.subr.bf16.mxu0 0
        %1841 = vmatpush1.bf16.msra.mxu0 0
        %1842 = vmatprep.subr.bf16.mxu0 0
        %1843 = vmatpush1.bf16.msra.mxu0 0
        %1844 = vmatprep.subr.bf16.mxu0 0
        %1845 = vmatpush1.bf16.msra.mxu0 0
        %1846 = vmatprep.subr.bf16.mxu0 0
        %1847 = vmatpush1.bf16.msra.mxu0 0
        %1848 = vmatprep.mubr.bf16.mxu0 0
        %1849 = vmatmul.mubr.bf16.gmra.mrb[0].mxu0 %v1766
        %v1850 = vpop.f32.mrb[0].mxu0
        %v1851 = vadd.f32 0.0, %v1850
        %v1852 = vpop.f32.mrb[0].mxu0
        %v1853 = vpop.f32.mrb[0].mxu0
        %v1854 = vadd.f32 0.0, %v1853
        %v1855 = vpop.f32.mrb[0].mxu0
        %1856 = vmatprep.mubr.bf16.mxu0 0
        %1857 = vmatmul.mubr.bf16.gmra.mrb[0].mxu0 %v1769
        %v1858 = vpop.f32.mrb[0].mxu0
        %v1859 = vadd.f32 0.0, %v1858
        %v1860 = vpop.f32.mrb[0].mxu0
        %v1861 = vpop.f32.mrb[0].mxu0
        %v1862 = vadd.f32 0.0, %v1861
        %v1863 = vpop.f32.mrb[0].mxu0
        %1864 = vmatprep.mubr.bf16.mxu0 0
        %1865 = vmatmul.mubr.bf16.gmra.mrb[0].mxu0 %v1772
        %v1866 = vpop.f32.mrb[0].mxu0
        %v1867 = vadd.f32 0.0, %v1866
        %v1868 = vpop.f32.mrb[0].mxu0
        %v1869 = vpop.f32.mrb[0].mxu0
        %v1870 = vadd.f32 0.0, %v1869
        %v1871 = vpop.f32.mrb[0].mxu0
        %1872 = vmatprep.mubr.bf16.mxu0 0
        %1873 = vmatmul.mubr.bf16.gmra.mrb[0].mxu0 %v1775
        %v1874 = vpop.f32.mrb[0].mxu0
        %v1875 = vadd.f32 0.0, %v1874
        %v1876 = vpop.f32.mrb[0].mxu0
        %v1877 = vpop.f32.mrb[0].mxu0
        %v1878 = vadd.f32 0.0, %v1877
        %v1879 = vpop.f32.mrb[0].mxu0
        %1880 = vmatprep.mubr.bf16.mxu0 0
        %1881 = vmatmul.mubr.bf16.gmra.mrb[0].mxu0 %v1778
        %v1882 = vpop.f32.mrb[0].mxu0
        %v1883 = vadd.f32 0.0, %v1882
        %v1884 = vpop.f32.mrb[0].mxu0
        %v1885 = vpop.f32.mrb[0].mxu0
        %v1886 = vadd.f32 0.0, %v1885
        %v1887 = vpop.f32.mrb[0].mxu0
        %1888 = vmatprep.mubr.bf16.mxu0 0
        %1889 = vmatmul.mubr.bf16.gmra.mrb[0].mxu0 %v1781
        %v1890 = vpop.f32.mrb[0].mxu0
        %v1891 = vadd.f32 0.0, %v1890
        %v1892 = vpop.f32.mrb[0].mxu0
        %v1893 = vpop.f32.mrb[0].mxu0
        %v1894 = vadd.f32 0.0, %v1893
        %v1895 = vpop.f32.mrb[0].mxu0
        %1896 = vmatprep.mubr.bf16.mxu0 0
        %1897 = vmatmul.mubr.bf16.gmra.mrb[0].mxu0 %v1784
        %v1898 = vpop.f32.mrb[0].mxu0
        %v1899 = vadd.f32 0.0, %v1898
        %v1900 = vpop.f32.mrb[0].mxu0
        %v1901 = vpop.f32.mrb[0].mxu0
        %v1902 = vadd.f32 0.0, %v1901
        %v1903 = vpop.f32.mrb[0].mxu0
        %1904 = vmatprep.mubr.bf16.mxu0 0
        %1905 = vmatmul.mubr.bf16.gmra.mrb[0].mxu0 %v1787
        %v1906 = vpop.f32.mrb[0].mxu0
        %v1907 = vadd.f32 0.0, %v1906
        %v1908 = vpop.f32.mrb[0].mxu0
        %v1909 = vpop.f32.mrb[0].mxu0
        %v1910 = vadd.f32 0.0, %v1909
        %v1911 = vpop.f32.mrb[0].mxu0
        %1912 = vmatprep.mubr.bf16.mxu0 0
        %1913 = vmatmul.mubr.bf16.gmra.mrb[0].mxu0 %v1790
        %v1914 = vpop.f32.mrb[0].mxu0
        %v1915 = vadd.f32 0.0, %v1914
        %v1916 = vpop.f32.mrb[0].mxu0
        %v1917 = vpop.f32.mrb[0].mxu0
        %v1918 = vadd.f32 0.0, %v1917
        %v1919 = vpop.f32.mrb[0].mxu0
        %1920 = vmatprep.mubr.bf16.mxu0 0
        %1921 = vmatmul.mubr.bf16.gmra.mrb[0].mxu0 %v1793
        %v1922 = vpop.f32.mrb[0].mxu0
        %v1923 = vadd.f32 0.0, %v1922
        %v1924 = vpop.f32.mrb[0].mxu0
        %v1925 = vpop.f32.mrb[0].mxu0
        %v1926 = vadd.f32 0.0, %v1925
        %v1927 = vpop.f32.mrb[0].mxu0
        %1928 = vmatprep.mubr.bf16.mxu0 0
        %1929 = vmatmul.mubr.bf16.gmra.mrb[0].mxu0 %v1796
        %v1930 = vpop.f32.mrb[0].mxu0
        %v1931 = vadd.f32 0.0, %v1930
        %v1932 = vpop.f32.mrb[0].mxu0
        %v1933 = vpop.f32.mrb[0].mxu0
        %v1934 = vadd.f32 0.0, %v1933
        %v1935 = vpop.f32.mrb[0].mxu0
        %1936 = vmatprep.mubr.bf16.mxu0 0
        %1937 = vmatmul.mubr.bf16.gmra.mrb[0].mxu0 %v1799
        %v1938 = vpop.f32.mrb[0].mxu0
        %v1939 = vadd.f32 0.0, %v1938
        %v1940 = vpop.f32.mrb[0].mxu0
        %v1941 = vpop.f32.mrb[0].mxu0
        %v1942 = vadd.f32 0.0, %v1941
        %v1943 = vpop.f32.mrb[0].mxu0
        %1944 = vmatprep.mubr.bf16.mxu0 0
        %1945 = vmatmul.mubr.bf16.gmra.mrb[0].mxu0 %v1802
        %v1946 = vpop.f32.mrb[0].mxu0
        %v1947 = vadd.f32 0.0, %v1946
        %v1948 = vpop.f32.mrb[0].mxu0
        %v1949 = vpop.f32.mrb[0].mxu0
        %v1950 = vadd.f32 0.0, %v1949
        %v1951 = vpop.f32.mrb[0].mxu0
        %1952 = vmatprep.mubr.bf16.mxu0 0
        %1953 = vmatmul.mubr.bf16.gmra.mrb[0].mxu0 %v1805
        %v1954 = vpop.f32.mrb[0].mxu0
        %v1955 = vadd.f32 0.0, %v1954
        %v1956 = vpop.f32.mrb[0].mxu0
        %v1957 = vpop.f32.mrb[0].mxu0
        %v1958 = vadd.f32 0.0, %v1957
        %v1959 = vpop.f32.mrb[0].mxu0
        %1960 = vmatprep.mubr.bf16.mxu0 0
        %1961 = vmatmul.mubr.bf16.gmra.mrb[0].mxu0 %v1808
        %v1962 = vpop.f32.mrb[0].mxu0
        %v1963 = vadd.f32 0.0, %v1962
        %v1964 = vpop.f32.mrb[0].mxu0
        %v1965 = vpop.f32.mrb[0].mxu0
        %v1966 = vadd.f32 0.0, %v1965
        %v1967 = vpop.f32.mrb[0].mxu0
        %1968 = vmatprep.mubr.bf16.mxu0 0
        %1969 = vmatmul.mubr.bf16.gmra.mrb[0].mxu0 %v1811
        %v1970 = vpop.f32.mrb[0].mxu0
        %v1971 = vadd.f32 0.0, %v1970
        %v1972 = vpop.f32.mrb[0].mxu0
        %v1973 = vpop.f32.mrb[0].mxu0
        %v1974 = vadd.f32 0.0, %v1973
        %v1975 = vpop.f32.mrb[0].mxu0
        %1976 = vdwg.mxu0
        %v1977 = vadd.f32 %v1618, %v1851
        %v1978 = vadd.f32 %v1619, %v1854
        %v1979 = vadd.f32 %v1620, %v1859
        %v1980 = vadd.f32 %v1621, %v1862
        %v1981 = vadd.f32 %v1622, %v1867
        %v1982 = vadd.f32 %v1623, %v1870
        %v1983 = vadd.f32 %v1624, %v1875
        %v1984 = vadd.f32 %v1625, %v1878
        %v1985 = vadd.f32 %v1626, %v1883
        %v1986 = vadd.f32 %v1627, %v1886
        %v1987 = vadd.f32 %v1628, %v1891
        %v1988 = vadd.f32 %v1629, %v1894
        %v1989 = vadd.f32 %v1630, %v1899
        %v1990 = vadd.f32 %v1631, %v1902
        %v1991 = vadd.f32 %v1632, %v1907
        %v1992 = vadd.f32 %v1633, %v1910
        %v1993 = vadd.f32 %v1634, %v1915
        %v1994 = vadd.f32 %v1635, %v1918
        %v1995 = vadd.f32 %v1636, %v1923
        %v1996 = vadd.f32 %v1637, %v1926
        %v1997 = vadd.f32 %v1638, %v1931
        %v1998 = vadd.f32 %v1639, %v1934
        %v1999 = vadd.f32 %v1640, %v1939
        %v2000 = vadd.f32 %v1641, %v1942
        %v2001 = vadd.f32 %v1642, %v1947
        %v2002 = vadd.f32 %v1643, %v1950
        %v2003 = vadd.f32 %v1644, %v1955
        %v2004 = vadd.f32 %v1645, %v1958
        %v2005 = vadd.f32 %v1646, %v1963
        %v2006 = vadd.f32 %v1647, %v1966
        %v2007 = vadd.f32 %v1648, %v1971
        %v2008 = vadd.f32 %v1649, %v1974
        %v2009 = vld [vmem:[%s1650] sm:$0xf]
        %v2010 = vld [vmem:[%s1650 + $0x4] sm:$0xf]
        %v2011 = vld [vmem:[%s1650 + $0x8] sm:$0x1]
        %v2012 = vld [vmem:[%s1650 + $0xc] sm:$0xf]
        %v2013 = vld [vmem:[%s1650 + $0x10] sm:$0xf]
        %v2014 = vld [vmem:[%s1650 + $0x14] sm:$0x1]
        %v2015 = vld [vmem:[%s1650 + $0x18] sm:$0xf]
        %v2016 = vld [vmem:[%s1650 + $0x1c] sm:$0xf]
        %v2017 = vld [vmem:[%s1650 + $0x20] sm:$0x1]
        %v2018 = vld [vmem:[%s1650 + $0x24] sm:$0xf]
        %v2019 = vld [vmem:[%s1650 + $0x28] sm:$0xf]
        %v2020 = vld [vmem:[%s1650 + $0x2c] sm:$0x1]
        %v2021 = vld [vmem:[%s1650 + $0x30] sm:$0xf]
        %v2022 = vld [vmem:[%s1650 + $0x34] sm:$0xf]
        %v2023 = vld [vmem:[%s1650 + $0x38] sm:$0x1]
        %v2024 = vld [vmem:[%s1650 + $0x3c] sm:$0xf]
        %v2025 = vld [vmem:[%s1650 + $0x40] sm:$0xf]
        %v2026 = vld [vmem:[%s1650 + $0x44] sm:$0x1]
        %v2027 = vld [vmem:[%s1650 + $0x48] sm:$0xf]
        %v2028 = vld [vmem:[%s1650 + $0x4c] sm:$0xf]
        %v2029 = vld [vmem:[%s1650 + $0x50] sm:$0x1]
        %v2030 = vld [vmem:[%s1650 + $0x54] sm:$0xf]
        %v2031 = vld [vmem:[%s1650 + $0x58] sm:$0xf]
        %v2032 = vld [vmem:[%s1650 + $0x5c] sm:$0x1]
        %v2033 = vld [vmem:[%s1650 + $0x60] sm:$0xf]
        %v2034 = vld [vmem:[%s1650 + $0x64] sm:$0xf]
        %v2035 = vld [vmem:[%s1650 + $0x68] sm:$0x1]
        %v2036 = vld [vmem:[%s1650 + $0x6c] sm:$0xf]
        %v2037 = vld [vmem:[%s1650 + $0x70] sm:$0xf]
        %v2038 = vld [vmem:[%s1650 + $0x74] sm:$0x1]
        %v2039 = vld [vmem:[%s1650 + $0x78] sm:$0xf]
        %v2040 = vld [vmem:[%s1650 + $0x7c] sm:$0xf]
        %v2041 = vld [vmem:[%s1650 + $0x80] sm:$0x1]
        %v2042 = vld [vmem:[%s1650 + $0x84] sm:$0xf]
        %v2043 = vld [vmem:[%s1650 + $0x88] sm:$0xf]
        %v2044 = vld [vmem:[%s1650 + $0x8c] sm:$0x1]
        %v2045 = vld [vmem:[%s1650 + $0x90] sm:$0xf]
        %v2046 = vld [vmem:[%s1650 + $0x94] sm:$0xf]
        %v2047 = vld [vmem:[%s1650 + $0x98] sm:$0x1]
        %v2048 = vld [vmem:[%s1650 + $0x9c] sm:$0xf]
        %v2049 = vld [vmem:[%s1650 + $0xa0] sm:$0xf]
        %v2050 = vld [vmem:[%s1650 + $0xa4] sm:$0x1]
        %v2051 = vld [vmem:[%s1650 + $0xa8] sm:$0xf]
        %v2052 = vld [vmem:[%s1650 + $0xac] sm:$0xf]
        %v2053 = vld [vmem:[%s1650 + $0xb0] sm:$0x1]
        %v2054 = vld [vmem:[%s1650 + $0xb4] sm:$0xf]
        %v2055 = vld [vmem:[%s1650 + $0xb8] sm:$0xf]
        %v2056 = vld [vmem:[%s1650 + $0xbc] sm:$0x1]
        %v2058 = vshrl.u32 %v2009, 16
        %v2060 = vrot.slane %v2058, 4
        %v2061 = vshll.u32 %v2009, 16
        %v2063 = vrot.slane %v2061, 5
        %v2064 = vor.u32 %v2060, %v2063
        %v2065 = vrot.slane %v2064, 4
        %v2067 = vshll.u32 %v2010, 16
        %v2069 = vrot.slane %v2067, 5
        %v2070 = vsel %vm252, %v2065, %v2069
        %v2071 = vshrl.u32 %v2010, 16
        %v2073 = vrot.slane %v2071, 4
        %v2074 = vor.u32 %v2073, %v2069
        %v2075 = vrot.slane %v2074, 4
        %v2077 = vshll.u32 %v2011, 16
        %v2079 = vrot.slane %v2077, 5
        %v2080 = vsel %vm252, %v2075, %v2079
        %v2082 = vshrl.u32 %v2012, 16
        %v2084 = vrot.slane %v2082, 4
        %v2085 = vshll.u32 %v2012, 16
        %v2087 = vrot.slane %v2085, 5
        %v2088 = vor.u32 %v2084, %v2087
        %v2089 = vrot.slane %v2088, 4
        %v2091 = vshll.u32 %v2013, 16
        %v2093 = vrot.slane %v2091, 5
        %v2094 = vsel %vm252, %v2089, %v2093
        %v2095 = vshrl.u32 %v2013, 16
        %v2097 = vrot.slane %v2095, 4
        %v2098 = vor.u32 %v2097, %v2093
        %v2099 = vrot.slane %v2098, 4
        %v2101 = vshll.u32 %v2014, 16
        %v2103 = vrot.slane %v2101, 5
        %v2104 = vsel %vm252, %v2099, %v2103
        %v2106 = vshrl.u32 %v2015, 16
        %v2108 = vrot.slane %v2106, 4
        %v2109 = vshll.u32 %v2015, 16
        %v2111 = vrot.slane %v2109, 5
        %v2112 = vor.u32 %v2108, %v2111
        %v2113 = vrot.slane %v2112, 4
        %v2115 = vshll.u32 %v2016, 16
        %v2117 = vrot.slane %v2115, 5
        %v2118 = vsel %vm252, %v2113, %v2117
        %v2119 = vshrl.u32 %v2016, 16
        %v2121 = vrot.slane %v2119, 4
        %v2122 = vor.u32 %v2121, %v2117
        %v2123 = vrot.slane %v2122, 4
        %v2125 = vshll.u32 %v2017, 16
        %v2127 = vrot.slane %v2125, 5
        %v2128 = vsel %vm252, %v2123, %v2127
        %v2130 = vshrl.u32 %v2018, 16
        %v2132 = vrot.slane %v2130, 4
        %v2133 = vshll.u32 %v2018, 16
        %v2135 = vrot.slane %v2133, 5
        %v2136 = vor.u32 %v2132, %v2135
        %v2137 = vrot.slane %v2136, 4
        %v2139 = vshll.u32 %v2019, 16
        %v2141 = vrot.slane %v2139, 5
        %v2142 = vsel %vm252, %v2137, %v2141
        %v2143 = vshrl.u32 %v2019, 16
        %v2145 = vrot.slane %v2143, 4
        %v2146 = vor.u32 %v2145, %v2141
        %v2147 = vrot.slane %v2146, 4
        %v2149 = vshll.u32 %v2020, 16
        %v2151 = vrot.slane %v2149, 5
        %v2152 = vsel %vm252, %v2147, %v2151
        %v2154 = vshrl.u32 %v2021, 16
        %v2156 = vrot.slane %v2154, 4
        %v2157 = vshll.u32 %v2021, 16
        %v2159 = vrot.slane %v2157, 5
        %v2160 = vor.u32 %v2156, %v2159
        %v2161 = vrot.slane %v2160, 4
        %v2163 = vshll.u32 %v2022, 16
        %v2165 = vrot.slane %v2163, 5
        %v2166 = vsel %vm252, %v2161, %v2165
        %v2167 = vshrl.u32 %v2022, 16
        %v2169 = vrot.slane %v2167, 4
        %v2170 = vor.u32 %v2169, %v2165
        %v2171 = vrot.slane %v2170, 4
        %v2173 = vshll.u32 %v2023, 16
        %v2175 = vrot.slane %v2173, 5
        %v2176 = vsel %vm252, %v2171, %v2175
        %v2178 = vshrl.u32 %v2024, 16
        %v2180 = vrot.slane %v2178, 4
        %v2181 = vshll.u32 %v2024, 16
        %v2183 = vrot.slane %v2181, 5
        %v2184 = vor.u32 %v2180, %v2183
        %v2185 = vrot.slane %v2184, 4
        %v2187 = vshll.u32 %v2025, 16
        %v2189 = vrot.slane %v2187, 5
        %v2190 = vsel %vm252, %v2185, %v2189
        %v2191 = vshrl.u32 %v2025, 16
        %v2193 = vrot.slane %v2191, 4
        %v2194 = vor.u32 %v2193, %v2189
        %v2195 = vrot.slane %v2194, 4
        %v2197 = vshll.u32 %v2026, 16
        %v2199 = vrot.slane %v2197, 5
        %v2200 = vsel %vm252, %v2195, %v2199
        %v2202 = vshrl.u32 %v2027, 16
        %v2204 = vrot.slane %v2202, 4
        %v2205 = vshll.u32 %v2027, 16
        %v2207 = vrot.slane %v2205, 5
        %v2208 = vor.u32 %v2204, %v2207
        %v2209 = vrot.slane %v2208, 4
        %v2211 = vshll.u32 %v2028, 16
        %v2213 = vrot.slane %v2211, 5
        %v2214 = vsel %vm252, %v2209, %v2213
        %v2215 = vshrl.u32 %v2028, 16
        %v2217 = vrot.slane %v2215, 4
        %v2218 = vor.u32 %v2217, %v2213
        %v2219 = vrot.slane %v2218, 4
        %v2221 = vshll.u32 %v2029, 16
        %v2223 = vrot.slane %v2221, 5
        %v2224 = vsel %vm252, %v2219, %v2223
        %v2226 = vshrl.u32 %v2030, 16
        %v2228 = vrot.slane %v2226, 4
        %v2229 = vshll.u32 %v2030, 16
        %v2231 = vrot.slane %v2229, 5
        %v2232 = vor.u32 %v2228, %v2231
        %v2233 = vrot.slane %v2232, 4
        %v2235 = vshll.u32 %v2031, 16
        %v2237 = vrot.slane %v2235, 5
        %v2238 = vsel %vm252, %v2233, %v2237
        %v2239 = vshrl.u32 %v2031, 16
        %v2241 = vrot.slane %v2239, 4
        %v2242 = vor.u32 %v2241, %v2237
        %v2243 = vrot.slane %v2242, 4
        %v2245 = vshll.u32 %v2032, 16
        %v2247 = vrot.slane %v2245, 5
        %v2248 = vsel %vm252, %v2243, %v2247
        %v2250 = vshrl.u32 %v2033, 16
        %v2252 = vrot.slane %v2250, 4
        %v2253 = vshll.u32 %v2033, 16
        %v2255 = vrot.slane %v2253, 5
        %v2256 = vor.u32 %v2252, %v2255
        %v2257 = vrot.slane %v2256, 4
        %v2259 = vshll.u32 %v2034, 16
        %v2261 = vrot.slane %v2259, 5
        %v2262 = vsel %vm252, %v2257, %v2261
        %v2263 = vshrl.u32 %v2034, 16
        %v2265 = vrot.slane %v2263, 4
        %v2266 = vor.u32 %v2265, %v2261
        %v2267 = vrot.slane %v2266, 4
        %v2269 = vshll.u32 %v2035, 16
        %v2271 = vrot.slane %v2269, 5
        %v2272 = vsel %vm252, %v2267, %v2271
        %v2274 = vshrl.u32 %v2036, 16
        %v2276 = vrot.slane %v2274, 4
        %v2277 = vshll.u32 %v2036, 16
        %v2279 = vrot.slane %v2277, 5
        %v2280 = vor.u32 %v2276, %v2279
        %v2281 = vrot.slane %v2280, 4
        %v2283 = vshll.u32 %v2037, 16
        %v2285 = vrot.slane %v2283, 5
        %v2286 = vsel %vm252, %v2281, %v2285
        %v2287 = vshrl.u32 %v2037, 16
        %v2289 = vrot.slane %v2287, 4
        %v2290 = vor.u32 %v2289, %v2285
        %v2291 = vrot.slane %v2290, 4
        %v2293 = vshll.u32 %v2038, 16
        %v2295 = vrot.slane %v2293, 5
        %v2296 = vsel %vm252, %v2291, %v2295
        %v2298 = vshrl.u32 %v2039, 16
        %v2300 = vrot.slane %v2298, 4
        %v2301 = vshll.u32 %v2039, 16
        %v2303 = vrot.slane %v2301, 5
        %v2304 = vor.u32 %v2300, %v2303
        %v2305 = vrot.slane %v2304, 4
        %v2307 = vshll.u32 %v2040, 16
        %v2309 = vrot.slane %v2307, 5
        %v2310 = vsel %vm252, %v2305, %v2309
        %v2311 = vshrl.u32 %v2040, 16
        %v2313 = vrot.slane %v2311, 4
        %v2314 = vor.u32 %v2313, %v2309
        %v2315 = vrot.slane %v2314, 4
        %v2317 = vshll.u32 %v2041, 16
        %v2319 = vrot.slane %v2317, 5
        %v2320 = vsel %vm252, %v2315, %v2319
        %v2322 = vshrl.u32 %v2042, 16
        %v2324 = vrot.slane %v2322, 4
        %v2325 = vshll.u32 %v2042, 16
        %v2327 = vrot.slane %v2325, 5
        %v2328 = vor.u32 %v2324, %v2327
        %v2329 = vrot.slane %v2328, 4
        %v2331 = vshll.u32 %v2043, 16
        %v2333 = vrot.slane %v2331, 5
        %v2334 = vsel %vm252, %v2329, %v2333
        %v2335 = vshrl.u32 %v2043, 16
        %v2337 = vrot.slane %v2335, 4
        %v2338 = vor.u32 %v2337, %v2333
        %v2339 = vrot.slane %v2338, 4
        %v2341 = vshll.u32 %v2044, 16
        %v2343 = vrot.slane %v2341, 5
        %v2344 = vsel %vm252, %v2339, %v2343
        %v2346 = vshrl.u32 %v2045, 16
        %v2348 = vrot.slane %v2346, 4
        %v2349 = vshll.u32 %v2045, 16
        %v2351 = vrot.slane %v2349, 5
        %v2352 = vor.u32 %v2348, %v2351
        %v2353 = vrot.slane %v2352, 4
        %v2355 = vshll.u32 %v2046, 16
        %v2357 = vrot.slane %v2355, 5
        %v2358 = vsel %vm252, %v2353, %v2357
        %v2359 = vshrl.u32 %v2046, 16
        %v2361 = vrot.slane %v2359, 4
        %v2362 = vor.u32 %v2361, %v2357
        %v2363 = vrot.slane %v2362, 4
        %v2365 = vshll.u32 %v2047, 16
        %v2367 = vrot.slane %v2365, 5
        %v2368 = vsel %vm252, %v2363, %v2367
        %v2370 = vshrl.u32 %v2048, 16
        %v2372 = vrot.slane %v2370, 4
        %v2373 = vshll.u32 %v2048, 16
        %v2375 = vrot.slane %v2373, 5
        %v2376 = vor.u32 %v2372, %v2375
        %v2377 = vrot.slane %v2376, 4
        %v2379 = vshll.u32 %v2049, 16
        %v2381 = vrot.slane %v2379, 5
        %v2382 = vsel %vm252, %v2377, %v2381
        %v2383 = vshrl.u32 %v2049, 16
        %v2385 = vrot.slane %v2383, 4
        %v2386 = vor.u32 %v2385, %v2381
        %v2387 = vrot.slane %v2386, 4
        %v2389 = vshll.u32 %v2050, 16
        %v2391 = vrot.slane %v2389, 5
        %v2392 = vsel %vm252, %v2387, %v2391
        %v2394 = vshrl.u32 %v2051, 16
        %v2396 = vrot.slane %v2394, 4
        %v2397 = vshll.u32 %v2051, 16
        %v2399 = vrot.slane %v2397, 5
        %v2400 = vor.u32 %v2396, %v2399
        %v2401 = vrot.slane %v2400, 4
        %v2403 = vshll.u32 %v2052, 16
        %v2405 = vrot.slane %v2403, 5
        %v2406 = vsel %vm252, %v2401, %v2405
        %v2407 = vshrl.u32 %v2052, 16
        %v2409 = vrot.slane %v2407, 4
        %v2410 = vor.u32 %v2409, %v2405
        %v2411 = vrot.slane %v2410, 4
        %v2413 = vshll.u32 %v2053, 16
        %v2415 = vrot.slane %v2413, 5
        %v2416 = vsel %vm252, %v2411, %v2415
        %v2418 = vshrl.u32 %v2054, 16
        %v2420 = vrot.slane %v2418, 4
        %v2421 = vshll.u32 %v2054, 16
        %v2423 = vrot.slane %v2421, 5
        %v2424 = vor.u32 %v2420, %v2423
        %v2425 = vrot.slane %v2424, 4
        %v2427 = vshll.u32 %v2055, 16
        %v2429 = vrot.slane %v2427, 5
        %v2430 = vsel %vm252, %v2425, %v2429
        %v2431 = vshrl.u32 %v2055, 16
        %v2433 = vrot.slane %v2431, 4
        %v2434 = vor.u32 %v2433, %v2429
        %v2435 = vrot.slane %v2434, 4
        %v2437 = vshll.u32 %v2056, 16
        %v2439 = vrot.slane %v2437, 5
        %v2440 = vsel %vm252, %v2435, %v2439
        %s2441 = scalar_lea.vmem %s1, 8
        %v2442 = vld [vmem:[%s2441] sm:$0x3]
        %v2443 = vunpack.c.l.b16 %v2070
        %v2444 = vunpack.c.l.b16 %v2080
        %v2445 = vunpack.c.l.b16 %v2094
        %v2446 = vunpack.c.l.b16 %v2104
        %v2447 = vunpack.c.l.b16 %v2118
        %v2448 = vunpack.c.l.b16 %v2128
        %v2449 = vunpack.c.l.b16 %v2142
        %v2450 = vunpack.c.l.b16 %v2152
        %v2451 = vunpack.c.l.b16 %v2166
        %v2452 = vunpack.c.l.b16 %v2176
        %v2453 = vunpack.c.l.b16 %v2190
        %v2454 = vunpack.c.l.b16 %v2200
        %v2455 = vunpack.c.l.b16 %v2214
        %v2456 = vunpack.c.l.b16 %v2224
        %v2457 = vunpack.c.l.b16 %v2238
        %v2458 = vunpack.c.l.b16 %v2248
        %v2459 = vunpack.c.l.b16 %v2262
        %v2460 = vunpack.c.l.b16 %v2272
        %v2461 = vunpack.c.l.b16 %v2286
        %v2462 = vunpack.c.l.b16 %v2296
        %v2463 = vunpack.c.l.b16 %v2310
        %v2464 = vunpack.c.l.b16 %v2320
        %v2465 = vunpack.c.l.b16 %v2334
        %v2466 = vunpack.c.l.b16 %v2344
        %v2467 = vunpack.c.l.b16 %v2358
        %v2468 = vunpack.c.l.b16 %v2368
        %v2469 = vunpack.c.l.b16 %v2382
        %v2470 = vunpack.c.l.b16 %v2392
        %v2471 = vunpack.c.l.b16 %v2406
        %v2472 = vunpack.c.l.b16 %v2416
        %v2473 = vunpack.c.l.b16 %v2430
        %v2474 = vunpack.c.l.b16 %v2440
        %v2475 = vpack.c.b16 %v2444, %v2443
        %v2476 = vpack.c.b16 %v2446, %v2445
        %v2477 = vpack.c.b16 %v2448, %v2447
        %v2478 = vpack.c.b16 %v2450, %v2449
        %v2479 = vpack.c.b16 %v2452, %v2451
        %v2480 = vpack.c.b16 %v2454, %v2453
        %v2481 = vpack.c.b16 %v2456, %v2455
        %v2482 = vpack.c.b16 %v2458, %v2457
        %v2483 = vpack.c.b16 %v2460, %v2459
        %v2484 = vpack.c.b16 %v2462, %v2461
        %v2485 = vpack.c.b16 %v2464, %v2463
        %v2486 = vpack.c.b16 %v2466, %v2465
        %v2487 = vpack.c.b16 %v2468, %v2467
        %v2488 = vpack.c.b16 %v2470, %v2469
        %v2489 = vpack.c.b16 %v2472, %v2471
        %v2490 = vpack.c.b16 %v2474, %v2473
        %v2492 = vsel %vm687, %v2475, 0
        %v2495 = vsel %vm687, %v2476, 0
        %v2498 = vsel %vm687, %v2477, 0
        %v2501 = vsel %vm687, %v2478, 0
        %v2504 = vsel %vm687, %v2479, 0
        %v2507 = vsel %vm687, %v2480, 0
        %v2510 = vsel %vm687, %v2481, 0
        %v2513 = vsel %vm687, %v2482, 0
        %v2516 = vsel %vm687, %v2483, 0
        %v2519 = vsel %vm687, %v2484, 0
        %v2522 = vsel %vm687, %v2485, 0
        %v2525 = vsel %vm687, %v2486, 0
        %v2528 = vsel %vm687, %v2487, 0
        %v2531 = vsel %vm687, %v2488, 0
        %v2534 = vsel %vm687, %v2489, 0
        %v2537 = vsel %vm687, %v2490, 0
        %v2540 = vsel %vm736, %v2442, 0
        %2542 = vmatprep.subr.bf16.mxu0 0
        %2543 = vmatpush1.bf16.msra.mxu0 %v2540
        %2544 = vmatprep.subr.bf16.mxu0 0
        %2545 = vmatpush1.bf16.msra.mxu0 0
        %2546 = vmatprep.subr.bf16.mxu0 0
        %2547 = vmatpush1.bf16.msra.mxu0 0
        %2548 = vmatprep.subr.bf16.mxu0 0
        %2549 = vmatpush1.bf16.msra.mxu0 0
        %2550 = vmatprep.subr.bf16.mxu0 0
        %2551 = vmatpush1.bf16.msra.mxu0 0
        %2552 = vmatprep.subr.bf16.mxu0 0
        %2553 = vmatpush1.bf16.msra.mxu0 0
        %2554 = vmatprep.subr.bf16.mxu0 0
        %2555 = vmatpush1.bf16.msra.mxu0 0
        %2556 = vmatprep.subr.bf16.mxu0 0
        %2557 = vmatpush1.bf16.msra.mxu0 0
        %2558 = vmatprep.subr.bf16.mxu0 0
        %2559 = vmatpush1.bf16.msra.mxu0 0
        %2560 = vmatprep.subr.bf16.mxu0 0
        %2561 = vmatpush1.bf16.msra.mxu0 0
        %2562 = vmatprep.subr.bf16.mxu0 0
        %2563 = vmatpush1.bf16.msra.mxu0 0
        %2564 = vmatprep.subr.bf16.mxu0 0
        %2565 = vmatpush1.bf16.msra.mxu0 0
        %2566 = vmatprep.subr.bf16.mxu0 0
        %2567 = vmatpush1.bf16.msra.mxu0 0
        %2568 = vmatprep.subr.bf16.mxu0 0
        %2569 = vmatpush1.bf16.msra.mxu0 0
        %2570 = vmatprep.subr.bf16.mxu0 0
        %2571 = vmatpush1.bf16.msra.mxu0 0
        %2572 = vmatprep.subr.bf16.mxu0 0
        %2573 = vmatpush1.bf16.msra.mxu0 0
        %2574 = vmatprep.mubr.bf16.mxu0 0
        %2575 = vmatmul.mubr.bf16.gmra.mrb[0].mxu0 %v2492
        %v2576 = vpop.f32.mrb[0].mxu0
        %v2577 = vadd.f32 0.0, %v2576
        %v2578 = vpop.f32.mrb[0].mxu0
        %v2579 = vpop.f32.mrb[0].mxu0
        %v2580 = vadd.f32 0.0, %v2579
        %v2581 = vpop.f32.mrb[0].mxu0
        %2582 = vmatprep.mubr.bf16.mxu0 0
        %2583 = vmatmul.mubr.bf16.gmra.mrb[0].mxu0 %v2495
        %v2584 = vpop.f32.mrb[0].mxu0
        %v2585 = vadd.f32 0.0, %v2584
        %v2586 = vpop.f32.mrb[0].mxu0
        %v2587 = vpop.f32.mrb[0].mxu0
        %v2588 = vadd.f32 0.0, %v2587
        %v2589 = vpop.f32.mrb[0].mxu0
        %2590 = vmatprep.mubr.bf16.mxu0 0
        %2591 = vmatmul.mubr.bf16.gmra.mrb[0].mxu0 %v2498
        %v2592 = vpop.f32.mrb[0].mxu0
        %v2593 = vadd.f32 0.0, %v2592
        %v2594 = vpop.f32.mrb[0].mxu0
        %v2595 = vpop.f32.mrb[0].mxu0
        %v2596 = vadd.f32 0.0, %v2595
        %v2597 = vpop.f32.mrb[0].mxu0
        %2598 = vmatprep.mubr.bf16.mxu0 0
        %2599 = vmatmul.mubr.bf16.gmra.mrb[0].mxu0 %v2501
        %v2600 = vpop.f32.mrb[0].mxu0
        %v2601 = vadd.f32 0.0, %v2600
        %v2602 = vpop.f32.mrb[0].mxu0
        %v2603 = vpop.f32.mrb[0].mxu0
        %v2604 = vadd.f32 0.0, %v2603
        %v2605 = vpop.f32.mrb[0].mxu0
        %2606 = vmatprep.mubr.bf16.mxu0 0
        %2607 = vmatmul.mubr.bf16.gmra.mrb[0].mxu0 %v2504
        %v2608 = vpop.f32.mrb[0].mxu0
        %v2609 = vadd.f32 0.0, %v2608
        %v2610 = vpop.f32.mrb[0].mxu0
        %v2611 = vpop.f32.mrb[0].mxu0
        %v2612 = vadd.f32 0.0, %v2611
        %v2613 = vpop.f32.mrb[0].mxu0
        %2614 = vmatprep.mubr.bf16.mxu0 0
        %2615 = vmatmul.mubr.bf16.gmra.mrb[0].mxu0 %v2507
        %v2616 = vpop.f32.mrb[0].mxu0
        %v2617 = vadd.f32 0.0, %v2616
        %v2618 = vpop.f32.mrb[0].mxu0
        %v2619 = vpop.f32.mrb[0].mxu0
        %v2620 = vadd.f32 0.0, %v2619
        %v2621 = vpop.f32.mrb[0].mxu0
        %2622 = vmatprep.mubr.bf16.mxu0 0
        %2623 = vmatmul.mubr.bf16.gmra.mrb[0].mxu0 %v2510
        %v2624 = vpop.f32.mrb[0].mxu0
        %v2625 = vadd.f32 0.0, %v2624
        %v2626 = vpop.f32.mrb[0].mxu0
        %v2627 = vpop.f32.mrb[0].mxu0
        %v2628 = vadd.f32 0.0, %v2627
        %v2629 = vpop.f32.mrb[0].mxu0
        %2630 = vmatprep.mubr.bf16.mxu0 0
        %2631 = vmatmul.mubr.bf16.gmra.mrb[0].mxu0 %v2513
        %v2632 = vpop.f32.mrb[0].mxu0
        %v2633 = vadd.f32 0.0, %v2632
        %v2634 = vpop.f32.mrb[0].mxu0
        %v2635 = vpop.f32.mrb[0].mxu0
        %v2636 = vadd.f32 0.0, %v2635
        %v2637 = vpop.f32.mrb[0].mxu0
        %2638 = vmatprep.mubr.bf16.mxu0 0
        %2639 = vmatmul.mubr.bf16.gmra.mrb[0].mxu0 %v2516
        %v2640 = vpop.f32.mrb[0].mxu0
        %v2641 = vadd.f32 0.0, %v2640
        %v2642 = vpop.f32.mrb[0].mxu0
        %v2643 = vpop.f32.mrb[0].mxu0
        %v2644 = vadd.f32 0.0, %v2643
        %v2645 = vpop.f32.mrb[0].mxu0
        %2646 = vmatprep.mubr.bf16.mxu0 0
        %2647 = vmatmul.mubr.bf16.gmra.mrb[0].mxu0 %v2519
        %v2648 = vpop.f32.mrb[0].mxu0
        %v2649 = vadd.f32 0.0, %v2648
        %v2650 = vpop.f32.mrb[0].mxu0
        %v2651 = vpop.f32.mrb[0].mxu0
        %v2652 = vadd.f32 0.0, %v2651
        %v2653 = vpop.f32.mrb[0].mxu0
        %2654 = vmatprep.mubr.bf16.mxu0 0
        %2655 = vmatmul.mubr.bf16.gmra.mrb[0].mxu0 %v2522
        %v2656 = vpop.f32.mrb[0].mxu0
        %v2657 = vadd.f32 0.0, %v2656
        %v2658 = vpop.f32.mrb[0].mxu0
        %v2659 = vpop.f32.mrb[0].mxu0
        %v2660 = vadd.f32 0.0, %v2659
        %v2661 = vpop.f32.mrb[0].mxu0
        %2662 = vmatprep.mubr.bf16.mxu0 0
        %2663 = vmatmul.mubr.bf16.gmra.mrb[0].mxu0 %v2525
        %v2664 = vpop.f32.mrb[0].mxu0
        %v2665 = vadd.f32 0.0, %v2664
        %v2666 = vpop.f32.mrb[0].mxu0
        %v2667 = vpop.f32.mrb[0].mxu0
        %v2668 = vadd.f32 0.0, %v2667
        %v2669 = vpop.f32.mrb[0].mxu0
        %2670 = vmatprep.mubr.bf16.mxu0 0
        %2671 = vmatmul.mubr.bf16.gmra.mrb[0].mxu0 %v2528
        %v2672 = vpop.f32.mrb[0].mxu0
        %v2673 = vadd.f32 0.0, %v2672
        %v2674 = vpop.f32.mrb[0].mxu0
        %v2675 = vpop.f32.mrb[0].mxu0
        %v2676 = vadd.f32 0.0, %v2675
        %v2677 = vpop.f32.mrb[0].mxu0
        %2678 = vmatprep.mubr.bf16.mxu0 0
        %2679 = vmatmul.mubr.bf16.gmra.mrb[0].mxu0 %v2531
        %v2680 = vpop.f32.mrb[0].mxu0
        %v2681 = vadd.f32 0.0, %v2680
        %v2682 = vpop.f32.mrb[0].mxu0
        %v2683 = vpop.f32.mrb[0].mxu0
        %v2684 = vadd.f32 0.0, %v2683
        %v2685 = vpop.f32.mrb[0].mxu0
        %2686 = vmatprep.mubr.bf16.mxu0 0
        %2687 = vmatmul.mubr.bf16.gmra.mrb[0].mxu0 %v2534
        %v2688 = vpop.f32.mrb[0].mxu0
        %v2689 = vadd.f32 0.0, %v2688
        %v2690 = vpop.f32.mrb[0].mxu0
        %v2691 = vpop.f32.mrb[0].mxu0
        %v2692 = vadd.f32 0.0, %v2691
        %v2693 = vpop.f32.mrb[0].mxu0
        %2694 = vmatprep.mubr.bf16.mxu0 0
        %2695 = vmatmul.mubr.bf16.gmra.mrb[0].mxu0 %v2537
        %v2696 = vpop.f32.mrb[0].mxu0
        %v2697 = vadd.f32 0.0, %v2696
        %v2698 = vpop.f32.mrb[0].mxu0
        %v2699 = vpop.f32.mrb[0].mxu0
        %v2700 = vadd.f32 0.0, %v2699
        %v2701 = vpop.f32.mrb[0].mxu0
        %2702 = vdwg.mxu0
        %v2703 = vadd.f32 %v1977, %v2577
        %v2704 = vadd.f32 %v1978, %v2580
        %v2705 = vadd.f32 %v1979, %v2585
        %v2706 = vadd.f32 %v1980, %v2588
        %v2707 = vadd.f32 %v1981, %v2593
        %v2708 = vadd.f32 %v1982, %v2596
        %v2709 = vadd.f32 %v1983, %v2601
        %v2710 = vadd.f32 %v1984, %v2604
        %v2711 = vadd.f32 %v1985, %v2609
        %v2712 = vadd.f32 %v1986, %v2612
        %v2713 = vadd.f32 %v1987, %v2617
        %v2714 = vadd.f32 %v1988, %v2620
        %v2715 = vadd.f32 %v1989, %v2625
        %v2716 = vadd.f32 %v1990, %v2628
        %v2717 = vadd.f32 %v1991, %v2633
        %v2718 = vadd.f32 %v1992, %v2636
        %v2719 = vadd.f32 %v1993, %v2641
        %v2720 = vadd.f32 %v1994, %v2644
        %v2721 = vadd.f32 %v1995, %v2649
        %v2722 = vadd.f32 %v1996, %v2652
        %v2723 = vadd.f32 %v1997, %v2657
        %v2724 = vadd.f32 %v1998, %v2660
        %v2725 = vadd.f32 %v1999, %v2665
        %v2726 = vadd.f32 %v2000, %v2668
        %v2727 = vadd.f32 %v2001, %v2673
        %v2728 = vadd.f32 %v2002, %v2676
        %v2729 = vadd.f32 %v2003, %v2681
        %v2730 = vadd.f32 %v2004, %v2684
        %v2731 = vadd.f32 %v2005, %v2689
        %v2732 = vadd.f32 %v2006, %v2692
        %v2733 = vadd.f32 %v2007, %v2697
        %v2734 = vadd.f32 %v2008, %v2700
        %v2735 = vld [vmem:[%s1650] sm:$0xe]
        %v2736 = vld [vmem:[%s1650 + $0xc] sm:$0xe]
        %v2737 = vld [vmem:[%s1650 + $0x18] sm:$0xe]
        %v2738 = vld [vmem:[%s1650 + $0x24] sm:$0xe]
        %v2739 = vld [vmem:[%s1650 + $0x30] sm:$0xe]
        %v2740 = vld [vmem:[%s1650 + $0x3c] sm:$0xe]
        %v2741 = vld [vmem:[%s1650 + $0x48] sm:$0xe]
        %v2742 = vld [vmem:[%s1650 + $0x54] sm:$0xe]
        %v2743 = vld [vmem:[%s1650 + $0x60] sm:$0xe]
        %v2744 = vld [vmem:[%s1650 + $0x6c] sm:$0xe]
        %v2745 = vld [vmem:[%s1650 + $0x78] sm:$0xe]
        %v2746 = vld [vmem:[%s1650 + $0x84] sm:$0xe]
        %v2747 = vld [vmem:[%s1650 + $0x90] sm:$0xe]
        %v2748 = vld [vmem:[%s1650 + $0x9c] sm:$0xe]
        %v2749 = vld [vmem:[%s1650 + $0xa8] sm:$0xe]
        %v2750 = vld [vmem:[%s1650 + $0xb4] sm:$0xe]
        %v2799 = vrot.slane %v2735, 5
        %v2800 = vrot.slane %v2799, 4
        %v2801 = vrot.slane %v2010, 5
        %v2802 = vsel %vm1243, %v2800, %v2801
        %v2803 = vrot.slane %v2801, 4
        %v2804 = vrot.slane %v2011, 5
        %v2805 = vsel %vm1243, %v2803, %v2804
        %v2806 = vrot.slane %v2736, 5
        %v2807 = vrot.slane %v2806, 4
        %v2808 = vrot.slane %v2013, 5
        %v2809 = vsel %vm1243, %v2807, %v2808
        %v2810 = vrot.slane %v2808, 4
        %v2811 = vrot.slane %v2014, 5
        %v2812 = vsel %vm1243, %v2810, %v2811
        %v2813 = vrot.slane %v2737, 5
        %v2814 = vrot.slane %v2813, 4
        %v2815 = vrot.slane %v2016, 5
        %v2816 = vsel %vm1243, %v2814, %v2815
        %v2817 = vrot.slane %v2815, 4
        %v2818 = vrot.slane %v2017, 5
        %v2819 = vsel %vm1243, %v2817, %v2818
        %v2820 = vrot.slane %v2738, 5
        %v2821 = vrot.slane %v2820, 4
        %v2822 = vrot.slane %v2019, 5
        %v2823 = vsel %vm1243, %v2821, %v2822
        %v2824 = vrot.slane %v2822, 4
        %v2825 = vrot.slane %v2020, 5
        %v2826 = vsel %vm1243, %v2824, %v2825
        %v2827 = vrot.slane %v2739, 5
        %v2828 = vrot.slane %v2827, 4
        %v2829 = vrot.slane %v2022, 5
        %v2830 = vsel %vm1243, %v2828, %v2829
        %v2831 = vrot.slane %v2829, 4
        %v2832 = vrot.slane %v2023, 5
        %v2833 = vsel %vm1243, %v2831, %v2832
        %v2834 = vrot.slane %v2740, 5
        %v2835 = vrot.slane %v2834, 4
        %v2836 = vrot.slane %v2025, 5
        %v2837 = vsel %vm1243, %v2835, %v2836
        %v2838 = vrot.slane %v2836, 4
        %v2839 = vrot.slane %v2026, 5
        %v2840 = vsel %vm1243, %v2838, %v2839
        %v2841 = vrot.slane %v2741, 5
        %v2842 = vrot.slane %v2841, 4
        %v2843 = vrot.slane %v2028, 5
        %v2844 = vsel %vm1243, %v2842, %v2843
        %v2845 = vrot.slane %v2843, 4
        %v2846 = vrot.slane %v2029, 5
        %v2847 = vsel %vm1243, %v2845, %v2846
        %v2848 = vrot.slane %v2742, 5
        %v2849 = vrot.slane %v2848, 4
        %v2850 = vrot.slane %v2031, 5
        %v2851 = vsel %vm1243, %v2849, %v2850
        %v2852 = vrot.slane %v2850, 4
        %v2853 = vrot.slane %v2032, 5
        %v2854 = vsel %vm1243, %v2852, %v2853
        %v2855 = vrot.slane %v2743, 5
        %v2856 = vrot.slane %v2855, 4
        %v2857 = vrot.slane %v2034, 5
        %v2858 = vsel %vm1243, %v2856, %v2857
        %v2859 = vrot.slane %v2857, 4
        %v2860 = vrot.slane %v2035, 5
        %v2861 = vsel %vm1243, %v2859, %v2860
        %v2862 = vrot.slane %v2744, 5
        %v2863 = vrot.slane %v2862, 4
        %v2864 = vrot.slane %v2037, 5
        %v2865 = vsel %vm1243, %v2863, %v2864
        %v2866 = vrot.slane %v2864, 4
        %v2867 = vrot.slane %v2038, 5
        %v2868 = vsel %vm1243, %v2866, %v2867
        %v2869 = vrot.slane %v2745, 5
        %v2870 = vrot.slane %v2869, 4
        %v2871 = vrot.slane %v2040, 5
        %v2872 = vsel %vm1243, %v2870, %v2871
        %v2873 = vrot.slane %v2871, 4
        %v2874 = vrot.slane %v2041, 5
        %v2875 = vsel %vm1243, %v2873, %v2874
        %v2876 = vrot.slane %v2746, 5
        %v2877 = vrot.slane %v2876, 4
        %v2878 = vrot.slane %v2043, 5
        %v2879 = vsel %vm1243, %v2877, %v2878
        %v2880 = vrot.slane %v2878, 4
        %v2881 = vrot.slane %v2044, 5
        %v2882 = vsel %vm1243, %v2880, %v2881
        %v2883 = vrot.slane %v2747, 5
        %v2884 = vrot.slane %v2883, 4
        %v2885 = vrot.slane %v2046, 5
        %v2886 = vsel %vm1243, %v2884, %v2885
        %v2887 = vrot.slane %v2885, 4
        %v2888 = vrot.slane %v2047, 5
        %v2889 = vsel %vm1243, %v2887, %v2888
        %v2890 = vrot.slane %v2748, 5
        %v2891 = vrot.slane %v2890, 4
        %v2892 = vrot.slane %v2049, 5
        %v2893 = vsel %vm1243, %v2891, %v2892
        %v2894 = vrot.slane %v2892, 4
        %v2895 = vrot.slane %v2050, 5
        %v2896 = vsel %vm1243, %v2894, %v2895
        %v2897 = vrot.slane %v2749, 5
        %v2898 = vrot.slane %v2897, 4
        %v2899 = vrot.slane %v2052, 5
        %v2900 = vsel %vm1243, %v2898, %v2899
        %v2901 = vrot.slane %v2899, 4
        %v2902 = vrot.slane %v2053, 5
        %v2903 = vsel %vm1243, %v2901, %v2902
        %v2904 = vrot.slane %v2750, 5
        %v2905 = vrot.slane %v2904, 4
        %v2906 = vrot.slane %v2055, 5
        %v2907 = vsel %vm1243, %v2905, %v2906
        %v2908 = vrot.slane %v2906, 4
        %v2909 = vrot.slane %v2056, 5
        %v2910 = vsel %vm1243, %v2908, %v2909
        %s2911 = scalar_lea.vmem %s1, 10
        %v2912 = vld [vmem:[%s2911] sm:$0x3]
        %v2913 = vunpack.c.l.b16 %v2802
        %v2914 = vunpack.c.l.b16 %v2805
        %v2915 = vunpack.c.l.b16 %v2809
        %v2916 = vunpack.c.l.b16 %v2812
        %v2917 = vunpack.c.l.b16 %v2816
        %v2918 = vunpack.c.l.b16 %v2819
        %v2919 = vunpack.c.l.b16 %v2823
        %v2920 = vunpack.c.l.b16 %v2826
        %v2921 = vunpack.c.l.b16 %v2830
        %v2922 = vunpack.c.l.b16 %v2833
        %v2923 = vunpack.c.l.b16 %v2837
        %v2924 = vunpack.c.l.b16 %v2840
        %v2925 = vunpack.c.l.b16 %v2844
        %v2926 = vunpack.c.l.b16 %v2847
        %v2927 = vunpack.c.l.b16 %v2851
        %v2928 = vunpack.c.l.b16 %v2854
        %v2929 = vunpack.c.l.b16 %v2858
        %v2930 = vunpack.c.l.b16 %v2861
        %v2931 = vunpack.c.l.b16 %v2865
        %v2932 = vunpack.c.l.b16 %v2868
        %v2933 = vunpack.c.l.b16 %v2872
        %v2934 = vunpack.c.l.b16 %v2875
        %v2935 = vunpack.c.l.b16 %v2879
        %v2936 = vunpack.c.l.b16 %v2882
        %v2937 = vunpack.c.l.b16 %v2886
        %v2938 = vunpack.c.l.b16 %v2889
        %v2939 = vunpack.c.l.b16 %v2893
        %v2940 = vunpack.c.l.b16 %v2896
        %v2941 = vunpack.c.l.b16 %v2900
        %v2942 = vunpack.c.l.b16 %v2903
        %v2943 = vunpack.c.l.b16 %v2907
        %v2944 = vunpack.c.l.b16 %v2910
        %v2945 = vpack.c.b16 %v2914, %v2913
        %v2946 = vpack.c.b16 %v2916, %v2915
        %v2947 = vpack.c.b16 %v2918, %v2917
        %v2948 = vpack.c.b16 %v2920, %v2919
        %v2949 = vpack.c.b16 %v2922, %v2921
        %v2950 = vpack.c.b16 %v2924, %v2923
        %v2951 = vpack.c.b16 %v2926, %v2925
        %v2952 = vpack.c.b16 %v2928, %v2927
        %v2953 = vpack.c.b16 %v2930, %v2929
        %v2954 = vpack.c.b16 %v2932, %v2931
        %v2955 = vpack.c.b16 %v2934, %v2933
        %v2956 = vpack.c.b16 %v2936, %v2935
        %v2957 = vpack.c.b16 %v2938, %v2937
        %v2958 = vpack.c.b16 %v2940, %v2939
        %v2959 = vpack.c.b16 %v2942, %v2941
        %v2960 = vpack.c.b16 %v2944, %v2943
        %v2962 = vsel %vm687, %v2945, 0
        %v2965 = vsel %vm687, %v2946, 0
        %v2968 = vsel %vm687, %v2947, 0
        %v2971 = vsel %vm687, %v2948, 0
        %v2974 = vsel %vm687, %v2949, 0
        %v2977 = vsel %vm687, %v2950, 0
        %v2980 = vsel %vm687, %v2951, 0
        %v2983 = vsel %vm687, %v2952, 0
        %v2986 = vsel %vm687, %v2953, 0
        %v2989 = vsel %vm687, %v2954, 0
        %v2992 = vsel %vm687, %v2955, 0
        %v2995 = vsel %vm687, %v2956, 0
        %v2998 = vsel %vm687, %v2957, 0
        %v3001 = vsel %vm687, %v2958, 0
        %v3004 = vsel %vm687, %v2959, 0
        %v3007 = vsel %vm687, %v2960, 0
        %v3010 = vsel %vm736, %v2912, 0
        %3012 = vmatprep.subr.bf16.mxu0 0
        %3013 = vmatpush1.bf16.msra.mxu0 %v3010
        %3014 = vmatprep.subr.bf16.mxu0 0
        %3015 = vmatpush1.bf16.msra.mxu0 0
        %3016 = vmatprep.subr.bf16.mxu0 0
        %3017 = vmatpush1.bf16.msra.mxu0 0
        %3018 = vmatprep.subr.bf16.mxu0 0
        %3019 = vmatpush1.bf16.msra.mxu0 0
        %3020 = vmatprep.subr.bf16.mxu0 0
        %3021 = vmatpush1.bf16.msra.mxu0 0
        %3022 = vmatprep.subr.bf16.mxu0 0
        %3023 = vmatpush1.bf16.msra.mxu0 0
        %3024 = vmatprep.subr.bf16.mxu0 0
        %3025 = vmatpush1.bf16.msra.mxu0 0
        %3026 = vmatprep.subr.bf16.mxu0 0
        %3027 = vmatpush1.bf16.msra.mxu0 0
        %3028 = vmatprep.subr.bf16.mxu0 0
        %3029 = vmatpush1.bf16.msra.mxu0 0
        %3030 = vmatprep.subr.bf16.mxu0 0
        %3031 = vmatpush1.bf16.msra.mxu0 0
        %3032 = vmatprep.subr.bf16.mxu0 0
        %3033 = vmatpush1.bf16.msra.mxu0 0
        %3034 = vmatprep.subr.bf16.mxu0 0
        %3035 = vmatpush1.bf16.msra.mxu0 0
        %3036 = vmatprep.subr.bf16.mxu0 0
        %3037 = vmatpush1.bf16.msra.mxu0 0
        %3038 = vmatprep.subr.bf16.mxu0 0
        %3039 = vmatpush1.bf16.msra.mxu0 0
        %3040 = vmatprep.subr.bf16.mxu0 0
        %3041 = vmatpush1.bf16.msra.mxu0 0
        %3042 = vmatprep.subr.bf16.mxu0 0
        %3043 = vmatpush1.bf16.msra.mxu0 0
        %3044 = vmatprep.mubr.bf16.mxu0 0
        %3045 = vmatmul.mubr.bf16.gmra.mrb[0].mxu0 %v2962
        %v3046 = vpop.f32.mrb[0].mxu0
        %v3047 = vadd.f32 0.0, %v3046
        %v3048 = vpop.f32.mrb[0].mxu0
        %v3049 = vpop.f32.mrb[0].mxu0
        %v3050 = vadd.f32 0.0, %v3049
        %v3051 = vpop.f32.mrb[0].mxu0
        %3052 = vmatprep.mubr.bf16.mxu0 0
        %3053 = vmatmul.mubr.bf16.gmra.mrb[0].mxu0 %v2965
        %v3054 = vpop.f32.mrb[0].mxu0
        %v3055 = vadd.f32 0.0, %v3054
        %v3056 = vpop.f32.mrb[0].mxu0
        %v3057 = vpop.f32.mrb[0].mxu0
        %v3058 = vadd.f32 0.0, %v3057
        %v3059 = vpop.f32.mrb[0].mxu0
        %3060 = vmatprep.mubr.bf16.mxu0 0
        %3061 = vmatmul.mubr.bf16.gmra.mrb[0].mxu0 %v2968
        %v3062 = vpop.f32.mrb[0].mxu0
        %v3063 = vadd.f32 0.0, %v3062
        %v3064 = vpop.f32.mrb[0].mxu0
        %v3065 = vpop.f32.mrb[0].mxu0
        %v3066 = vadd.f32 0.0, %v3065
        %v3067 = vpop.f32.mrb[0].mxu0
        %3068 = vmatprep.mubr.bf16.mxu0 0
        %3069 = vmatmul.mubr.bf16.gmra.mrb[0].mxu0 %v2971
        %v3070 = vpop.f32.mrb[0].mxu0
        %v3071 = vadd.f32 0.0, %v3070
        %v3072 = vpop.f32.mrb[0].mxu0
        %v3073 = vpop.f32.mrb[0].mxu0
        %v3074 = vadd.f32 0.0, %v3073
        %v3075 = vpop.f32.mrb[0].mxu0
        %3076 = vmatprep.mubr.bf16.mxu0 0
        %3077 = vmatmul.mubr.bf16.gmra.mrb[0].mxu0 %v2974
        %v3078 = vpop.f32.mrb[0].mxu0
        %v3079 = vadd.f32 0.0, %v3078
        %v3080 = vpop.f32.mrb[0].mxu0
        %v3081 = vpop.f32.mrb[0].mxu0
        %v3082 = vadd.f32 0.0, %v3081
        %v3083 = vpop.f32.mrb[0].mxu0
        %3084 = vmatprep.mubr.bf16.mxu0 0
        %3085 = vmatmul.mubr.bf16.gmra.mrb[0].mxu0 %v2977
        %v3086 = vpop.f32.mrb[0].mxu0
        %v3087 = vadd.f32 0.0, %v3086
        %v3088 = vpop.f32.mrb[0].mxu0
        %v3089 = vpop.f32.mrb[0].mxu0
        %v3090 = vadd.f32 0.0, %v3089
        %v3091 = vpop.f32.mrb[0].mxu0
        %3092 = vmatprep.mubr.bf16.mxu0 0
        %3093 = vmatmul.mubr.bf16.gmra.mrb[0].mxu0 %v2980
        %v3094 = vpop.f32.mrb[0].mxu0
        %v3095 = vadd.f32 0.0, %v3094
        %v3096 = vpop.f32.mrb[0].mxu0
        %v3097 = vpop.f32.mrb[0].mxu0
        %v3098 = vadd.f32 0.0, %v3097
        %v3099 = vpop.f32.mrb[0].mxu0
        %3100 = vmatprep.mubr.bf16.mxu0 0
        %3101 = vmatmul.mubr.bf16.gmra.mrb[0].mxu0 %v2983
        %v3102 = vpop.f32.mrb[0].mxu0
        %v3103 = vadd.f32 0.0, %v3102
        %v3104 = vpop.f32.mrb[0].mxu0
        %v3105 = vpop.f32.mrb[0].mxu0
        %v3106 = vadd.f32 0.0, %v3105
        %v3107 = vpop.f32.mrb[0].mxu0
        %3108 = vmatprep.mubr.bf16.mxu0 0
        %3109 = vmatmul.mubr.bf16.gmra.mrb[0].mxu0 %v2986
        %v3110 = vpop.f32.mrb[0].mxu0
        %v3111 = vadd.f32 0.0, %v3110
        %v3112 = vpop.f32.mrb[0].mxu0
        %v3113 = vpop.f32.mrb[0].mxu0
        %v3114 = vadd.f32 0.0, %v3113
        %v3115 = vpop.f32.mrb[0].mxu0
        %3116 = vmatprep.mubr.bf16.mxu0 0
        %3117 = vmatmul.mubr.bf16.gmra.mrb[0].mxu0 %v2989
        %v3118 = vpop.f32.mrb[0].mxu0
        %v3119 = vadd.f32 0.0, %v3118
        %v3120 = vpop.f32.mrb[0].mxu0
        %v3121 = vpop.f32.mrb[0].mxu0
        %v3122 = vadd.f32 0.0, %v3121
        %v3123 = vpop.f32.mrb[0].mxu0
        %3124 = vmatprep.mubr.bf16.mxu0 0
        %3125 = vmatmul.mubr.bf16.gmra.mrb[0].mxu0 %v2992
        %v3126 = vpop.f32.mrb[0].mxu0
        %v3127 = vadd.f32 0.0, %v3126
        %v3128 = vpop.f32.mrb[0].mxu0
        %v3129 = vpop.f32.mrb[0].mxu0
        %v3130 = vadd.f32 0.0, %v3129
        %v3131 = vpop.f32.mrb[0].mxu0
        %3132 = vmatprep.mubr.bf16.mxu0 0
        %3133 = vmatmul.mubr.bf16.gmra.mrb[0].mxu0 %v2995
        %v3134 = vpop.f32.mrb[0].mxu0
        %v3135 = vadd.f32 0.0, %v3134
        %v3136 = vpop.f32.mrb[0].mxu0
        %v3137 = vpop.f32.mrb[0].mxu0
        %v3138 = vadd.f32 0.0, %v3137
        %v3139 = vpop.f32.mrb[0].mxu0
        %3140 = vmatprep.mubr.bf16.mxu0 0
        %3141 = vmatmul.mubr.bf16.gmra.mrb[0].mxu0 %v2998
        %v3142 = vpop.f32.mrb[0].mxu0
        %v3143 = vadd.f32 0.0, %v3142
        %v3144 = vpop.f32.mrb[0].mxu0
        %v3145 = vpop.f32.mrb[0].mxu0
        %v3146 = vadd.f32 0.0, %v3145
        %v3147 = vpop.f32.mrb[0].mxu0
        %3148 = vmatprep.mubr.bf16.mxu0 0
        %3149 = vmatmul.mubr.bf16.gmra.mrb[0].mxu0 %v3001
        %v3150 = vpop.f32.mrb[0].mxu0
        %v3151 = vadd.f32 0.0, %v3150
        %v3152 = vpop.f32.mrb[0].mxu0
        %v3153 = vpop.f32.mrb[0].mxu0
        %v3154 = vadd.f32 0.0, %v3153
        %v3155 = vpop.f32.mrb[0].mxu0
        %3156 = vmatprep.mubr.bf16.mxu0 0
        %3157 = vmatmul.mubr.bf16.gmra.mrb[0].mxu0 %v3004
        %v3158 = vpop.f32.mrb[0].mxu0
        %v3159 = vadd.f32 0.0, %v3158
        %v3160 = vpop.f32.mrb[0].mxu0
        %v3161 = vpop.f32.mrb[0].mxu0
        %v3162 = vadd.f32 0.0, %v3161
        %v3163 = vpop.f32.mrb[0].mxu0
        %3164 = vmatprep.mubr.bf16.mxu0 0
        %3165 = vmatmul.mubr.bf16.gmra.mrb[0].mxu0 %v3007
        %v3166 = vpop.f32.mrb[0].mxu0
        %v3167 = vadd.f32 0.0, %v3166
        %v3168 = vpop.f32.mrb[0].mxu0
        %v3169 = vpop.f32.mrb[0].mxu0
        %v3170 = vadd.f32 0.0, %v3169
        %v3171 = vpop.f32.mrb[0].mxu0
        %3172 = vdwg.mxu0
        %v3173 = vadd.f32 %v2703, %v3047
        %v3174 = vadd.f32 %v2704, %v3050
        %v3175 = vadd.f32 %v2705, %v3055
        %v3176 = vadd.f32 %v2706, %v3058
        %v3177 = vadd.f32 %v2707, %v3063
        %v3178 = vadd.f32 %v2708, %v3066
        %v3179 = vadd.f32 %v2709, %v3071
        %v3180 = vadd.f32 %v2710, %v3074
        %v3181 = vadd.f32 %v2711, %v3079
        %v3182 = vadd.f32 %v2712, %v3082
        %v3183 = vadd.f32 %v2713, %v3087
        %v3184 = vadd.f32 %v2714, %v3090
        %v3185 = vadd.f32 %v2715, %v3095
        %v3186 = vadd.f32 %v2716, %v3098
        %v3187 = vadd.f32 %v2717, %v3103
        %v3188 = vadd.f32 %v2718, %v3106
        %v3189 = vadd.f32 %v2719, %v3111
        %v3190 = vadd.f32 %v2720, %v3114
        %v3191 = vadd.f32 %v2721, %v3119
        %v3192 = vadd.f32 %v2722, %v3122
        %v3193 = vadd.f32 %v2723, %v3127
        %v3194 = vadd.f32 %v2724, %v3130
        %v3195 = vadd.f32 %v2725, %v3135
        %v3196 = vadd.f32 %v2726, %v3138
        %v3197 = vadd.f32 %v2727, %v3143
        %v3198 = vadd.f32 %v2728, %v3146
        %v3199 = vadd.f32 %v2729, %v3151
        %v3200 = vadd.f32 %v2730, %v3154
        %v3201 = vadd.f32 %v2731, %v3159
        %v3202 = vadd.f32 %v2732, %v3162
        %v3203 = vadd.f32 %v2733, %v3167
        %v3204 = vadd.f32 %v2734, %v3170
        %s3205 = scalar_lea.vmem %s191, 24
        %v3206 = vld [vmem:[%s3205] sm:$0xf]
        %v3207 = vld [vmem:[%s3205 + $0x4] sm:$0xf]
        %v3208 = vld [vmem:[%s3205 + $0xc] sm:$0xf]
        %v3209 = vld [vmem:[%s3205 + $0x10] sm:$0xf]
        %v3210 = vld [vmem:[%s3205 + $0x18] sm:$0xf]
        %v3211 = vld [vmem:[%s3205 + $0x1c] sm:$0xf]
        %v3212 = vld [vmem:[%s3205 + $0x24] sm:$0xf]
        %v3213 = vld [vmem:[%s3205 + $0x28] sm:$0xf]
        %v3214 = vld [vmem:[%s3205 + $0x30] sm:$0xf]
        %v3215 = vld [vmem:[%s3205 + $0x34] sm:$0xf]
        %v3216 = vld [vmem:[%s3205 + $0x3c] sm:$0xf]
        %v3217 = vld [vmem:[%s3205 + $0x40] sm:$0xf]
        %v3218 = vld [vmem:[%s3205 + $0x48] sm:$0xf]
        %v3219 = vld [vmem:[%s3205 + $0x4c] sm:$0xf]
        %v3220 = vld [vmem:[%s3205 + $0x54] sm:$0xf]
        %v3221 = vld [vmem:[%s3205 + $0x58] sm:$0xf]
        %v3222 = vld [vmem:[%s3205 + $0x60] sm:$0xf]
        %v3223 = vld [vmem:[%s3205 + $0x64] sm:$0xf]
        %v3224 = vld [vmem:[%s3205 + $0x6c] sm:$0xf]
        %v3225 = vld [vmem:[%s3205 + $0x70] sm:$0xf]
        %v3226 = vld [vmem:[%s3205 + $0x78] sm:$0xf]
        %v3227 = vld [vmem:[%s3205 + $0x7c] sm:$0xf]
        %v3228 = vld [vmem:[%s3205 + $0x84] sm:$0xf]
        %v3229 = vld [vmem:[%s3205 + $0x88] sm:$0xf]
        %v3230 = vld [vmem:[%s3205 + $0x90] sm:$0xf]
        %v3231 = vld [vmem:[%s3205 + $0x94] sm:$0xf]
        %v3232 = vld [vmem:[%s3205 + $0x9c] sm:$0xf]
        %v3233 = vld [vmem:[%s3205 + $0xa0] sm:$0xf]
        %v3234 = vld [vmem:[%s3205 + $0xa8] sm:$0xf]
        %v3235 = vld [vmem:[%s3205 + $0xac] sm:$0xf]
        %v3236 = vld [vmem:[%s3205 + $0xb4] sm:$0xf]
        %v3237 = vld [vmem:[%s3205 + $0xb8] sm:$0xf]
        %s3238 = scalar_lea.vmem %s1, 12
        %v3239 = vld [vmem:[%s3238] sm:$0x3]
        %v3272 = vunpack.c.l.b16 %v3206
        %v3273 = vunpack.c.l.b16 %v3207
        %v3274 = vunpack.c.l.b16 %v3208
        %v3275 = vunpack.c.l.b16 %v3209
        %v3276 = vunpack.c.l.b16 %v3210
        %v3277 = vunpack.c.l.b16 %v3211
        %v3278 = vunpack.c.l.b16 %v3212
        %v3279 = vunpack.c.l.b16 %v3213
        %v3280 = vunpack.c.l.b16 %v3214
        %v3281 = vunpack.c.l.b16 %v3215
        %v3282 = vunpack.c.l.b16 %v3216
        %v3283 = vunpack.c.l.b16 %v3217
        %v3284 = vunpack.c.l.b16 %v3218
        %v3285 = vunpack.c.l.b16 %v3219
        %v3286 = vunpack.c.l.b16 %v3220
        %v3287 = vunpack.c.l.b16 %v3221
        %v3288 = vunpack.c.l.b16 %v3222
        %v3289 = vunpack.c.l.b16 %v3223
        %v3290 = vunpack.c.l.b16 %v3224
        %v3291 = vunpack.c.l.b16 %v3225
        %v3292 = vunpack.c.l.b16 %v3226
        %v3293 = vunpack.c.l.b16 %v3227
        %v3294 = vunpack.c.l.b16 %v3228
        %v3295 = vunpack.c.l.b16 %v3229
        %v3296 = vunpack.c.l.b16 %v3230
        %v3297 = vunpack.c.l.b16 %v3231
        %v3298 = vunpack.c.l.b16 %v3232
        %v3299 = vunpack.c.l.b16 %v3233
        %v3300 = vunpack.c.l.b16 %v3234
        %v3301 = vunpack.c.l.b16 %v3235
        %v3302 = vunpack.c.l.b16 %v3236
        %v3303 = vunpack.c.l.b16 %v3237
        %v3304 = vpack.c.b16 %v3273, %v3272
        %v3305 = vpack.c.b16 %v3275, %v3274
        %v3306 = vpack.c.b16 %v3277, %v3276
        %v3307 = vpack.c.b16 %v3279, %v3278
        %v3308 = vpack.c.b16 %v3281, %v3280
        %v3309 = vpack.c.b16 %v3283, %v3282
        %v3310 = vpack.c.b16 %v3285, %v3284
        %v3311 = vpack.c.b16 %v3287, %v3286
        %v3312 = vpack.c.b16 %v3289, %v3288
        %v3313 = vpack.c.b16 %v3291, %v3290
        %v3314 = vpack.c.b16 %v3293, %v3292
        %v3315 = vpack.c.b16 %v3295, %v3294
        %v3316 = vpack.c.b16 %v3297, %v3296
        %v3317 = vpack.c.b16 %v3299, %v3298
        %v3318 = vpack.c.b16 %v3301, %v3300
        %v3319 = vpack.c.b16 %v3303, %v3302
        %v3321 = vsel %vm687, %v3304, 0
        %v3324 = vsel %vm687, %v3305, 0
        %v3327 = vsel %vm687, %v3306, 0
        %v3330 = vsel %vm687, %v3307, 0
        %v3333 = vsel %vm687, %v3308, 0
        %v3336 = vsel %vm687, %v3309, 0
        %v3339 = vsel %vm687, %v3310, 0
        %v3342 = vsel %vm687, %v3311, 0
        %v3345 = vsel %vm687, %v3312, 0
        %v3348 = vsel %vm687, %v3313, 0
        %v3351 = vsel %vm687, %v3314, 0
        %v3354 = vsel %vm687, %v3315, 0
        %v3357 = vsel %vm687, %v3316, 0
        %v3360 = vsel %vm687, %v3317, 0
        %v3363 = vsel %vm687, %v3318, 0
        %v3366 = vsel %vm687, %v3319, 0
        %v3369 = vsel %vm736, %v3239, 0
        %3371 = vmatprep.subr.bf16.mxu0 0
        %3372 = vmatpush1.bf16.msra.mxu0 %v3369
        %3373 = vmatprep.subr.bf16.mxu0 0
        %3374 = vmatpush1.bf16.msra.mxu0 0
        %3375 = vmatprep.subr.bf16.mxu0 0
        %3376 = vmatpush1.bf16.msra.mxu0 0
        %3377 = vmatprep.subr.bf16.mxu0 0
        %3378 = vmatpush1.bf16.msra.mxu0 0
        %3379 = vmatprep.subr.bf16.mxu0 0
        %3380 = vmatpush1.bf16.msra.mxu0 0
        %3381 = vmatprep.subr.bf16.mxu0 0
        %3382 = vmatpush1.bf16.msra.mxu0 0
        %3383 = vmatprep.subr.bf16.mxu0 0
        %3384 = vmatpush1.bf16.msra.mxu0 0
        %3385 = vmatprep.subr.bf16.mxu0 0
        %3386 = vmatpush1.bf16.msra.mxu0 0
        %3387 = vmatprep.subr.bf16.mxu0 0
        %3388 = vmatpush1.bf16.msra.mxu0 0
        %3389 = vmatprep.subr.bf16.mxu0 0
        %3390 = vmatpush1.bf16.msra.mxu0 0
        %3391 = vmatprep.subr.bf16.mxu0 0
        %3392 = vmatpush1.bf16.msra.mxu0 0
        %3393 = vmatprep.subr.bf16.mxu0 0
        %3394 = vmatpush1.bf16.msra.mxu0 0
        %3395 = vmatprep.subr.bf16.mxu0 0
        %3396 = vmatpush1.bf16.msra.mxu0 0
        %3397 = vmatprep.subr.bf16.mxu0 0
        %3398 = vmatpush1.bf16.msra.mxu0 0
        %3399 = vmatprep.subr.bf16.mxu0 0
        %3400 = vmatpush1.bf16.msra.mxu0 0
        %3401 = vmatprep.subr.bf16.mxu0 0
        %3402 = vmatpush1.bf16.msra.mxu0 0
        %3403 = vmatprep.mubr.bf16.mxu0 0
        %3404 = vmatmul.mubr.bf16.gmra.mrb[0].mxu0 %v3321
        %v3405 = vpop.f32.mrb[0].mxu0
        %v3406 = vadd.f32 0.0, %v3405
        %v3407 = vpop.f32.mrb[0].mxu0
        %v3408 = vpop.f32.mrb[0].mxu0
        %v3409 = vadd.f32 0.0, %v3408
        %v3410 = vpop.f32.mrb[0].mxu0
        %3411 = vmatprep.mubr.bf16.mxu0 0
        %3412 = vmatmul.mubr.bf16.gmra.mrb[0].mxu0 %v3324
        %v3413 = vpop.f32.mrb[0].mxu0
        %v3414 = vadd.f32 0.0, %v3413
        %v3415 = vpop.f32.mrb[0].mxu0
        %v3416 = vpop.f32.mrb[0].mxu0
        %v3417 = vadd.f32 0.0, %v3416
        %v3418 = vpop.f32.mrb[0].mxu0
        %3419 = vmatprep.mubr.bf16.mxu0 0
        %3420 = vmatmul.mubr.bf16.gmra.mrb[0].mxu0 %v3327
        %v3421 = vpop.f32.mrb[0].mxu0
        %v3422 = vadd.f32 0.0, %v3421
        %v3423 = vpop.f32.mrb[0].mxu0
        %v3424 = vpop.f32.mrb[0].mxu0
        %v3425 = vadd.f32 0.0, %v3424
        %v3426 = vpop.f32.mrb[0].mxu0
        %3427 = vmatprep.mubr.bf16.mxu0 0
        %3428 = vmatmul.mubr.bf16.gmra.mrb[0].mxu0 %v3330
        %v3429 = vpop.f32.mrb[0].mxu0
        %v3430 = vadd.f32 0.0, %v3429
        %v3431 = vpop.f32.mrb[0].mxu0
        %v3432 = vpop.f32.mrb[0].mxu0
        %v3433 = vadd.f32 0.0, %v3432
        %v3434 = vpop.f32.mrb[0].mxu0
        %3435 = vmatprep.mubr.bf16.mxu0 0
        %3436 = vmatmul.mubr.bf16.gmra.mrb[0].mxu0 %v3333
        %v3437 = vpop.f32.mrb[0].mxu0
        %v3438 = vadd.f32 0.0, %v3437
        %v3439 = vpop.f32.mrb[0].mxu0
        %v3440 = vpop.f32.mrb[0].mxu0
        %v3441 = vadd.f32 0.0, %v3440
        %v3442 = vpop.f32.mrb[0].mxu0
        %3443 = vmatprep.mubr.bf16.mxu0 0
        %3444 = vmatmul.mubr.bf16.gmra.mrb[0].mxu0 %v3336
        %v3445 = vpop.f32.mrb[0].mxu0
        %v3446 = vadd.f32 0.0, %v3445
        %v3447 = vpop.f32.mrb[0].mxu0
        %v3448 = vpop.f32.mrb[0].mxu0
        %v3449 = vadd.f32 0.0, %v3448
        %v3450 = vpop.f32.mrb[0].mxu0
        %3451 = vmatprep.mubr.bf16.mxu0 0
        %3452 = vmatmul.mubr.bf16.gmra.mrb[0].mxu0 %v3339
        %v3453 = vpop.f32.mrb[0].mxu0
        %v3454 = vadd.f32 0.0, %v3453
        %v3455 = vpop.f32.mrb[0].mxu0
        %v3456 = vpop.f32.mrb[0].mxu0
        %v3457 = vadd.f32 0.0, %v3456
        %v3458 = vpop.f32.mrb[0].mxu0
        %3459 = vmatprep.mubr.bf16.mxu0 0
        %3460 = vmatmul.mubr.bf16.gmra.mrb[0].mxu0 %v3342
        %v3461 = vpop.f32.mrb[0].mxu0
        %v3462 = vadd.f32 0.0, %v3461
        %v3463 = vpop.f32.mrb[0].mxu0
        %v3464 = vpop.f32.mrb[0].mxu0
        %v3465 = vadd.f32 0.0, %v3464
        %v3466 = vpop.f32.mrb[0].mxu0
        %3467 = vmatprep.mubr.bf16.mxu0 0
        %3468 = vmatmul.mubr.bf16.gmra.mrb[0].mxu0 %v3345
        %v3469 = vpop.f32.mrb[0].mxu0
        %v3470 = vadd.f32 0.0, %v3469
        %v3471 = vpop.f32.mrb[0].mxu0
        %v3472 = vpop.f32.mrb[0].mxu0
        %v3473 = vadd.f32 0.0, %v3472
        %v3474 = vpop.f32.mrb[0].mxu0
        %3475 = vmatprep.mubr.bf16.mxu0 0
        %3476 = vmatmul.mubr.bf16.gmra.mrb[0].mxu0 %v3348
        %v3477 = vpop.f32.mrb[0].mxu0
        %v3478 = vadd.f32 0.0, %v3477
        %v3479 = vpop.f32.mrb[0].mxu0
        %v3480 = vpop.f32.mrb[0].mxu0
        %v3481 = vadd.f32 0.0, %v3480
        %v3482 = vpop.f32.mrb[0].mxu0
        %3483 = vmatprep.mubr.bf16.mxu0 0
        %3484 = vmatmul.mubr.bf16.gmra.mrb[0].mxu0 %v3351
        %v3485 = vpop.f32.mrb[0].mxu0
        %v3486 = vadd.f32 0.0, %v3485
        %v3487 = vpop.f32.mrb[0].mxu0
        %v3488 = vpop.f32.mrb[0].mxu0
        %v3489 = vadd.f32 0.0, %v3488
        %v3490 = vpop.f32.mrb[0].mxu0
        %3491 = vmatprep.mubr.bf16.mxu0 0
        %3492 = vmatmul.mubr.bf16.gmra.mrb[0].mxu0 %v3354
        %v3493 = vpop.f32.mrb[0].mxu0
        %v3494 = vadd.f32 0.0, %v3493
        %v3495 = vpop.f32.mrb[0].mxu0
        %v3496 = vpop.f32.mrb[0].mxu0
        %v3497 = vadd.f32 0.0, %v3496
        %v3498 = vpop.f32.mrb[0].mxu0
        %3499 = vmatprep.mubr.bf16.mxu0 0
        %3500 = vmatmul.mubr.bf16.gmra.mrb[0].mxu0 %v3357
        %v3501 = vpop.f32.mrb[0].mxu0
        %v3502 = vadd.f32 0.0, %v3501
        %v3503 = vpop.f32.mrb[0].mxu0
        %v3504 = vpop.f32.mrb[0].mxu0
        %v3505 = vadd.f32 0.0, %v3504
        %v3506 = vpop.f32.mrb[0].mxu0
        %3507 = vmatprep.mubr.bf16.mxu0 0
        %3508 = vmatmul.mubr.bf16.gmra.mrb[0].mxu0 %v3360
        %v3509 = vpop.f32.mrb[0].mxu0
        %v3510 = vadd.f32 0.0, %v3509
        %v3511 = vpop.f32.mrb[0].mxu0
        %v3512 = vpop.f32.mrb[0].mxu0
        %v3513 = vadd.f32 0.0, %v3512
        %v3514 = vpop.f32.mrb[0].mxu0
        %3515 = vmatprep.mubr.bf16.mxu0 0
        %3516 = vmatmul.mubr.bf16.gmra.mrb[0].mxu0 %v3363
        %v3517 = vpop.f32.mrb[0].mxu0
        %v3518 = vadd.f32 0.0, %v3517
        %v3519 = vpop.f32.mrb[0].mxu0
        %v3520 = vpop.f32.mrb[0].mxu0
        %v3521 = vadd.f32 0.0, %v3520
        %v3522 = vpop.f32.mrb[0].mxu0
        %3523 = vmatprep.mubr.bf16.mxu0 0
        %3524 = vmatmul.mubr.bf16.gmra.mrb[0].mxu0 %v3366
        %v3525 = vpop.f32.mrb[0].mxu0
        %v3526 = vadd.f32 0.0, %v3525
        %v3527 = vpop.f32.mrb[0].mxu0
        %v3528 = vpop.f32.mrb[0].mxu0
        %v3529 = vadd.f32 0.0, %v3528
        %v3530 = vpop.f32.mrb[0].mxu0
        %3531 = vdwg.mxu0
        %v3532 = vadd.f32 %v3173, %v3406
        %v3533 = vadd.f32 %v3174, %v3409
        %v3534 = vadd.f32 %v3175, %v3414
        %v3535 = vadd.f32 %v3176, %v3417
        %v3536 = vadd.f32 %v3177, %v3422
        %v3537 = vadd.f32 %v3178, %v3425
        %v3538 = vadd.f32 %v3179, %v3430
        %v3539 = vadd.f32 %v3180, %v3433
        %v3540 = vadd.f32 %v3181, %v3438
        %v3541 = vadd.f32 %v3182, %v3441
        %v3542 = vadd.f32 %v3183, %v3446
        %v3543 = vadd.f32 %v3184, %v3449
        %v3544 = vadd.f32 %v3185, %v3454
        %v3545 = vadd.f32 %v3186, %v3457
        %v3546 = vadd.f32 %v3187, %v3462
        %v3547 = vadd.f32 %v3188, %v3465
        %v3548 = vadd.f32 %v3189, %v3470
        %v3549 = vadd.f32 %v3190, %v3473
        %v3550 = vadd.f32 %v3191, %v3478
        %v3551 = vadd.f32 %v3192, %v3481
        %v3552 = vadd.f32 %v3193, %v3486
        %v3553 = vadd.f32 %v3194, %v3489
        %v3554 = vadd.f32 %v3195, %v3494
        %v3555 = vadd.f32 %v3196, %v3497
        %v3556 = vadd.f32 %v3197, %v3502
        %v3557 = vadd.f32 %v3198, %v3505
        %v3558 = vadd.f32 %v3199, %v3510
        %v3559 = vadd.f32 %v3200, %v3513
        %v3560 = vadd.f32 %v3201, %v3518
        %v3561 = vadd.f32 %v3202, %v3521
        %v3562 = vadd.f32 %v3203, %v3526
        %v3563 = vadd.f32 %v3204, %v3529
        %v3564 = vld [vmem:[%s3205] sm:$0xf]
        %v3565 = vld [vmem:[%s3205 + $0x4] sm:$0xf]
        %v3566 = vld [vmem:[%s3205 + $0x8] sm:$0x1]
        %v3567 = vld [vmem:[%s3205 + $0xc] sm:$0xf]
        %v3568 = vld [vmem:[%s3205 + $0x10] sm:$0xf]
        %v3569 = vld [vmem:[%s3205 + $0x14] sm:$0x1]
        %v3570 = vld [vmem:[%s3205 + $0x18] sm:$0xf]
        %v3571 = vld [vmem:[%s3205 + $0x1c] sm:$0xf]
        %v3572 = vld [vmem:[%s3205 + $0x20] sm:$0x1]
        %v3573 = vld [vmem:[%s3205 + $0x24] sm:$0xf]
        %v3574 = vld [vmem:[%s3205 + $0x28] sm:$0xf]
        %v3575 = vld [vmem:[%s3205 + $0x2c] sm:$0x1]
        %v3576 = vld [vmem:[%s3205 + $0x30] sm:$0xf]
        %v3577 = vld [vmem:[%s3205 + $0x34] sm:$0xf]
        %v3578 = vld [vmem:[%s3205 + $0x38] sm:$0x1]
        %v3579 = vld [vmem:[%s3205 + $0x3c] sm:$0xf]
        %v3580 = vld [vmem:[%s3205 + $0x40] sm:$0xf]
        %v3581 = vld [vmem:[%s3205 + $0x44] sm:$0x1]
        %v3582 = vld [vmem:[%s3205 + $0x48] sm:$0xf]
        %v3583 = vld [vmem:[%s3205 + $0x4c] sm:$0xf]
        %v3584 = vld [vmem:[%s3205 + $0x50] sm:$0x1]
        %v3585 = vld [vmem:[%s3205 + $0x54] sm:$0xf]
        %v3586 = vld [vmem:[%s3205 + $0x58] sm:$0xf]
        %v3587 = vld [vmem:[%s3205 + $0x5c] sm:$0x1]
        %v3588 = vld [vmem:[%s3205 + $0x60] sm:$0xf]
        %v3589 = vld [vmem:[%s3205 + $0x64] sm:$0xf]
        %v3590 = vld [vmem:[%s3205 + $0x68] sm:$0x1]
        %v3591 = vld [vmem:[%s3205 + $0x6c] sm:$0xf]
        %v3592 = vld [vmem:[%s3205 + $0x70] sm:$0xf]
        %v3593 = vld [vmem:[%s3205 + $0x74] sm:$0x1]
        %v3594 = vld [vmem:[%s3205 + $0x78] sm:$0xf]
        %v3595 = vld [vmem:[%s3205 + $0x7c] sm:$0xf]
        %v3596 = vld [vmem:[%s3205 + $0x80] sm:$0x1]
        %v3597 = vld [vmem:[%s3205 + $0x84] sm:$0xf]
        %v3598 = vld [vmem:[%s3205 + $0x88] sm:$0xf]
        %v3599 = vld [vmem:[%s3205 + $0x8c] sm:$0x1]
        %v3600 = vld [vmem:[%s3205 + $0x90] sm:$0xf]
        %v3601 = vld [vmem:[%s3205 + $0x94] sm:$0xf]
        %v3602 = vld [vmem:[%s3205 + $0x98] sm:$0x1]
        %v3603 = vld [vmem:[%s3205 + $0x9c] sm:$0xf]
        %v3604 = vld [vmem:[%s3205 + $0xa0] sm:$0xf]
        %v3605 = vld [vmem:[%s3205 + $0xa4] sm:$0x1]
        %v3606 = vld [vmem:[%s3205 + $0xa8] sm:$0xf]
        %v3607 = vld [vmem:[%s3205 + $0xac] sm:$0xf]
        %v3608 = vld [vmem:[%s3205 + $0xb0] sm:$0x1]
        %v3609 = vld [vmem:[%s3205 + $0xb4] sm:$0xf]
        %v3610 = vld [vmem:[%s3205 + $0xb8] sm:$0xf]
        %v3611 = vld [vmem:[%s3205 + $0xbc] sm:$0x1]
        %v3613 = vshrl.u32 %v3564, 16
        %v3615 = vrot.slane %v3613, 4
        %v3616 = vshll.u32 %v3564, 16
        %v3618 = vrot.slane %v3616, 5
        %v3619 = vor.u32 %v3615, %v3618
        %v3620 = vrot.slane %v3619, 4
        %v3622 = vshll.u32 %v3565, 16
        %v3624 = vrot.slane %v3622, 5
        %v3625 = vsel %vm252, %v3620, %v3624
        %v3626 = vshrl.u32 %v3565, 16
        %v3628 = vrot.slane %v3626, 4
        %v3629 = vor.u32 %v3628, %v3624
        %v3630 = vrot.slane %v3629, 4
        %v3632 = vshll.u32 %v3566, 16
        %v3634 = vrot.slane %v3632, 5
        %v3635 = vsel %vm252, %v3630, %v3634
        %v3637 = vshrl.u32 %v3567, 16
        %v3639 = vrot.slane %v3637, 4
        %v3640 = vshll.u32 %v3567, 16
        %v3642 = vrot.slane %v3640, 5
        %v3643 = vor.u32 %v3639, %v3642
        %v3644 = vrot.slane %v3643, 4
        %v3646 = vshll.u32 %v3568, 16
        %v3648 = vrot.slane %v3646, 5
        %v3649 = vsel %vm252, %v3644, %v3648
        %v3650 = vshrl.u32 %v3568, 16
        %v3652 = vrot.slane %v3650, 4
        %v3653 = vor.u32 %v3652, %v3648
        %v3654 = vrot.slane %v3653, 4
        %v3656 = vshll.u32 %v3569, 16
        %v3658 = vrot.slane %v3656, 5
        %v3659 = vsel %vm252, %v3654, %v3658
        %v3661 = vshrl.u32 %v3570, 16
        %v3663 = vrot.slane %v3661, 4
        %v3664 = vshll.u32 %v3570, 16
        %v3666 = vrot.slane %v3664, 5
        %v3667 = vor.u32 %v3663, %v3666
        %v3668 = vrot.slane %v3667, 4
        %v3670 = vshll.u32 %v3571, 16
        %v3672 = vrot.slane %v3670, 5
        %v3673 = vsel %vm252, %v3668, %v3672
        %v3674 = vshrl.u32 %v3571, 16
        %v3676 = vrot.slane %v3674, 4
        %v3677 = vor.u32 %v3676, %v3672
        %v3678 = vrot.slane %v3677, 4
        %v3680 = vshll.u32 %v3572, 16
        %v3682 = vrot.slane %v3680, 5
        %v3683 = vsel %vm252, %v3678, %v3682
        %v3685 = vshrl.u32 %v3573, 16
        %v3687 = vrot.slane %v3685, 4
        %v3688 = vshll.u32 %v3573, 16
        %v3690 = vrot.slane %v3688, 5
        %v3691 = vor.u32 %v3687, %v3690
        %v3692 = vrot.slane %v3691, 4
        %v3694 = vshll.u32 %v3574, 16
        %v3696 = vrot.slane %v3694, 5
        %v3697 = vsel %vm252, %v3692, %v3696
        %v3698 = vshrl.u32 %v3574, 16
        %v3700 = vrot.slane %v3698, 4
        %v3701 = vor.u32 %v3700, %v3696
        %v3702 = vrot.slane %v3701, 4
        %v3704 = vshll.u32 %v3575, 16
        %v3706 = vrot.slane %v3704, 5
        %v3707 = vsel %vm252, %v3702, %v3706
        %v3709 = vshrl.u32 %v3576, 16
        %v3711 = vrot.slane %v3709, 4
        %v3712 = vshll.u32 %v3576, 16
        %v3714 = vrot.slane %v3712, 5
        %v3715 = vor.u32 %v3711, %v3714
        %v3716 = vrot.slane %v3715, 4
        %v3718 = vshll.u32 %v3577, 16
        %v3720 = vrot.slane %v3718, 5
        %v3721 = vsel %vm252, %v3716, %v3720
        %v3722 = vshrl.u32 %v3577, 16
        %v3724 = vrot.slane %v3722, 4
        %v3725 = vor.u32 %v3724, %v3720
        %v3726 = vrot.slane %v3725, 4
        %v3728 = vshll.u32 %v3578, 16
        %v3730 = vrot.slane %v3728, 5
        %v3731 = vsel %vm252, %v3726, %v3730
        %v3733 = vshrl.u32 %v3579, 16
        %v3735 = vrot.slane %v3733, 4
        %v3736 = vshll.u32 %v3579, 16
        %v3738 = vrot.slane %v3736, 5
        %v3739 = vor.u32 %v3735, %v3738
        %v3740 = vrot.slane %v3739, 4
        %v3742 = vshll.u32 %v3580, 16
        %v3744 = vrot.slane %v3742, 5
        %v3745 = vsel %vm252, %v3740, %v3744
        %v3746 = vshrl.u32 %v3580, 16
        %v3748 = vrot.slane %v3746, 4
        %v3749 = vor.u32 %v3748, %v3744
        %v3750 = vrot.slane %v3749, 4
        %v3752 = vshll.u32 %v3581, 16
        %v3754 = vrot.slane %v3752, 5
        %v3755 = vsel %vm252, %v3750, %v3754
        %v3757 = vshrl.u32 %v3582, 16
        %v3759 = vrot.slane %v3757, 4
        %v3760 = vshll.u32 %v3582, 16
        %v3762 = vrot.slane %v3760, 5
        %v3763 = vor.u32 %v3759, %v3762
        %v3764 = vrot.slane %v3763, 4
        %v3766 = vshll.u32 %v3583, 16
        %v3768 = vrot.slane %v3766, 5
        %v3769 = vsel %vm252, %v3764, %v3768
        %v3770 = vshrl.u32 %v3583, 16
        %v3772 = vrot.slane %v3770, 4
        %v3773 = vor.u32 %v3772, %v3768
        %v3774 = vrot.slane %v3773, 4
        %v3776 = vshll.u32 %v3584, 16
        %v3778 = vrot.slane %v3776, 5
        %v3779 = vsel %vm252, %v3774, %v3778
        %v3781 = vshrl.u32 %v3585, 16
        %v3783 = vrot.slane %v3781, 4
        %v3784 = vshll.u32 %v3585, 16
        %v3786 = vrot.slane %v3784, 5
        %v3787 = vor.u32 %v3783, %v3786
        %v3788 = vrot.slane %v3787, 4
        %v3790 = vshll.u32 %v3586, 16
        %v3792 = vrot.slane %v3790, 5
        %v3793 = vsel %vm252, %v3788, %v3792
        %v3794 = vshrl.u32 %v3586, 16
        %v3796 = vrot.slane %v3794, 4
        %v3797 = vor.u32 %v3796, %v3792
        %v3798 = vrot.slane %v3797, 4
        %v3800 = vshll.u32 %v3587, 16
        %v3802 = vrot.slane %v3800, 5
        %v3803 = vsel %vm252, %v3798, %v3802
        %v3805 = vshrl.u32 %v3588, 16
        %v3807 = vrot.slane %v3805, 4
        %v3808 = vshll.u32 %v3588, 16
        %v3810 = vrot.slane %v3808, 5
        %v3811 = vor.u32 %v3807, %v3810
        %v3812 = vrot.slane %v3811, 4
        %v3814 = vshll.u32 %v3589, 16
        %v3816 = vrot.slane %v3814, 5
        %v3817 = vsel %vm252, %v3812, %v3816
        %v3818 = vshrl.u32 %v3589, 16
        %v3820 = vrot.slane %v3818, 4
        %v3821 = vor.u32 %v3820, %v3816
        %v3822 = vrot.slane %v3821, 4
        %v3824 = vshll.u32 %v3590, 16
        %v3826 = vrot.slane %v3824, 5
        %v3827 = vsel %vm252, %v3822, %v3826
        %v3829 = vshrl.u32 %v3591, 16
        %v3831 = vrot.slane %v3829, 4
        %v3832 = vshll.u32 %v3591, 16
        %v3834 = vrot.slane %v3832, 5
        %v3835 = vor.u32 %v3831, %v3834
        %v3836 = vrot.slane %v3835, 4
        %v3838 = vshll.u32 %v3592, 16
        %v3840 = vrot.slane %v3838, 5
        %v3841 = vsel %vm252, %v3836, %v3840
        %v3842 = vshrl.u32 %v3592, 16
        %v3844 = vrot.slane %v3842, 4
        %v3845 = vor.u32 %v3844, %v3840
        %v3846 = vrot.slane %v3845, 4
        %v3848 = vshll.u32 %v3593, 16
        %v3850 = vrot.slane %v3848, 5
        %v3851 = vsel %vm252, %v3846, %v3850
        %v3853 = vshrl.u32 %v3594, 16
        %v3855 = vrot.slane %v3853, 4
        %v3856 = vshll.u32 %v3594, 16
        %v3858 = vrot.slane %v3856, 5
        %v3859 = vor.u32 %v3855, %v3858
        %v3860 = vrot.slane %v3859, 4
        %v3862 = vshll.u32 %v3595, 16
        %v3864 = vrot.slane %v3862, 5
        %v3865 = vsel %vm252, %v3860, %v3864
        %v3866 = vshrl.u32 %v3595, 16
        %v3868 = vrot.slane %v3866, 4
        %v3869 = vor.u32 %v3868, %v3864
        %v3870 = vrot.slane %v3869, 4
        %v3872 = vshll.u32 %v3596, 16
        %v3874 = vrot.slane %v3872, 5
        %v3875 = vsel %vm252, %v3870, %v3874
        %v3877 = vshrl.u32 %v3597, 16
        %v3879 = vrot.slane %v3877, 4
        %v3880 = vshll.u32 %v3597, 16
        %v3882 = vrot.slane %v3880, 5
        %v3883 = vor.u32 %v3879, %v3882
        %v3884 = vrot.slane %v3883, 4
        %v3886 = vshll.u32 %v3598, 16
        %v3888 = vrot.slane %v3886, 5
        %v3889 = vsel %vm252, %v3884, %v3888
        %v3890 = vshrl.u32 %v3598, 16
        %v3892 = vrot.slane %v3890, 4
        %v3893 = vor.u32 %v3892, %v3888
        %v3894 = vrot.slane %v3893, 4
        %v3896 = vshll.u32 %v3599, 16
        %v3898 = vrot.slane %v3896, 5
        %v3899 = vsel %vm252, %v3894, %v3898
        %v3901 = vshrl.u32 %v3600, 16
        %v3903 = vrot.slane %v3901, 4
        %v3904 = vshll.u32 %v3600, 16
        %v3906 = vrot.slane %v3904, 5
        %v3907 = vor.u32 %v3903, %v3906
        %v3908 = vrot.slane %v3907, 4
        %v3910 = vshll.u32 %v3601, 16
        %v3912 = vrot.slane %v3910, 5
        %v3913 = vsel %vm252, %v3908, %v3912
        %v3914 = vshrl.u32 %v3601, 16
        %v3916 = vrot.slane %v3914, 4
        %v3917 = vor.u32 %v3916, %v3912
        %v3918 = vrot.slane %v3917, 4
        %v3920 = vshll.u32 %v3602, 16
        %v3922 = vrot.slane %v3920, 5
        %v3923 = vsel %vm252, %v3918, %v3922
        %v3925 = vshrl.u32 %v3603, 16
        %v3927 = vrot.slane %v3925, 4
        %v3928 = vshll.u32 %v3603, 16
        %v3930 = vrot.slane %v3928, 5
        %v3931 = vor.u32 %v3927, %v3930
        %v3932 = vrot.slane %v3931, 4
        %v3934 = vshll.u32 %v3604, 16
        %v3936 = vrot.slane %v3934, 5
        %v3937 = vsel %vm252, %v3932, %v3936
        %v3938 = vshrl.u32 %v3604, 16
        %v3940 = vrot.slane %v3938, 4
        %v3941 = vor.u32 %v3940, %v3936
        %v3942 = vrot.slane %v3941, 4
        %v3944 = vshll.u32 %v3605, 16
        %v3946 = vrot.slane %v3944, 5
        %v3947 = vsel %vm252, %v3942, %v3946
        %v3949 = vshrl.u32 %v3606, 16
        %v3951 = vrot.slane %v3949, 4
        %v3952 = vshll.u32 %v3606, 16
        %v3954 = vrot.slane %v3952, 5
        %v3955 = vor.u32 %v3951, %v3954
        %v3956 = vrot.slane %v3955, 4
        %v3958 = vshll.u32 %v3607, 16
        %v3960 = vrot.slane %v3958, 5
        %v3961 = vsel %vm252, %v3956, %v3960
        %v3962 = vshrl.u32 %v3607, 16
        %v3964 = vrot.slane %v3962, 4
        %v3965 = vor.u32 %v3964, %v3960
        %v3966 = vrot.slane %v3965, 4
        %v3968 = vshll.u32 %v3608, 16
        %v3970 = vrot.slane %v3968, 5
        %v3971 = vsel %vm252, %v3966, %v3970
        %v3973 = vshrl.u32 %v3609, 16
        %v3975 = vrot.slane %v3973, 4
        %v3976 = vshll.u32 %v3609, 16
        %v3978 = vrot.slane %v3976, 5
        %v3979 = vor.u32 %v3975, %v3978
        %v3980 = vrot.slane %v3979, 4
        %v3982 = vshll.u32 %v3610, 16
        %v3984 = vrot.slane %v3982, 5
        %v3985 = vsel %vm252, %v3980, %v3984
        %v3986 = vshrl.u32 %v3610, 16
        %v3988 = vrot.slane %v3986, 4
        %v3989 = vor.u32 %v3988, %v3984
        %v3990 = vrot.slane %v3989, 4
        %v3992 = vshll.u32 %v3611, 16
        %v3994 = vrot.slane %v3992, 5
        %v3995 = vsel %vm252, %v3990, %v3994
        %s3996 = scalar_lea.vmem %s1, 14
        %v3997 = vld [vmem:[%s3996] sm:$0x3]
        %v3998 = vunpack.c.l.b16 %v3625
        %v3999 = vunpack.c.l.b16 %v3635
        %v4000 = vunpack.c.l.b16 %v3649
        %v4001 = vunpack.c.l.b16 %v3659
        %v4002 = vunpack.c.l.b16 %v3673
        %v4003 = vunpack.c.l.b16 %v3683
        %v4004 = vunpack.c.l.b16 %v3697
        %v4005 = vunpack.c.l.b16 %v3707
        %v4006 = vunpack.c.l.b16 %v3721
        %v4007 = vunpack.c.l.b16 %v3731
        %v4008 = vunpack.c.l.b16 %v3745
        %v4009 = vunpack.c.l.b16 %v3755
        %v4010 = vunpack.c.l.b16 %v3769
        %v4011 = vunpack.c.l.b16 %v3779
        %v4012 = vunpack.c.l.b16 %v3793
        %v4013 = vunpack.c.l.b16 %v3803
        %v4014 = vunpack.c.l.b16 %v3817
        %v4015 = vunpack.c.l.b16 %v3827
        %v4016 = vunpack.c.l.b16 %v3841
        %v4017 = vunpack.c.l.b16 %v3851
        %v4018 = vunpack.c.l.b16 %v3865
        %v4019 = vunpack.c.l.b16 %v3875
        %v4020 = vunpack.c.l.b16 %v3889
        %v4021 = vunpack.c.l.b16 %v3899
        %v4022 = vunpack.c.l.b16 %v3913
        %v4023 = vunpack.c.l.b16 %v3923
        %v4024 = vunpack.c.l.b16 %v3937
        %v4025 = vunpack.c.l.b16 %v3947
        %v4026 = vunpack.c.l.b16 %v3961
        %v4027 = vunpack.c.l.b16 %v3971
        %v4028 = vunpack.c.l.b16 %v3985
        %v4029 = vunpack.c.l.b16 %v3995
        %v4030 = vpack.c.b16 %v3999, %v3998
        %v4031 = vpack.c.b16 %v4001, %v4000
        %v4032 = vpack.c.b16 %v4003, %v4002
        %v4033 = vpack.c.b16 %v4005, %v4004
        %v4034 = vpack.c.b16 %v4007, %v4006
        %v4035 = vpack.c.b16 %v4009, %v4008
        %v4036 = vpack.c.b16 %v4011, %v4010
        %v4037 = vpack.c.b16 %v4013, %v4012
        %v4038 = vpack.c.b16 %v4015, %v4014
        %v4039 = vpack.c.b16 %v4017, %v4016
        %v4040 = vpack.c.b16 %v4019, %v4018
        %v4041 = vpack.c.b16 %v4021, %v4020
        %v4042 = vpack.c.b16 %v4023, %v4022
        %v4043 = vpack.c.b16 %v4025, %v4024
        %v4044 = vpack.c.b16 %v4027, %v4026
        %v4045 = vpack.c.b16 %v4029, %v4028
        %v4047 = vsel %vm687, %v4030, 0
        %v4050 = vsel %vm687, %v4031, 0
        %v4053 = vsel %vm687, %v4032, 0
        %v4056 = vsel %vm687, %v4033, 0
        %v4059 = vsel %vm687, %v4034, 0
        %v4062 = vsel %vm687, %v4035, 0
        %v4065 = vsel %vm687, %v4036, 0
        %v4068 = vsel %vm687, %v4037, 0
        %v4071 = vsel %vm687, %v4038, 0
        %v4074 = vsel %vm687, %v4039, 0
        %v4077 = vsel %vm687, %v4040, 0
        %v4080 = vsel %vm687, %v4041, 0
        %v4083 = vsel %vm687, %v4042, 0
        %v4086 = vsel %vm687, %v4043, 0
        %v4089 = vsel %vm687, %v4044, 0
        %v4092 = vsel %vm687, %v4045, 0
        %v4095 = vsel %vm736, %v3997, 0
        %4097 = vmatprep.subr.bf16.mxu0 0
        %4098 = vmatpush1.bf16.msra.mxu0 %v4095
        %4099 = vmatprep.subr.bf16.mxu0 0
        %4100 = vmatpush1.bf16.msra.mxu0 0
        %4101 = vmatprep.subr.bf16.mxu0 0
        %4102 = vmatpush1.bf16.msra.mxu0 0
        %4103 = vmatprep.subr.bf16.mxu0 0
        %4104 = vmatpush1.bf16.msra.mxu0 0
        %4105 = vmatprep.subr.bf16.mxu0 0
        %4106 = vmatpush1.bf16.msra.mxu0 0
        %4107 = vmatprep.subr.bf16.mxu0 0
        %4108 = vmatpush1.bf16.msra.mxu0 0
        %4109 = vmatprep.subr.bf16.mxu0 0
        %4110 = vmatpush1.bf16.msra.mxu0 0
        %4111 = vmatprep.subr.bf16.mxu0 0
        %4112 = vmatpush1.bf16.msra.mxu0 0
        %4113 = vmatprep.subr.bf16.mxu0 0
        %4114 = vmatpush1.bf16.msra.mxu0 0
        %4115 = vmatprep.subr.bf16.mxu0 0
        %4116 = vmatpush1.bf16.msra.mxu0 0
        %4117 = vmatprep.subr.bf16.mxu0 0
        %4118 = vmatpush1.bf16.msra.mxu0 0
        %4119 = vmatprep.subr.bf16.mxu0 0
        %4120 = vmatpush1.bf16.msra.mxu0 0
        %4121 = vmatprep.subr.bf16.mxu0 0
        %4122 = vmatpush1.bf16.msra.mxu0 0
        %4123 = vmatprep.subr.bf16.mxu0 0
        %4124 = vmatpush1.bf16.msra.mxu0 0
        %4125 = vmatprep.subr.bf16.mxu0 0
        %4126 = vmatpush1.bf16.msra.mxu0 0
        %4127 = vmatprep.subr.bf16.mxu0 0
        %4128 = vmatpush1.bf16.msra.mxu0 0
        %4129 = vmatprep.mubr.bf16.mxu0 0
        %4130 = vmatmul.mubr.bf16.gmra.mrb[0].mxu0 %v4047
        %v4131 = vpop.f32.mrb[0].mxu0
        %v4132 = vadd.f32 0.0, %v4131
        %v4133 = vpop.f32.mrb[0].mxu0
        %v4134 = vpop.f32.mrb[0].mxu0
        %v4135 = vadd.f32 0.0, %v4134
        %v4136 = vpop.f32.mrb[0].mxu0
        %4137 = vmatprep.mubr.bf16.mxu0 0
        %4138 = vmatmul.mubr.bf16.gmra.mrb[0].mxu0 %v4050
        %v4139 = vpop.f32.mrb[0].mxu0
        %v4140 = vadd.f32 0.0, %v4139
        %v4141 = vpop.f32.mrb[0].mxu0
        %v4142 = vpop.f32.mrb[0].mxu0
        %v4143 = vadd.f32 0.0, %v4142
        %v4144 = vpop.f32.mrb[0].mxu0
        %4145 = vmatprep.mubr.bf16.mxu0 0
        %4146 = vmatmul.mubr.bf16.gmra.mrb[0].mxu0 %v4053
        %v4147 = vpop.f32.mrb[0].mxu0
        %v4148 = vadd.f32 0.0, %v4147
        %v4149 = vpop.f32.mrb[0].mxu0
        %v4150 = vpop.f32.mrb[0].mxu0
        %v4151 = vadd.f32 0.0, %v4150
        %v4152 = vpop.f32.mrb[0].mxu0
        %4153 = vmatprep.mubr.bf16.mxu0 0
        %4154 = vmatmul.mubr.bf16.gmra.mrb[0].mxu0 %v4056
        %v4155 = vpop.f32.mrb[0].mxu0
        %v4156 = vadd.f32 0.0, %v4155
        %v4157 = vpop.f32.mrb[0].mxu0
        %v4158 = vpop.f32.mrb[0].mxu0
        %v4159 = vadd.f32 0.0, %v4158
        %v4160 = vpop.f32.mrb[0].mxu0
        %4161 = vmatprep.mubr.bf16.mxu0 0
        %4162 = vmatmul.mubr.bf16.gmra.mrb[0].mxu0 %v4059
        %v4163 = vpop.f32.mrb[0].mxu0
        %v4164 = vadd.f32 0.0, %v4163
        %v4165 = vpop.f32.mrb[0].mxu0
        %v4166 = vpop.f32.mrb[0].mxu0
        %v4167 = vadd.f32 0.0, %v4166
        %v4168 = vpop.f32.mrb[0].mxu0
        %4169 = vmatprep.mubr.bf16.mxu0 0
        %4170 = vmatmul.mubr.bf16.gmra.mrb[0].mxu0 %v4062
        %v4171 = vpop.f32.mrb[0].mxu0
        %v4172 = vadd.f32 0.0, %v4171
        %v4173 = vpop.f32.mrb[0].mxu0
        %v4174 = vpop.f32.mrb[0].mxu0
        %v4175 = vadd.f32 0.0, %v4174
        %v4176 = vpop.f32.mrb[0].mxu0
        %4177 = vmatprep.mubr.bf16.mxu0 0
        %4178 = vmatmul.mubr.bf16.gmra.mrb[0].mxu0 %v4065
        %v4179 = vpop.f32.mrb[0].mxu0
        %v4180 = vadd.f32 0.0, %v4179
        %v4181 = vpop.f32.mrb[0].mxu0
        %v4182 = vpop.f32.mrb[0].mxu0
        %v4183 = vadd.f32 0.0, %v4182
        %v4184 = vpop.f32.mrb[0].mxu0
        %4185 = vmatprep.mubr.bf16.mxu0 0
        %4186 = vmatmul.mubr.bf16.gmra.mrb[0].mxu0 %v4068
        %v4187 = vpop.f32.mrb[0].mxu0
        %v4188 = vadd.f32 0.0, %v4187
        %v4189 = vpop.f32.mrb[0].mxu0
        %v4190 = vpop.f32.mrb[0].mxu0
        %v4191 = vadd.f32 0.0, %v4190
        %v4192 = vpop.f32.mrb[0].mxu0
        %4193 = vmatprep.mubr.bf16.mxu0 0
        %4194 = vmatmul.mubr.bf16.gmra.mrb[0].mxu0 %v4071
        %v4195 = vpop.f32.mrb[0].mxu0
        %v4196 = vadd.f32 0.0, %v4195
        %v4197 = vpop.f32.mrb[0].mxu0
        %v4198 = vpop.f32.mrb[0].mxu0
        %v4199 = vadd.f32 0.0, %v4198
        %v4200 = vpop.f32.mrb[0].mxu0
        %4201 = vmatprep.mubr.bf16.mxu0 0
        %4202 = vmatmul.mubr.bf16.gmra.mrb[0].mxu0 %v4074
        %v4203 = vpop.f32.mrb[0].mxu0
        %v4204 = vadd.f32 0.0, %v4203
        %v4205 = vpop.f32.mrb[0].mxu0
        %v4206 = vpop.f32.mrb[0].mxu0
        %v4207 = vadd.f32 0.0, %v4206
        %v4208 = vpop.f32.mrb[0].mxu0
        %4209 = vmatprep.mubr.bf16.mxu0 0
        %4210 = vmatmul.mubr.bf16.gmra.mrb[0].mxu0 %v4077
        %v4211 = vpop.f32.mrb[0].mxu0
        %v4212 = vadd.f32 0.0, %v4211
        %v4213 = vpop.f32.mrb[0].mxu0
        %v4214 = vpop.f32.mrb[0].mxu0
        %v4215 = vadd.f32 0.0, %v4214
        %v4216 = vpop.f32.mrb[0].mxu0
        %4217 = vmatprep.mubr.bf16.mxu0 0
        %4218 = vmatmul.mubr.bf16.gmra.mrb[0].mxu0 %v4080
        %v4219 = vpop.f32.mrb[0].mxu0
        %v4220 = vadd.f32 0.0, %v4219
        %v4221 = vpop.f32.mrb[0].mxu0
        %v4222 = vpop.f32.mrb[0].mxu0
        %v4223 = vadd.f32 0.0, %v4222
        %v4224 = vpop.f32.mrb[0].mxu0
        %4225 = vmatprep.mubr.bf16.mxu0 0
        %4226 = vmatmul.mubr.bf16.gmra.mrb[0].mxu0 %v4083
        %v4227 = vpop.f32.mrb[0].mxu0
        %v4228 = vadd.f32 0.0, %v4227
        %v4229 = vpop.f32.mrb[0].mxu0
        %v4230 = vpop.f32.mrb[0].mxu0
        %v4231 = vadd.f32 0.0, %v4230
        %v4232 = vpop.f32.mrb[0].mxu0
        %4233 = vmatprep.mubr.bf16.mxu0 0
        %4234 = vmatmul.mubr.bf16.gmra.mrb[0].mxu0 %v4086
        %v4235 = vpop.f32.mrb[0].mxu0
        %v4236 = vadd.f32 0.0, %v4235
        %v4237 = vpop.f32.mrb[0].mxu0
        %v4238 = vpop.f32.mrb[0].mxu0
        %v4239 = vadd.f32 0.0, %v4238
        %v4240 = vpop.f32.mrb[0].mxu0
        %4241 = vmatprep.mubr.bf16.mxu0 0
        %4242 = vmatmul.mubr.bf16.gmra.mrb[0].mxu0 %v4089
        %v4243 = vpop.f32.mrb[0].mxu0
        %v4244 = vadd.f32 0.0, %v4243
        %v4245 = vpop.f32.mrb[0].mxu0
        %v4246 = vpop.f32.mrb[0].mxu0
        %v4247 = vadd.f32 0.0, %v4246
        %v4248 = vpop.f32.mrb[0].mxu0
        %4249 = vmatprep.mubr.bf16.mxu0 0
        %4250 = vmatmul.mubr.bf16.gmra.mrb[0].mxu0 %v4092
        %v4251 = vpop.f32.mrb[0].mxu0
        %v4252 = vadd.f32 0.0, %v4251
        %v4253 = vpop.f32.mrb[0].mxu0
        %v4254 = vpop.f32.mrb[0].mxu0
        %v4255 = vadd.f32 0.0, %v4254
        %v4256 = vpop.f32.mrb[0].mxu0
        %4257 = vdwg.mxu0
        %v4258 = vadd.f32 %v3532, %v4132
        %v4259 = vadd.f32 %v3533, %v4135
        %v4260 = vadd.f32 %v3534, %v4140
        %v4261 = vadd.f32 %v3535, %v4143
        %v4262 = vadd.f32 %v3536, %v4148
        %v4263 = vadd.f32 %v3537, %v4151
        %v4264 = vadd.f32 %v3538, %v4156
        %v4265 = vadd.f32 %v3539, %v4159
        %v4266 = vadd.f32 %v3540, %v4164
        %v4267 = vadd.f32 %v3541, %v4167
        %v4268 = vadd.f32 %v3542, %v4172
        %v4269 = vadd.f32 %v3543, %v4175
        %v4270 = vadd.f32 %v3544, %v4180
        %v4271 = vadd.f32 %v3545, %v4183
        %v4272 = vadd.f32 %v3546, %v4188
        %v4273 = vadd.f32 %v3547, %v4191
        %v4274 = vadd.f32 %v3548, %v4196
        %v4275 = vadd.f32 %v3549, %v4199
        %v4276 = vadd.f32 %v3550, %v4204
        %v4277 = vadd.f32 %v3551, %v4207
        %v4278 = vadd.f32 %v3552, %v4212
        %v4279 = vadd.f32 %v3553, %v4215
        %v4280 = vadd.f32 %v3554, %v4220
        %v4281 = vadd.f32 %v3555, %v4223
        %v4282 = vadd.f32 %v3556, %v4228
        %v4283 = vadd.f32 %v3557, %v4231
        %v4284 = vadd.f32 %v3558, %v4236
        %v4285 = vadd.f32 %v3559, %v4239
        %v4286 = vadd.f32 %v3560, %v4244
        %v4287 = vadd.f32 %v3561, %v4247
        %v4288 = vadd.f32 %v3562, %v4252
        %v4289 = vadd.f32 %v3563, %v4255
        %v4290 = vld [vmem:[%s3205] sm:$0xe]
        %v4291 = vld [vmem:[%s3205 + $0xc] sm:$0xe]
        %v4292 = vld [vmem:[%s3205 + $0x18] sm:$0xe]
        %v4293 = vld [vmem:[%s3205 + $0x24] sm:$0xe]
        %v4294 = vld [vmem:[%s3205 + $0x30] sm:$0xe]
        %v4295 = vld [vmem:[%s3205 + $0x3c] sm:$0xe]
        %v4296 = vld [vmem:[%s3205 + $0x48] sm:$0xe]
        %v4297 = vld [vmem:[%s3205 + $0x54] sm:$0xe]
        %v4298 = vld [vmem:[%s3205 + $0x60] sm:$0xe]
        %v4299 = vld [vmem:[%s3205 + $0x6c] sm:$0xe]
        %v4300 = vld [vmem:[%s3205 + $0x78] sm:$0xe]
        %v4301 = vld [vmem:[%s3205 + $0x84] sm:$0xe]
        %v4302 = vld [vmem:[%s3205 + $0x90] sm:$0xe]
        %v4303 = vld [vmem:[%s3205 + $0x9c] sm:$0xe]
        %v4304 = vld [vmem:[%s3205 + $0xa8] sm:$0xe]
        %v4305 = vld [vmem:[%s3205 + $0xb4] sm:$0xe]
        %v4354 = vrot.slane %v4290, 5
        %v4355 = vrot.slane %v4354, 4
        %v4356 = vrot.slane %v3565, 5
        %v4357 = vsel %vm1243, %v4355, %v4356
        %v4358 = vrot.slane %v4356, 4
        %v4359 = vrot.slane %v3566, 5
        %v4360 = vsel %vm1243, %v4358, %v4359
        %v4361 = vrot.slane %v4291, 5
        %v4362 = vrot.slane %v4361, 4
        %v4363 = vrot.slane %v3568, 5
        %v4364 = vsel %vm1243, %v4362, %v4363
        %v4365 = vrot.slane %v4363, 4
        %v4366 = vrot.slane %v3569, 5
        %v4367 = vsel %vm1243, %v4365, %v4366
        %v4368 = vrot.slane %v4292, 5
        %v4369 = vrot.slane %v4368, 4
        %v4370 = vrot.slane %v3571, 5
        %v4371 = vsel %vm1243, %v4369, %v4370
        %v4372 = vrot.slane %v4370, 4
        %v4373 = vrot.slane %v3572, 5
        %v4374 = vsel %vm1243, %v4372, %v4373
        %v4375 = vrot.slane %v4293, 5
        %v4376 = vrot.slane %v4375, 4
        %v4377 = vrot.slane %v3574, 5
        %v4378 = vsel %vm1243, %v4376, %v4377
        %v4379 = vrot.slane %v4377, 4
        %v4380 = vrot.slane %v3575, 5
        %v4381 = vsel %vm1243, %v4379, %v4380
        %v4382 = vrot.slane %v4294, 5
        %v4383 = vrot.slane %v4382, 4
        %v4384 = vrot.slane %v3577, 5
        %v4385 = vsel %vm1243, %v4383, %v4384
        %v4386 = vrot.slane %v4384, 4
        %v4387 = vrot.slane %v3578, 5
        %v4388 = vsel %vm1243, %v4386, %v4387
        %v4389 = vrot.slane %v4295, 5
        %v4390 = vrot.slane %v4389, 4
        %v4391 = vrot.slane %v3580, 5
        %v4392 = vsel %vm1243, %v4390, %v4391
        %v4393 = vrot.slane %v4391, 4
        %v4394 = vrot.slane %v3581, 5
        %v4395 = vsel %vm1243, %v4393, %v4394
        %v4396 = vrot.slane %v4296, 5
        %v4397 = vrot.slane %v4396, 4
        %v4398 = vrot.slane %v3583, 5
        %v4399 = vsel %vm1243, %v4397, %v4398
        %v4400 = vrot.slane %v4398, 4
        %v4401 = vrot.slane %v3584, 5
        %v4402 = vsel %vm1243, %v4400, %v4401
        %v4403 = vrot.slane %v4297, 5
        %v4404 = vrot.slane %v4403, 4
        %v4405 = vrot.slane %v3586, 5
        %v4406 = vsel %vm1243, %v4404, %v4405
        %v4407 = vrot.slane %v4405, 4
        %v4408 = vrot.slane %v3587, 5
        %v4409 = vsel %vm1243, %v4407, %v4408
        %v4410 = vrot.slane %v4298, 5
        %v4411 = vrot.slane %v4410, 4
        %v4412 = vrot.slane %v3589, 5
        %v4413 = vsel %vm1243, %v4411, %v4412
        %v4414 = vrot.slane %v4412, 4
        %v4415 = vrot.slane %v3590, 5
        %v4416 = vsel %vm1243, %v4414, %v4415
        %v4417 = vrot.slane %v4299, 5
        %v4418 = vrot.slane %v4417, 4
        %v4419 = vrot.slane %v3592, 5
        %v4420 = vsel %vm1243, %v4418, %v4419
        %v4421 = vrot.slane %v4419, 4
        %v4422 = vrot.slane %v3593, 5
        %v4423 = vsel %vm1243, %v4421, %v4422
        %v4424 = vrot.slane %v4300, 5
        %v4425 = vrot.slane %v4424, 4
        %v4426 = vrot.slane %v3595, 5
        %v4427 = vsel %vm1243, %v4425, %v4426
        %v4428 = vrot.slane %v4426, 4
        %v4429 = vrot.slane %v3596, 5
        %v4430 = vsel %vm1243, %v4428, %v4429
        %v4431 = vrot.slane %v4301, 5
        %v4432 = vrot.slane %v4431, 4
        %v4433 = vrot.slane %v3598, 5
        %v4434 = vsel %vm1243, %v4432, %v4433
        %v4435 = vrot.slane %v4433, 4
        %v4436 = vrot.slane %v3599, 5
        %v4437 = vsel %vm1243, %v4435, %v4436
        %v4438 = vrot.slane %v4302, 5
        %v4439 = vrot.slane %v4438, 4
        %v4440 = vrot.slane %v3601, 5
        %v4441 = vsel %vm1243, %v4439, %v4440
        %v4442 = vrot.slane %v4440, 4
        %v4443 = vrot.slane %v3602, 5
        %v4444 = vsel %vm1243, %v4442, %v4443
        %v4445 = vrot.slane %v4303, 5
        %v4446 = vrot.slane %v4445, 4
        %v4447 = vrot.slane %v3604, 5
        %v4448 = vsel %vm1243, %v4446, %v4447
        %v4449 = vrot.slane %v4447, 4
        %v4450 = vrot.slane %v3605, 5
        %v4451 = vsel %vm1243, %v4449, %v4450
        %v4452 = vrot.slane %v4304, 5
        %v4453 = vrot.slane %v4452, 4
        %v4454 = vrot.slane %v3607, 5
        %v4455 = vsel %vm1243, %v4453, %v4454
        %v4456 = vrot.slane %v4454, 4
        %v4457 = vrot.slane %v3608, 5
        %v4458 = vsel %vm1243, %v4456, %v4457
        %v4459 = vrot.slane %v4305, 5
        %v4460 = vrot.slane %v4459, 4
        %v4461 = vrot.slane %v3610, 5
        %v4462 = vsel %vm1243, %v4460, %v4461
        %v4463 = vrot.slane %v4461, 4
        %v4464 = vrot.slane %v3611, 5
        %v4465 = vsel %vm1243, %v4463, %v4464
        %s4466 = scalar_lea.vmem %s1, 16
        %v4467 = vld [vmem:[%s4466] sm:$0x3]
        %v4468 = vunpack.c.l.b16 %v4357
        %v4469 = vunpack.c.l.b16 %v4360
        %v4470 = vunpack.c.l.b16 %v4364
        %v4471 = vunpack.c.l.b16 %v4367
        %v4472 = vunpack.c.l.b16 %v4371
        %v4473 = vunpack.c.l.b16 %v4374
        %v4474 = vunpack.c.l.b16 %v4378
        %v4475 = vunpack.c.l.b16 %v4381
        %v4476 = vunpack.c.l.b16 %v4385
        %v4477 = vunpack.c.l.b16 %v4388
        %v4478 = vunpack.c.l.b16 %v4392
        %v4479 = vunpack.c.l.b16 %v4395
        %v4480 = vunpack.c.l.b16 %v4399
        %v4481 = vunpack.c.l.b16 %v4402
        %v4482 = vunpack.c.l.b16 %v4406
        %v4483 = vunpack.c.l.b16 %v4409
        %v4484 = vunpack.c.l.b16 %v4413
        %v4485 = vunpack.c.l.b16 %v4416
        %v4486 = vunpack.c.l.b16 %v4420
        %v4487 = vunpack.c.l.b16 %v4423
        %v4488 = vunpack.c.l.b16 %v4427
        %v4489 = vunpack.c.l.b16 %v4430
        %v4490 = vunpack.c.l.b16 %v4434
        %v4491 = vunpack.c.l.b16 %v4437
        %v4492 = vunpack.c.l.b16 %v4441
        %v4493 = vunpack.c.l.b16 %v4444
        %v4494 = vunpack.c.l.b16 %v4448
        %v4495 = vunpack.c.l.b16 %v4451
        %v4496 = vunpack.c.l.b16 %v4455
        %v4497 = vunpack.c.l.b16 %v4458
        %v4498 = vunpack.c.l.b16 %v4462
        %v4499 = vunpack.c.l.b16 %v4465
        %v4500 = vpack.c.b16 %v4469, %v4468
        %v4501 = vpack.c.b16 %v4471, %v4470
        %v4502 = vpack.c.b16 %v4473, %v4472
        %v4503 = vpack.c.b16 %v4475, %v4474
        %v4504 = vpack.c.b16 %v4477, %v4476
        %v4505 = vpack.c.b16 %v4479, %v4478
        %v4506 = vpack.c.b16 %v4481, %v4480
        %v4507 = vpack.c.b16 %v4483, %v4482
        %v4508 = vpack.c.b16 %v4485, %v4484
        %v4509 = vpack.c.b16 %v4487, %v4486
        %v4510 = vpack.c.b16 %v4489, %v4488
        %v4511 = vpack.c.b16 %v4491, %v4490
        %v4512 = vpack.c.b16 %v4493, %v4492
        %v4513 = vpack.c.b16 %v4495, %v4494
        %v4514 = vpack.c.b16 %v4497, %v4496
        %v4515 = vpack.c.b16 %v4499, %v4498
        %v4517 = vsel %vm687, %v4500, 0
        %v4520 = vsel %vm687, %v4501, 0
        %v4523 = vsel %vm687, %v4502, 0
        %v4526 = vsel %vm687, %v4503, 0
        %v4529 = vsel %vm687, %v4504, 0
        %v4532 = vsel %vm687, %v4505, 0
        %v4535 = vsel %vm687, %v4506, 0
        %v4538 = vsel %vm687, %v4507, 0
        %v4541 = vsel %vm687, %v4508, 0
        %v4544 = vsel %vm687, %v4509, 0
        %v4547 = vsel %vm687, %v4510, 0
        %v4550 = vsel %vm687, %v4511, 0
        %v4553 = vsel %vm687, %v4512, 0
        %v4556 = vsel %vm687, %v4513, 0
        %v4559 = vsel %vm687, %v4514, 0
        %v4562 = vsel %vm687, %v4515, 0
        %v4565 = vsel %vm736, %v4467, 0
        %4567 = vmatprep.subr.bf16.mxu0 0
        %4568 = vmatpush1.bf16.msra.mxu0 %v4565
        %4569 = vmatprep.subr.bf16.mxu0 0
        %4570 = vmatpush1.bf16.msra.mxu0 0
        %4571 = vmatprep.subr.bf16.mxu0 0
        %4572 = vmatpush1.bf16.msra.mxu0 0
        %4573 = vmatprep.subr.bf16.mxu0 0
        %4574 = vmatpush1.bf16.msra.mxu0 0
        %4575 = vmatprep.subr.bf16.mxu0 0
        %4576 = vmatpush1.bf16.msra.mxu0 0
        %4577 = vmatprep.subr.bf16.mxu0 0
        %4578 = vmatpush1.bf16.msra.mxu0 0
        %4579 = vmatprep.subr.bf16.mxu0 0
        %4580 = vmatpush1.bf16.msra.mxu0 0
        %4581 = vmatprep.subr.bf16.mxu0 0
        %4582 = vmatpush1.bf16.msra.mxu0 0
        %4583 = vmatprep.subr.bf16.mxu0 0
        %4584 = vmatpush1.bf16.msra.mxu0 0
        %4585 = vmatprep.subr.bf16.mxu0 0
        %4586 = vmatpush1.bf16.msra.mxu0 0
        %4587 = vmatprep.subr.bf16.mxu0 0
        %4588 = vmatpush1.bf16.msra.mxu0 0
        %4589 = vmatprep.subr.bf16.mxu0 0
        %4590 = vmatpush1.bf16.msra.mxu0 0
        %4591 = vmatprep.subr.bf16.mxu0 0
        %4592 = vmatpush1.bf16.msra.mxu0 0
        %4593 = vmatprep.subr.bf16.mxu0 0
        %4594 = vmatpush1.bf16.msra.mxu0 0
        %4595 = vmatprep.subr.bf16.mxu0 0
        %4596 = vmatpush1.bf16.msra.mxu0 0
        %4597 = vmatprep.subr.bf16.mxu0 0
        %4598 = vmatpush1.bf16.msra.mxu0 0
        %4599 = vmatprep.mubr.bf16.mxu0 0
        %4600 = vmatmul.mubr.bf16.gmra.mrb[0].mxu0 %v4517
        %v4601 = vpop.f32.mrb[0].mxu0
        %v4602 = vadd.f32 0.0, %v4601
        %v4603 = vpop.f32.mrb[0].mxu0
        %v4604 = vpop.f32.mrb[0].mxu0
        %v4605 = vadd.f32 0.0, %v4604
        %v4606 = vpop.f32.mrb[0].mxu0
        %4607 = vmatprep.mubr.bf16.mxu0 0
        %4608 = vmatmul.mubr.bf16.gmra.mrb[0].mxu0 %v4520
        %v4609 = vpop.f32.mrb[0].mxu0
        %v4610 = vadd.f32 0.0, %v4609
        %v4611 = vpop.f32.mrb[0].mxu0
        %v4612 = vpop.f32.mrb[0].mxu0
        %v4613 = vadd.f32 0.0, %v4612
        %v4614 = vpop.f32.mrb[0].mxu0
        %4615 = vmatprep.mubr.bf16.mxu0 0
        %4616 = vmatmul.mubr.bf16.gmra.mrb[0].mxu0 %v4523
        %v4617 = vpop.f32.mrb[0].mxu0
        %v4618 = vadd.f32 0.0, %v4617
        %v4619 = vpop.f32.mrb[0].mxu0
        %v4620 = vpop.f32.mrb[0].mxu0
        %v4621 = vadd.f32 0.0, %v4620
        %v4622 = vpop.f32.mrb[0].mxu0
        %4623 = vmatprep.mubr.bf16.mxu0 0
        %4624 = vmatmul.mubr.bf16.gmra.mrb[0].mxu0 %v4526
        %v4625 = vpop.f32.mrb[0].mxu0
        %v4626 = vadd.f32 0.0, %v4625
        %v4627 = vpop.f32.mrb[0].mxu0
        %v4628 = vpop.f32.mrb[0].mxu0
        %v4629 = vadd.f32 0.0, %v4628
        %v4630 = vpop.f32.mrb[0].mxu0
        %4631 = vmatprep.mubr.bf16.mxu0 0
        %4632 = vmatmul.mubr.bf16.gmra.mrb[0].mxu0 %v4529
        %v4633 = vpop.f32.mrb[0].mxu0
        %v4634 = vadd.f32 0.0, %v4633
        %v4635 = vpop.f32.mrb[0].mxu0
        %v4636 = vpop.f32.mrb[0].mxu0
        %v4637 = vadd.f32 0.0, %v4636
        %v4638 = vpop.f32.mrb[0].mxu0
        %4639 = vmatprep.mubr.bf16.mxu0 0
        %4640 = vmatmul.mubr.bf16.gmra.mrb[0].mxu0 %v4532
        %v4641 = vpop.f32.mrb[0].mxu0
        %v4642 = vadd.f32 0.0, %v4641
        %v4643 = vpop.f32.mrb[0].mxu0
        %v4644 = vpop.f32.mrb[0].mxu0
        %v4645 = vadd.f32 0.0, %v4644
        %v4646 = vpop.f32.mrb[0].mxu0
        %4647 = vmatprep.mubr.bf16.mxu0 0
        %4648 = vmatmul.mubr.bf16.gmra.mrb[0].mxu0 %v4535
        %v4649 = vpop.f32.mrb[0].mxu0
        %v4650 = vadd.f32 0.0, %v4649
        %v4651 = vpop.f32.mrb[0].mxu0
        %v4652 = vpop.f32.mrb[0].mxu0
        %v4653 = vadd.f32 0.0, %v4652
        %v4654 = vpop.f32.mrb[0].mxu0
        %4655 = vmatprep.mubr.bf16.mxu0 0
        %4656 = vmatmul.mubr.bf16.gmra.mrb[0].mxu0 %v4538
        %v4657 = vpop.f32.mrb[0].mxu0
        %v4658 = vadd.f32 0.0, %v4657
        %v4659 = vpop.f32.mrb[0].mxu0
        %v4660 = vpop.f32.mrb[0].mxu0
        %v4661 = vadd.f32 0.0, %v4660
        %v4662 = vpop.f32.mrb[0].mxu0
        %4663 = vmatprep.mubr.bf16.mxu0 0
        %4664 = vmatmul.mubr.bf16.gmra.mrb[0].mxu0 %v4541
        %v4665 = vpop.f32.mrb[0].mxu0
        %v4666 = vadd.f32 0.0, %v4665
        %v4667 = vpop.f32.mrb[0].mxu0
        %v4668 = vpop.f32.mrb[0].mxu0
        %v4669 = vadd.f32 0.0, %v4668
        %v4670 = vpop.f32.mrb[0].mxu0
        %4671 = vmatprep.mubr.bf16.mxu0 0
        %4672 = vmatmul.mubr.bf16.gmra.mrb[0].mxu0 %v4544
        %v4673 = vpop.f32.mrb[0].mxu0
        %v4674 = vadd.f32 0.0, %v4673
        %v4675 = vpop.f32.mrb[0].mxu0
        %v4676 = vpop.f32.mrb[0].mxu0
        %v4677 = vadd.f32 0.0, %v4676
        %v4678 = vpop.f32.mrb[0].mxu0
        %4679 = vmatprep.mubr.bf16.mxu0 0
        %4680 = vmatmul.mubr.bf16.gmra.mrb[0].mxu0 %v4547
        %v4681 = vpop.f32.mrb[0].mxu0
        %v4682 = vadd.f32 0.0, %v4681
        %v4683 = vpop.f32.mrb[0].mxu0
        %v4684 = vpop.f32.mrb[0].mxu0
        %v4685 = vadd.f32 0.0, %v4684
        %v4686 = vpop.f32.mrb[0].mxu0
        %4687 = vmatprep.mubr.bf16.mxu0 0
        %4688 = vmatmul.mubr.bf16.gmra.mrb[0].mxu0 %v4550
        %v4689 = vpop.f32.mrb[0].mxu0
        %v4690 = vadd.f32 0.0, %v4689
        %v4691 = vpop.f32.mrb[0].mxu0
        %v4692 = vpop.f32.mrb[0].mxu0
        %v4693 = vadd.f32 0.0, %v4692
        %v4694 = vpop.f32.mrb[0].mxu0
        %4695 = vmatprep.mubr.bf16.mxu0 0
        %4696 = vmatmul.mubr.bf16.gmra.mrb[0].mxu0 %v4553
        %v4697 = vpop.f32.mrb[0].mxu0
        %v4698 = vadd.f32 0.0, %v4697
        %v4699 = vpop.f32.mrb[0].mxu0
        %v4700 = vpop.f32.mrb[0].mxu0
        %v4701 = vadd.f32 0.0, %v4700
        %v4702 = vpop.f32.mrb[0].mxu0
        %4703 = vmatprep.mubr.bf16.mxu0 0
        %4704 = vmatmul.mubr.bf16.gmra.mrb[0].mxu0 %v4556
        %v4705 = vpop.f32.mrb[0].mxu0
        %v4706 = vadd.f32 0.0, %v4705
        %v4707 = vpop.f32.mrb[0].mxu0
        %v4708 = vpop.f32.mrb[0].mxu0
        %v4709 = vadd.f32 0.0, %v4708
        %v4710 = vpop.f32.mrb[0].mxu0
        %4711 = vmatprep.mubr.bf16.mxu0 0
        %4712 = vmatmul.mubr.bf16.gmra.mrb[0].mxu0 %v4559
        %v4713 = vpop.f32.mrb[0].mxu0
        %v4714 = vadd.f32 0.0, %v4713
        %v4715 = vpop.f32.mrb[0].mxu0
        %v4716 = vpop.f32.mrb[0].mxu0
        %v4717 = vadd.f32 0.0, %v4716
        %v4718 = vpop.f32.mrb[0].mxu0
        %4719 = vmatprep.mubr.bf16.mxu0 0
        %4720 = vmatmul.mubr.bf16.gmra.mrb[0].mxu0 %v4562
        %v4721 = vpop.f32.mrb[0].mxu0
        %v4722 = vadd.f32 0.0, %v4721
        %v4723 = vpop.f32.mrb[0].mxu0
        %v4724 = vpop.f32.mrb[0].mxu0
        %v4725 = vadd.f32 0.0, %v4724
        %v4726 = vpop.f32.mrb[0].mxu0
        %4727 = vdwg.mxu0
        %v4728 = vadd.f32 %v4258, %v4602
        %v4729 = vadd.f32 %v4259, %v4605
        %v4730 = vadd.f32 %v4260, %v4610
        %v4731 = vadd.f32 %v4261, %v4613
        %v4732 = vadd.f32 %v4262, %v4618
        %v4733 = vadd.f32 %v4263, %v4621
        %v4734 = vadd.f32 %v4264, %v4626
        %v4735 = vadd.f32 %v4265, %v4629
        %v4736 = vadd.f32 %v4266, %v4634
        %v4737 = vadd.f32 %v4267, %v4637
        %v4738 = vadd.f32 %v4268, %v4642
        %v4739 = vadd.f32 %v4269, %v4645
        %v4740 = vadd.f32 %v4270, %v4650
        %v4741 = vadd.f32 %v4271, %v4653
        %v4742 = vadd.f32 %v4272, %v4658
        %v4743 = vadd.f32 %v4273, %v4661
        %v4744 = vadd.f32 %v4274, %v4666
        %v4745 = vadd.f32 %v4275, %v4669
        %v4746 = vadd.f32 %v4276, %v4674
        %v4747 = vadd.f32 %v4277, %v4677
        %v4748 = vadd.f32 %v4278, %v4682
        %v4749 = vadd.f32 %v4279, %v4685
        %v4750 = vadd.f32 %v4280, %v4690
        %v4751 = vadd.f32 %v4281, %v4693
        %v4752 = vadd.f32 %v4282, %v4698
        %v4753 = vadd.f32 %v4283, %v4701
        %v4754 = vadd.f32 %v4284, %v4706
        %v4755 = vadd.f32 %v4285, %v4709
        %v4756 = vadd.f32 %v4286, %v4714
        %v4757 = vadd.f32 %v4287, %v4717
        %v4758 = vadd.f32 %v4288, %v4722
        %v4759 = vadd.f32 %v4289, %v4725
        %v4760 = vld [vmem:[%s2] sm:$0x1]
        %v4762 = vlaneseq
        %v4763 = vshrl.u32 %v4762, 7
        %v4764 = vsub.s32 0, %v4763
        %v4765 = vrot.slane %v4760, %v4764
        %v4767 = vadd.f32 %v4728, %v4765
        %v4768 = vadd.f32 %v4729, %v4765
        %v4769 = vadd.f32 %v4730, %v4765
        %v4770 = vadd.f32 %v4731, %v4765
        %v4771 = vadd.f32 %v4732, %v4765
        %v4772 = vadd.f32 %v4733, %v4765
        %v4773 = vadd.f32 %v4734, %v4765
        %v4774 = vadd.f32 %v4735, %v4765
        %v4775 = vadd.f32 %v4736, %v4765
        %v4776 = vadd.f32 %v4737, %v4765
        %v4777 = vadd.f32 %v4738, %v4765
        %v4778 = vadd.f32 %v4739, %v4765
        %v4779 = vadd.f32 %v4740, %v4765
        %v4780 = vadd.f32 %v4741, %v4765
        %v4781 = vadd.f32 %v4742, %v4765
        %v4782 = vadd.f32 %v4743, %v4765
        %v4783 = vadd.f32 %v4744, %v4765
        %v4784 = vadd.f32 %v4745, %v4765
        %v4785 = vadd.f32 %v4746, %v4765
        %v4786 = vadd.f32 %v4747, %v4765
        %v4787 = vadd.f32 %v4748, %v4765
        %v4788 = vadd.f32 %v4749, %v4765
        %v4789 = vadd.f32 %v4750, %v4765
        %v4790 = vadd.f32 %v4751, %v4765
        %v4791 = vadd.f32 %v4752, %v4765
        %v4792 = vadd.f32 %v4753, %v4765
        %v4793 = vadd.f32 %v4754, %v4765
        %v4794 = vadd.f32 %v4755, %v4765
        %v4795 = vadd.f32 %v4756, %v4765
        %v4796 = vadd.f32 %v4757, %v4765
        %v4797 = vadd.f32 %v4758, %v4765
        %v4798 = vadd.f32 %v4759, %v4765
        %v4799 = vmax.f32 %v4767, 0.0
        %v4800 = vmax.f32 %v4768, 0.0
        %v4801 = vmax.f32 %v4769, 0.0
        %v4802 = vmax.f32 %v4770, 0.0
        %v4803 = vmax.f32 %v4771, 0.0
        %v4804 = vmax.f32 %v4772, 0.0
        %v4805 = vmax.f32 %v4773, 0.0
        %v4806 = vmax.f32 %v4774, 0.0
        %v4807 = vmax.f32 %v4775, 0.0
        %v4808 = vmax.f32 %v4776, 0.0
        %v4809 = vmax.f32 %v4777, 0.0
        %v4810 = vmax.f32 %v4778, 0.0
        %v4811 = vmax.f32 %v4779, 0.0
        %v4812 = vmax.f32 %v4780, 0.0
        %v4813 = vmax.f32 %v4781, 0.0
        %v4814 = vmax.f32 %v4782, 0.0
        %v4815 = vmax.f32 %v4783, 0.0
        %v4816 = vmax.f32 %v4784, 0.0
        %v4817 = vmax.f32 %v4785, 0.0
        %v4818 = vmax.f32 %v4786, 0.0
        %v4819 = vmax.f32 %v4787, 0.0
        %v4820 = vmax.f32 %v4788, 0.0
        %v4821 = vmax.f32 %v4789, 0.0
        %v4822 = vmax.f32 %v4790, 0.0
        %v4823 = vmax.f32 %v4791, 0.0
        %v4824 = vmax.f32 %v4792, 0.0
        %v4825 = vmax.f32 %v4793, 0.0
        %v4826 = vmax.f32 %v4794, 0.0
        %v4827 = vmax.f32 %v4795, 0.0
        %v4828 = vmax.f32 %v4796, 0.0
        %v4829 = vmax.f32 %v4797, 0.0
        %v4830 = vmax.f32 %v4798, 0.0
        %v4831 = vld [vmem:[#allocation2] sm:$0x1]
        %vm4832 = vcmask 261120
        %v4833 = vsel %vm4832, %v4799, 0.0
        %v4834 = vsel %vm4832, %v4800, 0.0
        %v4835 = vadd.f32 %v4833, %v4834
        %v4836 = vsel %vm4832, %v4801, 0.0
        %v4837 = vadd.f32 %v4835, %v4836
        %v4838 = vsel %vm4832, %v4802, 0.0
        %v4839 = vadd.f32 %v4837, %v4838
        %v4840 = vsel %vm4832, %v4803, 0.0
        %v4841 = vadd.f32 %v4839, %v4840
        %v4842 = vsel %vm4832, %v4804, 0.0
        %v4843 = vadd.f32 %v4841, %v4842
        %v4844 = vsel %vm4832, %v4805, 0.0
        %v4845 = vadd.f32 %v4843, %v4844
        %v4846 = vsel %vm4832, %v4806, 0.0
        %v4847 = vadd.f32 %v4845, %v4846
        %v4848 = vsel %vm4832, %v4807, 0.0
        %v4849 = vadd.f32 %v4847, %v4848
        %v4850 = vsel %vm4832, %v4808, 0.0
        %v4851 = vadd.f32 %v4849, %v4850
        %v4852 = vsel %vm4832, %v4809, 0.0
        %v4853 = vadd.f32 %v4851, %v4852
        %v4854 = vsel %vm4832, %v4810, 0.0
        %v4855 = vadd.f32 %v4853, %v4854
        %v4856 = vsel %vm4832, %v4811, 0.0
        %v4857 = vadd.f32 %v4855, %v4856
        %v4858 = vsel %vm4832, %v4812, 0.0
        %v4859 = vadd.f32 %v4857, %v4858
        %v4860 = vsel %vm4832, %v4813, 0.0
        %v4861 = vadd.f32 %v4859, %v4860
        %v4862 = vsel %vm4832, %v4814, 0.0
        %v4863 = vadd.f32 %v4861, %v4862
        %v4864 = vsel %vm4832, %v4815, 0.0
        %v4865 = vadd.f32 %v4863, %v4864
        %v4866 = vsel %vm4832, %v4816, 0.0
        %v4867 = vadd.f32 %v4865, %v4866
        %v4868 = vsel %vm4832, %v4817, 0.0
        %v4869 = vadd.f32 %v4867, %v4868
        %v4870 = vsel %vm4832, %v4818, 0.0
        %v4871 = vadd.f32 %v4869, %v4870
        %v4872 = vsel %vm4832, %v4819, 0.0
        %v4873 = vadd.f32 %v4871, %v4872
        %v4874 = vsel %vm4832, %v4820, 0.0
        %v4875 = vadd.f32 %v4873, %v4874
        %v4876 = vsel %vm4832, %v4821, 0.0
        %v4877 = vadd.f32 %v4875, %v4876
        %v4878 = vsel %vm4832, %v4822, 0.0
        %v4879 = vadd.f32 %v4877, %v4878
        %v4880 = vsel %vm4832, %v4823, 0.0
        %v4881 = vadd.f32 %v4879, %v4880
        %v4882 = vsel %vm4832, %v4824, 0.0
        %v4883 = vadd.f32 %v4881, %v4882
        %v4884 = vsel %vm4832, %v4825, 0.0
        %v4885 = vadd.f32 %v4883, %v4884
        %v4886 = vsel %vm4832, %v4826, 0.0
        %v4887 = vadd.f32 %v4885, %v4886
        %v4888 = vsel %vm4832, %v4827, 0.0
        %v4889 = vadd.f32 %v4887, %v4888
        %v4890 = vsel %vm4832, %v4828, 0.0
        %v4891 = vadd.f32 %v4889, %v4890
        %v4892 = vsel %vm4832, %v4829, 0.0
        %v4893 = vadd.f32 %v4891, %v4892
        %v4894 = vsel %vm4832, %v4830, 0.0
        %v4895 = vadd.f32 %v4893, %v4894
        %v4896 = vrot.slane %v4895, 4
        %v4897 = vadd.f32 %v4895, %v4896
        %v4898 = vrot.slane %v4897, 2
        %v4899 = vadd.f32 %v4897, %v4898
        %v4900 = vrot.slane %v4899, 1
        %v4901 = vadd.f32 %v4899, %v4900
        %v4902 = vadd.f32 %v4831, %v4901
        %vm4903 = vcmask 253952
        %4904 = vst.msk [vmem:[#allocation2] sm:$0x1] %vm4903, %v4902
        // Predicated region
        $region37: #{tpu_custom_call.1} parent=31 // pred_check
          %p4905 = pneg %p195
        $region38: #{tpu_custom_call.1} parent=31 // pred_check_branch
          %4907 = sbr.rel (%p4905) target = $region40
        $region39: #{tpu_custom_call.1} parent=31 // pred_region
          %v4908 = vld [vmem:[#allocation2] sm:$0x1]
          %v4909 = vmul.f32 %v4908, 0.00390625
          %4910 = vst.msk [vmem:[%s184] sm:$0x1] %vm4903, %v4909
        $region40: #{tpu_custom_call.1} parent=31 // pred_fallthru
          _
        %s4911 = sand.u32 %s109, 1
        %s4912 = scalar_lea.sflag [#allocation4], %s4911
        %s4913 = sand.u32 %s109, 1
        %s4914 = scalar_lea.vmem [#allocation3], %s4913
        // Predicated region
        $region41: #{tpu_custom_call.1} parent=31 // pred_check
          %p4915 = pneg %p119
        $region42: #{tpu_custom_call.1} parent=31 // pred_check_branch
          %4917 = sbr.rel (%p4915) target = $region44
        $region43: #{tpu_custom_call.1} parent=31 // pred_region
          %s4919 = ssub.s32 16, 16
          %4920 = vsyncadd %s4912, %s4919
          %s4921 = smul.addr %s21, 16
          %s4922 = scalar_lea.hbm %s3, %s4921
          %s4924 = sshll.u32 %s4914, 4
          %s4925 = int_to_ptr.vmem [resolvable:$true] %s4924
          %4927 = dma.vmem_to_hbm [thread:$0]  %s4925, 16, %s4922, %s4912
        $region44: #{tpu_custom_call.1} parent=31 // pred_fallthru
          _
      $region32: #{tpu_custom_call.1} parent=5 // pred_fallthru
        _
      %p4928 = scmp.le.s32.totalorder 2, %s12
      // Predicated region
      $region45: #{tpu_custom_call.1} parent=5 // pred_check
        %p4929 = pneg %p4928
      $region46: #{tpu_custom_call.1} parent=5 // pred_check_branch
        %4931 = sbr.rel (%p4929) target = $region48
      $region47: #{tpu_custom_call.1} parent=5 // pred_region
        %s4932 = ssub.s32 %s12, 2
        // Predicated region
        $region49: #{tpu_custom_call.1} parent=47 // pred_check
          %p4933 = pneg %p125
        $region50: #{tpu_custom_call.1} parent=47 // pred_check_branch
          %4935 = sbr.rel (%p4933) target = $region52
        $region51: #{tpu_custom_call.1} parent=47 // pred_region
          %s4936 = sand.u32 %s110, 1
          %s4937 = scalar_lea.sflag [#allocation4], %s4936
          %s4938 = sand.u32 %s110, 1
          %s4939 = scalar_lea.vmem [#allocation3], %s4938
          %4940 = dma.done %s4937, 16
        $region52: #{tpu_custom_call.1} parent=47 // pred_fallthru
          _
      $region48: #{tpu_custom_call.1} parent=5 // pred_fallthru
        _
    $region6: #{tpu_custom_call.1} parent=1 // loop_footer
      %s16 = sadd.s32 1, %s12
    $region7: #{tpu_custom_call.1} parent=1 // loop_footer_branch
      %11 = sbr.rel target = $region3
    $region8: #{tpu_custom_call.1} parent=1 // loop_exit
      _
    %4941 = vsyncpa [#allocation4], 1
    %s4942 = scalar_lea.sflag [#allocation4], 1
    %4943 = vsyncpa %s4942, 1

</llo_original>
